<compile_context>
chip_gen: v7x
topology: tpu7x:2x2x1
jax: 0.10.0
libtpu: 0.0.40
codegen_flags: <defaults>
</compile_context>

<pallas_src>
import numpy as np

import jax
import jax.numpy as jnp
from jax.experimental import pallas as pl
from jax.experimental.pallas import tpu as pltpu


# Set to jnp.bfloat16 for the MXU-native operand path (loosen the tolerance then).
_MXU_DTYPE = jnp.float32


# ----------------------------- Pallas kernels ------------------------------

def _make_convt_bn_act_kernel(n_positions, act, eps=1e-5):
    """Fused [single matmul conv-transpose] + BatchNorm(train) + activation."""
    inv_n = 1.0 / float(n_positions)

    def kernel(x_ref, w_ref, s_ref, st_ref, g_ref, b_ref, o_ref):
        # One MXU matmul: (M, K) @ (K, P*Cout) -> lane-dense (M, P*Cout).
        o = jnp.dot(x_ref[...].astype(_MXU_DTYPE), w_ref[...].astype(_MXU_DTYPE),
                    preferred_element_type=jnp.float32)

        # BatchNorm2d (training mode, biased batch statistics).  Column sums give
        # per-(phase, channel) totals; the 0/1 matrix S (P*Cout, Cout) folds the P
        # phase blocks onto the channel axis, S^T widens per-channel scale/shift
        # back to the lane-dense layout.  All MXU/VPU work; no lane reshapes.
        csum = jnp.sum(o, axis=0, keepdims=True)                 # (1, P*Cout)
        csq = jnp.sum(o * o, axis=0, keepdims=True)              # (1, P*Cout)
        ch_sum = jnp.dot(csum, s_ref[...], preferred_element_type=jnp.float32)
        ch_sq = jnp.dot(csq, s_ref[...], preferred_element_type=jnp.float32)
        mean = ch_sum * inv_n
        var = ch_sq * inv_n - mean * mean
        inv = jax.lax.rsqrt(var + eps)
        scale = g_ref[...] * inv                                  # (1, Cout)
        shift = b_ref[...] - mean * scale
        scale_w = jnp.dot(scale, st_ref[...], preferred_element_type=jnp.float32)
        shift_w = jnp.dot(shift, st_ref[...], preferred_element_type=jnp.float32)

        y = o * scale_w + shift_w
        if act == "relu":
            y = jnp.maximum(y, 0.0)
        o_ref[...] = y.astype(o_ref.dtype)

    return kernel


def _convt_bn_act(lhs, w, s, st, gamma, beta, n_positions, act):
    M, K = lhs.shape
    N = w.shape[1]
    C = s.shape[1]
    return pl.pallas_call(
        _make_convt_bn_act_kernel(n_positions, act),
        out_shape=jax.ShapeDtypeStruct((M, N), jnp.float32),
        grid=(1,),
        in_specs=[
            pl.BlockSpec((M, K), lambda i: (0, 0)),
            pl.BlockSpec((K, N), lambda i: (0, 0)),
            pl.BlockSpec((N, C), lambda i: (0, 0)),
            pl.BlockSpec((C, N), lambda i: (0, 0)),
            pl.BlockSpec((1, C), lambda i: (0, 0)),
            pl.BlockSpec((1, C), lambda i: (0, 0)),
        ],
        out_specs=pl.BlockSpec((M, N), lambda i: (0, 0)),
    )(lhs, w, s, st, gamma, beta)


def _convt_tanh_kernel(x_ref, w_ref, o_ref):
    o = jnp.dot(x_ref[...].astype(_MXU_DTYPE), w_ref[...].astype(_MXU_DTYPE),
                preferred_element_type=jnp.float32)
    o_ref[...] = jnp.tanh(o).astype(o_ref.dtype)


def _convt_tanh(lhs, w):
    """Final ConvTranspose2d + Tanh (no BN): row-tiled, parallel grid axis."""
    M, K = lhs.shape
    N = w.shape[1]
    tm = 128 if M % 128 == 0 else M
    return pl.pallas_call(
        _convt_tanh_kernel,
        out_shape=jax.ShapeDtypeStruct((M, N), jnp.float32),
        grid=(M // tm,),
        in_specs=[
            pl.BlockSpec((tm, K), lambda i: (i, 0)),
            pl.BlockSpec((K, N), lambda i: (0, 0)),
        ],
        out_specs=pl.BlockSpec((tm, N), lambda i: (i, 0)),
        compiler_params=pltpu.CompilerParams(dimension_semantics=("parallel",)),
    )(lhs, w)


# ---------------------------- layer glue (XLA) ------------------------------

def _im2col_3x3(x):
    """(B, H, W, C) NHWC -> (B*H*W, 9*C); taps ordered (rsh, csh) over {-1,0,1}^2."""
    B, H, W, C = x.shape
    xp = jnp.pad(x, ((0, 0), (1, 1), (1, 1), (0, 0)))
    cols = [xp[:, 1 + r:1 + r + H, 1 + c:1 + c + W, :]
            for r in (-1, 0, 1) for c in (-1, 0, 1)]
    return jnp.concatenate(cols, axis=-1).reshape(B * H * W, 9 * C)


def _interleave_phases(out, B, H, W, Cout):
    """(B*H*W, 4*Cout) with lanes (dh, dw, c) -> NHWC (B, 2H, 2W, Cout)."""
    y = out.reshape(B, H, W, 2, 2, Cout).transpose(0, 1, 3, 2, 4, 5)
    return y.reshape(B, 2 * H, 2 * W, Cout)


# ------------------------- one-time parameter packing -----------------------

# ConvTranspose2d(k=4, s=2, p=1): for output parity d and input shift s,
# ih = h + s is used with kernel index k; valid (d, s) -> k pairs:
_KIDX = {(0, 0): 1, (0, -1): 3, (1, 1): 0, (1, 0): 2}


def _pack_convt_weight_s2(w):
    """(Cin, Cout, 4, 4) -> (9*Cin, 4*Cout) block matrix (zero-filled invalid taps)."""
    Cin, Cout = w.shape[0], w.shape[1]
    wp = np.zeros((9 * Cin, 4 * Cout), np.float32)
    for dh in (0, 1):
        for dw in (0, 1):
            p = dh * 2 + dw
            for rsh in (-1, 0, 1):
                kh = _KIDX.get((dh, rsh))
                if kh is None:
                    continue
                for csh in (-1, 0, 1):
                    kw = _KIDX.get((dw, csh))
                    if kw is None:
                        continue
                    t = (rsh + 1) * 3 + (csh + 1)
                    wp[t * Cin:(t + 1) * Cin, p * Cout:(p + 1) * Cout] = w[:, :, kh, kw]
    return wp


def pack_params(params):
    """Done ONCE outside the jitted forward (weights are static at inference)."""
    w1 = np.asarray(params["w1"], np.float32)                    # (Z, C1, 4, 4)
    Z, C1 = w1.shape[0], w1.shape[1]
    eye1 = np.eye(C1, dtype=np.float32)
    packed = {
        # lanes ordered (kh, kw, c) so the output reshapes directly to NHWC 4x4.
        "w1p": jnp.asarray(np.transpose(w1, (0, 2, 3, 1)).reshape(Z, 16 * C1)),
        "S1": jnp.asarray(np.tile(eye1, (16, 1))),
        "S1T": jnp.asarray(np.tile(eye1, (1, 16))),
        "g1": jnp.asarray(np.asarray(params["g1"], np.float32).reshape(1, C1)),
        "b1": jnp.asarray(np.asarray(params["b1"], np.float32).reshape(1, C1)),
    }
    for idx in (2, 3, 4):
        w = np.asarray(params[f"w{idx}"], np.float32)            # (Cin, Cout, 4, 4)
        Cout = w.shape[1]
        packed[f"w{idx}p"] = jnp.asarray(_pack_convt_weight_s2(w))
        if idx < 4:
            eye = np.eye(Cout, dtype=np.float32)
            packed[f"S{idx}"] = jnp.asarray(np.tile(eye, (4, 1)))
            packed[f"S{idx}T"] = jnp.asarray(np.tile(eye, (1, 4)))
            packed[f"g{idx}"] = jnp.asarray(
                np.asarray(params[f"g{idx}"], np.float32).reshape(1, Cout))
            packed[f"b{idx}"] = jnp.asarray(
                np.asarray(params[f"b{idx}"], np.float32).reshape(1, Cout))
    return packed


# -------------------------------- forward -----------------------------------

def generator_forward(z, pp):
    """z: (B, z_dim) float32.  Returns (B, out_channels, 32, 32) NCHW."""
    B = z.shape[0]
    C1 = pp["g1"].shape[1]
    C2 = pp["g2"].shape[1]
    C3 = pp["g3"].shape[1]
    outC = pp["w4p"].shape[1] // 4

    # Layer 1: ConvT(z_dim -> C1, k4 s1 p0) on 1x1 + BN + ReLU  == one matmul.
    o = _convt_bn_act(z, pp["w1p"], pp["S1"], pp["S1T"], pp["g1"], pp["b1"],
                      n_positions=16 * B, act="relu")            # (B, 16*C1)
    h = o.reshape(B, 4, 4, C1)                                   # NHWC

    # Layer 2: 4x4 -> 8x8
    o = _convt_bn_act(_im2col_3x3(h), pp["w2p"], pp["S2"], pp["S2T"],
                      pp["g2"], pp["b2"], n_positions=4 * B * 4 * 4, act="relu")
    h = _interleave_phases(o, B, 4, 4, C2)                       # (B, 8, 8, C2)

    # Layer 3: 8x8 -> 16x16
    o = _convt_bn_act(_im2col_3x3(h), pp["w3p"], pp["S3"], pp["S3T"],
                      pp["g3"], pp["b3"], n_positions=4 * B * 8 * 8, act="relu")
    h = _interleave_phases(o, B, 8, 8, C3)                       # (B, 16, 16, C3)

    # Layer 4: 16x16 -> 32x32, Tanh (no BN).
    o = _convt_tanh(_im2col_3x3(h), pp["w4p"])
    h = _interleave_phases(o, B, 16, 16, outC)                   # (B, 32, 32, outC)

    return h.transpose(0, 3, 1, 2)                               # NCHW


# ---------------------------- pure-JAX reference ----------------------------

def _ref_convt(x, w, stride, pad):
    K = w.shape[2]
    wr = jnp.flip(w, axis=(2, 3)).transpose(1, 0, 2, 3)          # (Cout, Cin, K, K)
    return jax.lax.conv_general_dilated(
        x, wr, window_strides=(1, 1),
        padding=[(K - 1 - pad, K - 1 - pad)] * 2,
        lhs_dilation=(stride, stride),
        dimension_numbers=("NCHW", "OIHW", "NCHW"),
        precision=jax.lax.Precision.HIGHEST)


def _ref_bn(x, g, b, eps=1e-5):
    mean = x.mean(axis=(0, 2, 3), keepdims=True)
    var = x.var(axis=(0, 2, 3), keepdims=True)                   # biased (train mode)
    xh = (x - mean) * jax.lax.rsqrt(var + eps)
    return xh * g[None, :, None, None] + b[None, :, None, None]


def generator_reference(z, params):
    x = z.reshape(z.shape[0], z.shape[1], 1, 1)
    x = jax.nn.relu(_ref_bn(_ref_convt(x, params["w1"], 1, 0), params["g1"], params["b1"]))
    x = jax.nn.relu(_ref_bn(_ref_convt(x, params["w2"], 2, 1), params["g2"], params["b2"]))
    x = jax.nn.relu(_ref_bn(_ref_convt(x, params["w3"], 2, 1), params["g3"], params["b3"]))
    x = jnp.tanh(_ref_convt(x, params["w4"], 2, 1))
    return x


# --------------------------------- main --------------------------------------

if __name__ == "__main__":
    # Small config consistent with the module: n_filters=8, z_dim=32, 3x32x32 images.
    B, Z, NF, OUT_C = 2, 32, 8, 3
    C1, C2, C3 = NF * 8, NF * 4, NF * 2

    key = jax.random.PRNGKey(0)
    ks = jax.random.split(key, 11)
    params = {
        "w1": 0.05 * jax.random.normal(ks[0], (Z, C1, 4, 4), jnp.float32),
        "g1": 1.0 + 0.02 * jax.random.normal(ks[1], (C1,), jnp.float32),
        "b1": 0.02 * jax.random.normal(ks[2], (C1,), jnp.float32),
        "w2": 0.05 * jax.random.normal(ks[3], (C1, C2, 4, 4), jnp.float32),
        "g2": 1.0 + 0.02 * jax.random.normal(ks[4], (C2,), jnp.float32),
        "b2": 0.02 * jax.random.normal(ks[5], (C2,), jnp.float32),
        "w3": 0.05 * jax.random.normal(ks[6], (C2, C3, 4, 4), jnp.float32),
        "g3": 1.0 + 0.02 * jax.random.normal(ks[7], (C3,), jnp.float32),
        "b3": 0.02 * jax.random.normal(ks[8], (C3,), jnp.float32),
        "w4": 0.05 * jax.random.normal(ks[9], (C3, OUT_C, 4, 4), jnp.float32),
    }
    z = jax.random.normal(ks[10], (B, Z), jnp.float32)

    packed = pack_params(params)                 # one-time, outside the jitted fn
    out = jax.jit(generator_forward)(z, packed)
    out = jax.block_until_ready(out)
    assert out.shape == (B, OUT_C, 32, 32), out.shape

    ref = generator_reference(z, params)
    err = float(jnp.max(jnp.abs(out - ref)))
    # Tolerance covers possible reduced-precision MXU passes for f32 operands on
    # some generations; with full-f32 matmuls the observed error is ~1e-5.
    assert err < 2e-2, f"max abs err vs reference: {err}"
    print("KERNEL_OK")
</pallas_src>

<mosaic_0001>
module attributes {stable_mosaic.version = 11 : i64} {
  func.func @kernel(%arg0: i32, %arg1: memref<2x32xf32, #tpu.memory_space<vmem>>, %arg2: memref<32x1024xf32, #tpu.memory_space<vmem>>, %arg3: memref<1024x64xf32, #tpu.memory_space<vmem>>, %arg4: memref<64x1024xf32, #tpu.memory_space<vmem>>, %arg5: memref<1x64xf32, #tpu.memory_space<vmem>>, %arg6: memref<1x64xf32, #tpu.memory_space<vmem>>, %arg7: memref<2x1024xf32, #tpu.memory_space<vmem>>) attributes {dimension_semantics = [#tpu.dimension_semantics<arbitrary>], iteration_bounds = array<i64: 1>, scalar_prefetch = 0 : i64, scratch_operands = 0 : i64, tpu.core_type = #tpu.core_type<tc>, window_params = [{pipeline_mode = #tpu.pipeline_mode<synchronous>, transform_indices = @transform_0, window_bounds = array<i64: 2, 32>}, {pipeline_mode = #tpu.pipeline_mode<synchronous>, transform_indices = @transform_1, window_bounds = array<i64: 32, 1024>}, {pipeline_mode = #tpu.pipeline_mode<synchronous>, transform_indices = @transform_2, window_bounds = array<i64: 1024, 64>}, {pipeline_mode = #tpu.pipeline_mode<synchronous>, transform_indices = @transform_3, window_bounds = array<i64: 64, 1024>}, {pipeline_mode = #tpu.pipeline_mode<synchronous>, transform_indices = @transform_4, window_bounds = array<i64: 1, 64>}, {pipeline_mode = #tpu.pipeline_mode<synchronous>, transform_indices = @transform_5, window_bounds = array<i64: 1, 64>}, {pipeline_mode = #tpu.pipeline_mode<synchronous>, transform_indices = @transform_6, window_bounds = array<i64: 2, 1024>}]} {
    %c0 = arith.constant 0 : index
    %c0_0 = arith.constant 0 : index
    %0 = vector.load %arg1[%c0, %c0_0] : memref<2x32xf32, #tpu.memory_space<vmem>>, vector<2x32xf32>
    %c0_1 = arith.constant 0 : index
    %c0_2 = arith.constant 0 : index
    %1 = vector.load %arg2[%c0_1, %c0_2] : memref<32x1024xf32, #tpu.memory_space<vmem>>, vector<32x1024xf32>
    %cst = arith.constant dense<0.000000e+00> : vector<2x1024xf32>
    %2 = tpu.matmul %0, %1, %cst {dimension_numbers = #tpu.dot_dimension_numbers<[1], [0], [0], [1], [0, 0, 1, 1], [], []>} : vector<2x32xf32>, vector<32x1024xf32>, vector<2x1024xf32> -> vector<2x1024xf32>
    %cst_3 = arith.constant dense<0.000000e+00> : vector<1024xf32>
    %3 = vector.multi_reduction <add>, %2, %cst_3 [0] : vector<2x1024xf32> to vector<1024xf32>
    %4 = vector.shape_cast %3 : vector<1024xf32> to vector<1x1024xf32>
    %5 = arith.mulf %2, %2 : vector<2x1024xf32>
    %cst_4 = arith.constant dense<0.000000e+00> : vector<1024xf32>
    %6 = vector.multi_reduction <add>, %5, %cst_4 [0] : vector<2x1024xf32> to vector<1024xf32>
    %7 = vector.shape_cast %6 : vector<1024xf32> to vector<1x1024xf32>
    %c0_5 = arith.constant 0 : index
    %c0_6 = arith.constant 0 : index
    %8 = vector.load %arg3[%c0_5, %c0_6] : memref<1024x64xf32, #tpu.memory_space<vmem>>, vector<1024x64xf32>
    %cst_7 = arith.constant dense<0.000000e+00> : vector<1x64xf32>
    %9 = tpu.matmul %4, %8, %cst_7 {dimension_numbers = #tpu.dot_dimension_numbers<[1], [0], [0], [1], [0, 0, 1, 1], [], []>} : vector<1x1024xf32>, vector<1024x64xf32>, vector<1x64xf32> -> vector<1x64xf32>
    %c0_8 = arith.constant 0 : index
    %c0_9 = arith.constant 0 : index
    %10 = vector.load %arg3[%c0_8, %c0_9] : memref<1024x64xf32, #tpu.memory_space<vmem>>, vector<1024x64xf32>
    %cst_10 = arith.constant dense<0.000000e+00> : vector<1x64xf32>
    %11 = tpu.matmul %7, %10, %cst_10 {dimension_numbers = #tpu.dot_dimension_numbers<[1], [0], [0], [1], [0, 0, 1, 1], [], []>} : vector<1x1024xf32>, vector<1024x64xf32>, vector<1x64xf32> -> vector<1x64xf32>
    %cst_11 = arith.constant 3.125000e-02 : f32
    %12 = vector.broadcast %cst_11 : f32 to vector<1x64xf32>
    %13 = arith.mulf %9, %12 : vector<1x64xf32>
    %cst_12 = arith.constant 3.125000e-02 : f32
    %14 = vector.broadcast %cst_12 : f32 to vector<1x64xf32>
    %15 = arith.mulf %11, %14 : vector<1x64xf32>
    %16 = arith.mulf %13, %13 : vector<1x64xf32>
    %17 = arith.subf %15, %16 : vector<1x64xf32>
    %cst_13 = arith.constant 9.99999974E-6 : f32
    %18 = vector.broadcast %cst_13 : f32 to vector<1x64xf32>
    %19 = arith.addf %17, %18 : vector<1x64xf32>
    %20 = math.rsqrt %19 : vector<1x64xf32>
    %c0_14 = arith.constant 0 : index
    %c0_15 = arith.constant 0 : index
    %21 = vector.load %arg5[%c0_14, %c0_15] : memref<1x64xf32, #tpu.memory_space<vmem>>, vector<1x64xf32>
    %22 = arith.mulf %21, %20 : vector<1x64xf32>
    %c0_16 = arith.constant 0 : index
    %c0_17 = arith.constant 0 : index
    %23 = vector.load %arg6[%c0_16, %c0_17] : memref<1x64xf32, #tpu.memory_space<vmem>>, vector<1x64xf32>
    %24 = arith.mulf %13, %22 : vector<1x64xf32>
    %25 = arith.subf %23, %24 : vector<1x64xf32>
    %c0_18 = arith.constant 0 : index
    %c0_19 = arith.constant 0 : index
    %26 = vector.load %arg4[%c0_18, %c0_19] : memref<64x1024xf32, #tpu.memory_space<vmem>>, vector<64x1024xf32>
    %cst_20 = arith.constant dense<0.000000e+00> : vector<1x1024xf32>
    %27 = tpu.matmul %22, %26, %cst_20 {dimension_numbers = #tpu.dot_dimension_numbers<[1], [0], [0], [1], [0, 0, 1, 1], [], []>} : vector<1x64xf32>, vector<64x1024xf32>, vector<1x1024xf32> -> vector<1x1024xf32>
    %c0_21 = arith.constant 0 : index
    %c0_22 = arith.constant 0 : index
    %28 = vector.load %arg4[%c0_21, %c0_22] : memref<64x1024xf32, #tpu.memory_space<vmem>>, vector<64x1024xf32>
    %cst_23 = arith.constant dense<0.000000e+00> : vector<1x1024xf32>
    %29 = tpu.matmul %25, %28, %cst_23 {dimension_numbers = #tpu.dot_dimension_numbers<[1], [0], [0], [1], [0, 0, 1, 1], [], []>} : vector<1x64xf32>, vector<64x1024xf32>, vector<1x1024xf32> -> vector<1x1024xf32>
    %30 = vector.broadcast %27 : vector<1x1024xf32> to vector<2x1024xf32>
    %31 = arith.mulf %2, %30 : vector<2x1024xf32>
    %32 = vector.broadcast %29 : vector<1x1024xf32> to vector<2x1024xf32>
    %33 = arith.addf %31, %32 : vector<2x1024xf32>
    %cst_24 = arith.constant 0.000000e+00 : f32
    %34 = vector.broadcast %cst_24 : f32 to vector<2x1024xf32>
    %35 = arith.maximumf %33, %34 : vector<2x1024xf32>
    %c0_25 = arith.constant 0 : index
    %c0_26 = arith.constant 0 : index
    %36 = vector.load %arg7[%c0_25, %c0_26] : memref<2x1024xf32, #tpu.memory_space<vmem>>, vector<2x1024xf32>
    tpu.vector_store %arg7[%c0_25, %c0_26], %35 {strides = array<i32>} : memref<2x1024xf32, #tpu.memory_space<vmem>>, vector<2x1024xf32>,
    return
  }
  func.func @transform_0(%arg0: i32) -> (i32, i32) {
    %c0_i32 = arith.constant 0 : i32
    %c0_i32_0 = arith.constant 0 : i32
    %c0_i32_1 = arith.constant 0 : i32
    return %c0_i32, %c0_i32_0 : i32, i32
  }
  func.func @transform_1(%arg0: i32) -> (i32, i32) {
    %c0_i32 = arith.constant 0 : i32
    %c0_i32_0 = arith.constant 0 : i32
    %c0_i32_1 = arith.constant 0 : i32
    return %c0_i32, %c0_i32_0 : i32, i32
  }
  func.func @transform_2(%arg0: i32) -> (i32, i32) {
    %c0_i32 = arith.constant 0 : i32
    %c0_i32_0 = arith.constant 0 : i32
    %c0_i32_1 = arith.constant 0 : i32
    return %c0_i32, %c0_i32_0 : i32, i32
  }
  func.func @transform_3(%arg0: i32) -> (i32, i32) {
    %c0_i32 = arith.constant 0 : i32
    %c0_i32_0 = arith.constant 0 : i32
    %c0_i32_1 = arith.constant 0 : i32
    return %c0_i32, %c0_i32_0 : i32, i32
  }
  func.func @transform_4(%arg0: i32) -> (i32, i32) {
    %c0_i32 = arith.constant 0 : i32
    %c0_i32_0 = arith.constant 0 : i32
    %c0_i32_1 = arith.constant 0 : i32
    return %c0_i32, %c0_i32_0 : i32, i32
  }
  func.func @transform_5(%arg0: i32) -> (i32, i32) {
    %c0_i32 = arith.constant 0 : i32
    %c0_i32_0 = arith.constant 0 : i32
    %c0_i32_1 = arith.constant 0 : i32
    return %c0_i32, %c0_i32_0 : i32, i32
  }
  func.func @transform_6(%arg0: i32) -> (i32, i32) {
    %c0_i32 = arith.constant 0 : i32
    %c0_i32_0 = arith.constant 0 : i32
    %c0_i32_1 = arith.constant 0 : i32
    return %c0_i32, %c0_i32_0 : i32, i32
  }
}

module attributes {stable_mosaic.version = 11 : i64} {
  func.func @kernel(%arg0: i32, %arg1: memref<32x576xf32, #tpu.memory_space<vmem>>, %arg2: memref<576x128xf32, #tpu.memory_space<vmem>>, %arg3: memref<128x32xf32, #tpu.memory_space<vmem>>, %arg4: memref<32x128xf32, #tpu.memory_space<vmem>>, %arg5: memref<1x32xf32, #tpu.memory_space<vmem>>, %arg6: memref<1x32xf32, #tpu.memory_space<vmem>>, %arg7: memref<32x128xf32, #tpu.memory_space<vmem>>) attributes {dimension_semantics = [#tpu.dimension_semantics<arbitrary>], iteration_bounds = array<i64: 1>, scalar_prefetch = 0 : i64, scratch_operands = 0 : i64, tpu.core_type = #tpu.core_type<tc>, window_params = [{pipeline_mode = #tpu.pipeline_mode<synchronous>, transform_indices = @transform_0, window_bounds = array<i64: 32, 576>}, {pipeline_mode = #tpu.pipeline_mode<synchronous>, transform_indices = @transform_1, window_bounds = array<i64: 576, 128>}, {pipeline_mode = #tpu.pipeline_mode<synchronous>, transform_indices = @transform_2, window_bounds = array<i64: 128, 32>}, {pipeline_mode = #tpu.pipeline_mode<synchronous>, transform_indices = @transform_3, window_bounds = array<i64: 32, 128>}, {pipeline_mode = #tpu.pipeline_mode<synchronous>, transform_indices = @transform_4, window_bounds = array<i64: 1, 32>}, {pipeline_mode = #tpu.pipeline_mode<synchronous>, transform_indices = @transform_5, window_bounds = array<i64: 1, 32>}, {pipeline_mode = #tpu.pipeline_mode<synchronous>, transform_indices = @transform_6, window_bounds = array<i64: 32, 128>}]} {
    %c0 = arith.constant 0 : index
    %c0_0 = arith.constant 0 : index
    %0 = vector.load %arg1[%c0, %c0_0] : memref<32x576xf32, #tpu.memory_space<vmem>>, vector<32x576xf32>
    %c0_1 = arith.constant 0 : index
    %c0_2 = arith.constant 0 : index
    %1 = vector.load %arg2[%c0_1, %c0_2] : memref<576x128xf32, #tpu.memory_space<vmem>>, vector<576x128xf32>
    %cst = arith.constant dense<0.000000e+00> : vector<32x128xf32>
    %2 = tpu.matmul %0, %1, %cst {dimension_numbers = #tpu.dot_dimension_numbers<[1], [0], [0], [1], [0, 0, 1, 1], [], []>} : vector<32x576xf32>, vector<576x128xf32>, vector<32x128xf32> -> vector<32x128xf32>
    %cst_3 = arith.constant dense<0.000000e+00> : vector<128xf32>
    %3 = vector.multi_reduction <add>, %2, %cst_3 [0] : vector<32x128xf32> to vector<128xf32>
    %4 = vector.shape_cast %3 : vector<128xf32> to vector<1x128xf32>
    %5 = arith.mulf %2, %2 : vector<32x128xf32>
    %cst_4 = arith.constant dense<0.000000e+00> : vector<128xf32>
    %6 = vector.multi_reduction <add>, %5, %cst_4 [0] : vector<32x128xf32> to vector<128xf32>
    %7 = vector.shape_cast %6 : vector<128xf32> to vector<1x128xf32>
    %c0_5 = arith.constant 0 : index
    %c0_6 = arith.constant 0 : index
    %8 = vector.load %arg3[%c0_5, %c0_6] : memref<128x32xf32, #tpu.memory_space<vmem>>, vector<128x32xf32>
    %cst_7 = arith.constant dense<0.000000e+00> : vector<1x32xf32>
    %9 = tpu.matmul %4, %8, %cst_7 {dimension_numbers = #tpu.dot_dimension_numbers<[1], [0], [0], [1], [0, 0, 1, 1], [], []>} : vector<1x128xf32>, vector<128x32xf32>, vector<1x32xf32> -> vector<1x32xf32>
    %c0_8 = arith.constant 0 : index
    %c0_9 = arith.constant 0 : index
    %10 = vector.load %arg3[%c0_8, %c0_9] : memref<128x32xf32, #tpu.memory_space<vmem>>, vector<128x32xf32>
    %cst_10 = arith.constant dense<0.000000e+00> : vector<1x32xf32>
    %11 = tpu.matmul %7, %10, %cst_10 {dimension_numbers = #tpu.dot_dimension_numbers<[1], [0], [0], [1], [0, 0, 1, 1], [], []>} : vector<1x128xf32>, vector<128x32xf32>, vector<1x32xf32> -> vector<1x32xf32>
    %cst_11 = arith.constant 7.812500e-03 : f32
    %12 = vector.broadcast %cst_11 : f32 to vector<1x32xf32>
    %13 = arith.mulf %9, %12 : vector<1x32xf32>
    %cst_12 = arith.constant 7.812500e-03 : f32
    %14 = vector.broadcast %cst_12 : f32 to vector<1x32xf32>
    %15 = arith.mulf %11, %14 : vector<1x32xf32>
    %16 = arith.mulf %13, %13 : vector<1x32xf32>
    %17 = arith.subf %15, %16 : vector<1x32xf32>
    %cst_13 = arith.constant 9.99999974E-6 : f32
    %18 = vector.broadcast %cst_13 : f32 to vector<1x32xf32>
    %19 = arith.addf %17, %18 : vector<1x32xf32>
    %20 = math.rsqrt %19 : vector<1x32xf32>
    %c0_14 = arith.constant 0 : index
    %c0_15 = arith.constant 0 : index
    %21 = vector.load %arg5[%c0_14, %c0_15] : memref<1x32xf32, #tpu.memory_space<vmem>>, vector<1x32xf32>
    %22 = arith.mulf %21, %20 : vector<1x32xf32>
    %c0_16 = arith.constant 0 : index
    %c0_17 = arith.constant 0 : index
    %23 = vector.load %arg6[%c0_16, %c0_17] : memref<1x32xf32, #tpu.memory_space<vmem>>, vector<1x32xf32>
    %24 = arith.mulf %13, %22 : vector<1x32xf32>
    %25 = arith.subf %23, %24 : vector<1x32xf32>
    %c0_18 = arith.constant 0 : index
    %c0_19 = arith.constant 0 : index
    %26 = vector.load %arg4[%c0_18, %c0_19] : memref<32x128xf32, #tpu.memory_space<vmem>>, vector<32x128xf32>
    %cst_20 = arith.constant dense<0.000000e+00> : vector<1x128xf32>
    %27 = tpu.matmul %22, %26, %cst_20 {dimension_numbers = #tpu.dot_dimension_numbers<[1], [0], [0], [1], [0, 0, 1, 1], [], []>} : vector<1x32xf32>, vector<32x128xf32>, vector<1x128xf32> -> vector<1x128xf32>
    %c0_21 = arith.constant 0 : index
    %c0_22 = arith.constant 0 : index
    %28 = vector.load %arg4[%c0_21, %c0_22] : memref<32x128xf32, #tpu.memory_space<vmem>>, vector<32x128xf32>
    %cst_23 = arith.constant dense<0.000000e+00> : vector<1x128xf32>
    %29 = tpu.matmul %25, %28, %cst_23 {dimension_numbers = #tpu.dot_dimension_numbers<[1], [0], [0], [1], [0, 0, 1, 1], [], []>} : vector<1x32xf32>, vector<32x128xf32>, vector<1x128xf32> -> vector<1x128xf32>
    %30 = vector.broadcast %27 : vector<1x128xf32> to vector<32x128xf32>
    %31 = arith.mulf %2, %30 : vector<32x128xf32>
    %32 = vector.broadcast %29 : vector<1x128xf32> to vector<32x128xf32>
    %33 = arith.addf %31, %32 : vector<32x128xf32>
    %cst_24 = arith.constant 0.000000e+00 : f32
    %34 = vector.broadcast %cst_24 : f32 to vector<32x128xf32>
    %35 = arith.maximumf %33, %34 : vector<32x128xf32>
    %c0_25 = arith.constant 0 : index
    %c0_26 = arith.constant 0 : index
    %36 = vector.load %arg7[%c0_25, %c0_26] : memref<32x128xf32, #tpu.memory_space<vmem>>, vector<32x128xf32>
    tpu.vector_store %arg7[%c0_25, %c0_26], %35 {strides = array<i32>} : memref<32x128xf32, #tpu.memory_space<vmem>>, vector<32x128xf32>,
    return
  }
  func.func @transform_0(%arg0: i32) -> (i32, i32) {
    %c0_i32 = arith.constant 0 : i32
    %c0_i32_0 = arith.constant 0 : i32
    %c0_i32_1 = arith.constant 0 : i32
    return %c0_i32, %c0_i32_0 : i32, i32
  }
  func.func @transform_1(%arg0: i32) -> (i32, i32) {
    %c0_i32 = arith.constant 0 : i32
    %c0_i32_0 = arith.constant 0 : i32
    %c0_i32_1 = arith.constant 0 : i32
    return %c0_i32, %c0_i32_0 : i32, i32
  }
  func.func @transform_2(%arg0: i32) -> (i32, i32) {
    %c0_i32 = arith.constant 0 : i32
    %c0_i32_0 = arith.constant 0 : i32
    %c0_i32_1 = arith.constant 0 : i32
    return %c0_i32, %c0_i32_0 : i32, i32
  }
  func.func @transform_3(%arg0: i32) -> (i32, i32) {
    %c0_i32 = arith.constant 0 : i32
    %c0_i32_0 = arith.constant 0 : i32
    %c0_i32_1 = arith.constant 0 : i32
    return %c0_i32, %c0_i32_0 : i32, i32
  }
  func.func @transform_4(%arg0: i32) -> (i32, i32) {
    %c0_i32 = arith.constant 0 : i32
    %c0_i32_0 = arith.constant 0 : i32
    %c0_i32_1 = arith.constant 0 : i32
    return %c0_i32, %c0_i32_0 : i32, i32
  }
  func.func @transform_5(%arg0: i32) -> (i32, i32) {
    %c0_i32 = arith.constant 0 : i32
    %c0_i32_0 = arith.constant 0 : i32
    %c0_i32_1 = arith.constant 0 : i32
    return %c0_i32, %c0_i32_0 : i32, i32
  }
  func.func @transform_6(%arg0: i32) -> (i32, i32) {
    %c0_i32 = arith.constant 0 : i32
    %c0_i32_0 = arith.constant 0 : i32
    %c0_i32_1 = arith.constant 0 : i32
    return %c0_i32, %c0_i32_0 : i32, i32
  }
}

module attributes {stable_mosaic.version = 11 : i64} {
  func.func @kernel(%arg0: i32, %arg1: memref<128x288xf32, #tpu.memory_space<vmem>>, %arg2: memref<288x64xf32, #tpu.memory_space<vmem>>, %arg3: memref<64x16xf32, #tpu.memory_space<vmem>>, %arg4: memref<16x64xf32, #tpu.memory_space<vmem>>, %arg5: memref<1x16xf32, #tpu.memory_space<vmem>>, %arg6: memref<1x16xf32, #tpu.memory_space<vmem>>, %arg7: memref<128x64xf32, #tpu.memory_space<vmem>>) attributes {dimension_semantics = [#tpu.dimension_semantics<arbitrary>], iteration_bounds = array<i64: 1>, scalar_prefetch = 0 : i64, scratch_operands = 0 : i64, tpu.core_type = #tpu.core_type<tc>, window_params = [{pipeline_mode = #tpu.pipeline_mode<synchronous>, transform_indices = @transform_0, window_bounds = array<i64: 128, 288>}, {pipeline_mode = #tpu.pipeline_mode<synchronous>, transform_indices = @transform_1, window_bounds = array<i64: 288, 64>}, {pipeline_mode = #tpu.pipeline_mode<synchronous>, transform_indices = @transform_2, window_bounds = array<i64: 64, 16>}, {pipeline_mode = #tpu.pipeline_mode<synchronous>, transform_indices = @transform_3, window_bounds = array<i64: 16, 64>}, {pipeline_mode = #tpu.pipeline_mode<synchronous>, transform_indices = @transform_4, window_bounds = array<i64: 1, 16>}, {pipeline_mode = #tpu.pipeline_mode<synchronous>, transform_indices = @transform_5, window_bounds = array<i64: 1, 16>}, {pipeline_mode = #tpu.pipeline_mode<synchronous>, transform_indices = @transform_6, window_bounds = array<i64: 128, 64>}]} {
    %c0 = arith.constant 0 : index
    %c0_0 = arith.constant 0 : index
    %0 = vector.load %arg1[%c0, %c0_0] : memref<128x288xf32, #tpu.memory_space<vmem>>, vector<128x288xf32>
    %c0_1 = arith.constant 0 : index
    %c0_2 = arith.constant 0 : index
    %1 = vector.load %arg2[%c0_1, %c0_2] : memref<288x64xf32, #tpu.memory_space<vmem>>, vector<288x64xf32>
    %cst = arith.constant dense<0.000000e+00> : vector<128x64xf32>
    %2 = tpu.matmul %0, %1, %cst {dimension_numbers = #tpu.dot_dimension_numbers<[1], [0], [0], [1], [0, 0, 1, 1], [], []>} : vector<128x288xf32>, vector<288x64xf32>, vector<128x64xf32> -> vector<128x64xf32>
    %cst_3 = arith.constant dense<0.000000e+00> : vector<64xf32>
    %3 = vector.multi_reduction <add>, %2, %cst_3 [0] : vector<128x64xf32> to vector<64xf32>
    %4 = vector.shape_cast %3 : vector<64xf32> to vector<1x64xf32>
    %5 = arith.mulf %2, %2 : vector<128x64xf32>
    %cst_4 = arith.constant dense<0.000000e+00> : vector<64xf32>
    %6 = vector.multi_reduction <add>, %5, %cst_4 [0] : vector<128x64xf32> to vector<64xf32>
    %7 = vector.shape_cast %6 : vector<64xf32> to vector<1x64xf32>
    %c0_5 = arith.constant 0 : index
    %c0_6 = arith.constant 0 : index
    %8 = vector.load %arg3[%c0_5, %c0_6] : memref<64x16xf32, #tpu.memory_space<vmem>>, vector<64x16xf32>
    %cst_7 = arith.constant dense<0.000000e+00> : vector<1x16xf32>
    %9 = tpu.matmul %4, %8, %cst_7 {dimension_numbers = #tpu.dot_dimension_numbers<[1], [0], [0], [1], [0, 0, 1, 1], [], []>} : vector<1x64xf32>, vector<64x16xf32>, vector<1x16xf32> -> vector<1x16xf32>
    %c0_8 = arith.constant 0 : index
    %c0_9 = arith.constant 0 : index
    %10 = vector.load %arg3[%c0_8, %c0_9] : memref<64x16xf32, #tpu.memory_space<vmem>>, vector<64x16xf32>
    %cst_10 = arith.constant dense<0.000000e+00> : vector<1x16xf32>
    %11 = tpu.matmul %7, %10, %cst_10 {dimension_numbers = #tpu.dot_dimension_numbers<[1], [0], [0], [1], [0, 0, 1, 1], [], []>} : vector<1x64xf32>, vector<64x16xf32>, vector<1x16xf32> -> vector<1x16xf32>
    %cst_11 = arith.constant 0.001953125 : f32
    %12 = vector.broadcast %cst_11 : f32 to vector<1x16xf32>
    %13 = arith.mulf %9, %12 : vector<1x16xf32>
    %cst_12 = arith.constant 0.001953125 : f32
    %14 = vector.broadcast %cst_12 : f32 to vector<1x16xf32>
    %15 = arith.mulf %11, %14 : vector<1x16xf32>
    %16 = arith.mulf %13, %13 : vector<1x16xf32>
    %17 = arith.subf %15, %16 : vector<1x16xf32>
    %cst_13 = arith.constant 9.99999974E-6 : f32
    %18 = vector.broadcast %cst_13 : f32 to vector<1x16xf32>
    %19 = arith.addf %17, %18 : vector<1x16xf32>
    %20 = math.rsqrt %19 : vector<1x16xf32>
    %c0_14 = arith.constant 0 : index
    %c0_15 = arith.constant 0 : index
    %21 = vector.load %arg5[%c0_14, %c0_15] : memref<1x16xf32, #tpu.memory_space<vmem>>, vector<1x16xf32>
    %22 = arith.mulf %21, %20 : vector<1x16xf32>
    %c0_16 = arith.constant 0 : index
    %c0_17 = arith.constant 0 : index
    %23 = vector.load %arg6[%c0_16, %c0_17] : memref<1x16xf32, #tpu.memory_space<vmem>>, vector<1x16xf32>
    %24 = arith.mulf %13, %22 : vector<1x16xf32>
    %25 = arith.subf %23, %24 : vector<1x16xf32>
    %c0_18 = arith.constant 0 : index
    %c0_19 = arith.constant 0 : index
    %26 = vector.load %arg4[%c0_18, %c0_19] : memref<16x64xf32, #tpu.memory_space<vmem>>, vector<16x64xf32>
    %cst_20 = arith.constant dense<0.000000e+00> : vector<1x64xf32>
    %27 = tpu.matmul %22, %26, %cst_20 {dimension_numbers = #tpu.dot_dimension_numbers<[1], [0], [0], [1], [0, 0, 1, 1], [], []>} : vector<1x16xf32>, vector<16x64xf32>, vector<1x64xf32> -> vector<1x64xf32>
    %c0_21 = arith.constant 0 : index
    %c0_22 = arith.constant 0 : index
    %28 = vector.load %arg4[%c0_21, %c0_22] : memref<16x64xf32, #tpu.memory_space<vmem>>, vector<16x64xf32>
    %cst_23 = arith.constant dense<0.000000e+00> : vector<1x64xf32>
    %29 = tpu.matmul %25, %28, %cst_23 {dimension_numbers = #tpu.dot_dimension_numbers<[1], [0], [0], [1], [0, 0, 1, 1], [], []>} : vector<1x16xf32>, vector<16x64xf32>, vector<1x64xf32> -> vector<1x64xf32>
    %30 = vector.broadcast %27 : vector<1x64xf32> to vector<128x64xf32>
    %31 = arith.mulf %2, %30 : vector<128x64xf32>
    %32 = vector.broadcast %29 : vector<1x64xf32> to vector<128x64xf32>
    %33 = arith.addf %31, %32 : vector<128x64xf32>
    %cst_24 = arith.constant 0.000000e+00 : f32
    %34 = vector.broadcast %cst_24 : f32 to vector<128x64xf32>
    %35 = arith.maximumf %33, %34 : vector<128x64xf32>
    %c0_25 = arith.constant 0 : index
    %c0_26 = arith.constant 0 : index
    %36 = vector.load %arg7[%c0_25, %c0_26] : memref<128x64xf32, #tpu.memory_space<vmem>>, vector<128x64xf32>
    tpu.vector_store %arg7[%c0_25, %c0_26], %35 {strides = array<i32>} : memref<128x64xf32, #tpu.memory_space<vmem>>, vector<128x64xf32>,
    return
  }
  func.func @transform_0(%arg0: i32) -> (i32, i32) {
    %c0_i32 = arith.constant 0 : i32
    %c0_i32_0 = arith.constant 0 : i32
    %c0_i32_1 = arith.constant 0 : i32
    return %c0_i32, %c0_i32_0 : i32, i32
  }
  func.func @transform_1(%arg0: i32) -> (i32, i32) {
    %c0_i32 = arith.constant 0 : i32
    %c0_i32_0 = arith.constant 0 : i32
    %c0_i32_1 = arith.constant 0 : i32
    return %c0_i32, %c0_i32_0 : i32, i32
  }
  func.func @transform_2(%arg0: i32) -> (i32, i32) {
    %c0_i32 = arith.constant 0 : i32
    %c0_i32_0 = arith.constant 0 : i32
    %c0_i32_1 = arith.constant 0 : i32
    return %c0_i32, %c0_i32_0 : i32, i32
  }
  func.func @transform_3(%arg0: i32) -> (i32, i32) {
    %c0_i32 = arith.constant 0 : i32
    %c0_i32_0 = arith.constant 0 : i32
    %c0_i32_1 = arith.constant 0 : i32
    return %c0_i32, %c0_i32_0 : i32, i32
  }
  func.func @transform_4(%arg0: i32) -> (i32, i32) {
    %c0_i32 = arith.constant 0 : i32
    %c0_i32_0 = arith.constant 0 : i32
    %c0_i32_1 = arith.constant 0 : i32
    return %c0_i32, %c0_i32_0 : i32, i32
  }
  func.func @transform_5(%arg0: i32) -> (i32, i32) {
    %c0_i32 = arith.constant 0 : i32
    %c0_i32_0 = arith.constant 0 : i32
    %c0_i32_1 = arith.constant 0 : i32
    return %c0_i32, %c0_i32_0 : i32, i32
  }
  func.func @transform_6(%arg0: i32) -> (i32, i32) {
    %c0_i32 = arith.constant 0 : i32
    %c0_i32_0 = arith.constant 0 : i32
    %c0_i32_1 = arith.constant 0 : i32
    return %c0_i32, %c0_i32_0 : i32, i32
  }
}

module attributes {stable_mosaic.version = 11 : i64} {
  func.func @_convt_tanh_kernel(%arg0: i32, %arg1: memref<128x144xf32, #tpu.memory_space<vmem>>, %arg2: memref<144x12xf32, #tpu.memory_space<vmem>>, %arg3: memref<128x12xf32, #tpu.memory_space<vmem>>) attributes {dimension_semantics = [#tpu.dimension_semantics<parallel>], iteration_bounds = array<i64: 4>, scalar_prefetch = 0 : i64, scratch_operands = 0 : i64, tpu.core_type = #tpu.core_type<tc>, window_params = [{transform_indices = @transform_0, window_bounds = array<i64: 128, 144>}, {pipeline_mode = #tpu.pipeline_mode<synchronous>, transform_indices = @transform_1, window_bounds = array<i64: 144, 12>}, {transform_indices = @transform_2, window_bounds = array<i64: 128, 12>}]} {
    %c0 = arith.constant 0 : index
    %c0_0 = arith.constant 0 : index
    %0 = vector.load %arg1[%c0, %c0_0] : memref<128x144xf32, #tpu.memory_space<vmem>>, vector<128x144xf32>
    %c0_1 = arith.constant 0 : index
    %c0_2 = arith.constant 0 : index
    %1 = vector.load %arg2[%c0_1, %c0_2] : memref<144x12xf32, #tpu.memory_space<vmem>>, vector<144x12xf32>
    %cst = arith.constant dense<0.000000e+00> : vector<128x12xf32>
    %2 = tpu.matmul %0, %1, %cst {dimension_numbers = #tpu.dot_dimension_numbers<[1], [0], [0], [1], [0, 0, 1, 1], [], []>} : vector<128x144xf32>, vector<144x12xf32>, vector<128x12xf32> -> vector<128x12xf32>
    %3 = math.tanh %2 : vector<128x12xf32>
    %c0_3 = arith.constant 0 : index
    %c0_4 = arith.constant 0 : index
    %4 = vector.load %arg3[%c0_3, %c0_4] : memref<128x12xf32, #tpu.memory_space<vmem>>, vector<128x12xf32>
    tpu.vector_store %arg3[%c0_3, %c0_4], %3 {strides = array<i32>} : memref<128x12xf32, #tpu.memory_space<vmem>>, vector<128x12xf32>,
    return
  }
  func.func @transform_0(%arg0: i32) -> (i32, i32) {
    %c0_i32 = arith.constant 0 : i32
    %c0_i32_0 = arith.constant 0 : i32
    return %arg0, %c0_i32 : i32, i32
  }
  func.func @transform_1(%arg0: i32) -> (i32, i32) {
    %c0_i32 = arith.constant 0 : i32
    %c0_i32_0 = arith.constant 0 : i32
    %c0_i32_1 = arith.constant 0 : i32
    return %c0_i32, %c0_i32_0 : i32, i32
  }
  func.func @transform_2(%arg0: i32) -> (i32, i32) {
    %c0_i32 = arith.constant 0 : i32
    %c0_i32_0 = arith.constant 0 : i32
    return %arg0, %c0_i32 : i32, i32
  }
}

</mosaic_0001>

<llo_original>
// kernel: generator_forward.4
$region0: #{generator_forward.4}
  #allocation0 [shape = 'u32[]', space=smem, size = 0x4, offset = 0x4, fixed_abs, tag = 'smem constant byte address 0x4 - core index']
  #allocation1 [shape = 'u32[144,128]{1,0:T(1,128)}', space=vmem, size = 0x12000, scoped, tag = 'internal scratch']
  %s0 = inlined_call_operand.hbm [shape: f32[2,32], index: 0, kind: input, shape index: {}]
  %s1 = inlined_call_operand.hbm [shape: f32[32,1024], index: 1, kind: input, shape index: {}]
  %s2 = inlined_call_operand.vmem [shape: f32[1024,64], index: 2, kind: input, shape index: {}]
  %s3 = inlined_call_operand.hbm [shape: f32[64,1024], index: 3, kind: input, shape index: {}]
  %s4 = inlined_call_operand.hbm [shape: f32[1,64], index: 4, kind: input, shape index: {}]
  %s5 = inlined_call_operand.hbm [shape: f32[1,64], index: 5, kind: input, shape index: {}]
  %s6 = inlined_call_operand.vmem [shape: f32[2,1024], index: 6, kind: output, shape index: {}]
  %s7 = sld [smem:[#allocation0]]
  $region54: #{generator_forward.4} parent=0
    _
  %s9 = ssub.s32 1, %s7
  %s10 = scalar_select 0, %s9, %s7
  $region1: #{generator_forward.4} parent=0
    #allocation2 [shape = 'u8[1024]{0}', space=vmem, size = 0x400, scoped, tag = 'input window, operand 0, single buffered']
    #allocation3 [shape = 's32[1]{0}', space=sflag, size = 0x4, scoped, tag = 'scoped memory for generator_forward.4']
    #allocation4 [shape = 'u8[131072]{0}', space=vmem, size = 0x20000, scoped, tag = 'input window, operand 1, single buffered']
    #allocation5 [shape = 's32[1]{0}', space=sflag, size = 0x4, scoped, tag = 'scoped memory for generator_forward.4']
    #allocation6 [shape = 'u8[262144]{0}', space=vmem, size = 0x40000, scoped, tag = 'input window, operand 3, single buffered']
    #allocation7 [shape = 'u8[512]{0}', space=vmem, size = 0x400, scoped, tag = 'input window, operand 4, single buffered']
    #allocation8 [shape = 's32[1]{0}', space=sflag, size = 0x4, scoped, tag = 'scoped memory for generator_forward.4']
    #allocation9 [shape = 'u8[512]{0}', space=vmem, size = 0x400, scoped, tag = 'input window, operand 5, single buffered']
    %11 = vsyncpa [#allocation3], 0
    %12 = vsyncpa [#allocation5], 0
    %13 = vsyncpa [#allocation8], 0
    // Predicated region
    $region2: #{generator_forward.4} parent=1 // pred_check
      _
    $region3: #{generator_forward.4} parent=1 // pred_check_branch
      %15 = sbr.rel (0) target = $region5
    $region4: #{generator_forward.4} parent=1 // pred_region
      %s17 = ssub.s32 32, 32
      %18 = vsyncadd [#allocation3], %s17
      %s20 = sshll.u32 [#allocation2], 4
      %s21 = int_to_ptr.vmem [resolvable:$true] %s20
      %23 = dma.hbm_to_vmem [thread:$0]  %s0, 32, %s21, [#allocation3]
    $region5: #{generator_forward.4} parent=1 // pred_fallthru
      _
    // Predicated region
    $region6: #{generator_forward.4} parent=1 // pred_check
      _
    $region7: #{generator_forward.4} parent=1 // pred_check_branch
      %25 = sbr.rel (0) target = $region9
    $region8: #{generator_forward.4} parent=1 // pred_region
      %s27 = ssub.s32 4096, 4096
      %28 = vsyncadd [#allocation5], %s27
      %s29 = sshll.u32 [#allocation4], 4
      %s30 = int_to_ptr.vmem [resolvable:$true] %s29
      %35 = dma.hbm_to_vmem [thread:$0]  %s1, 4096, %s30, [#allocation5], 1024, 1024, 64
    $region9: #{generator_forward.4} parent=1 // pred_fallthru
      _
    // Predicated region
    $region10: #{generator_forward.4} parent=1 // pred_check
      _
    $region11: #{generator_forward.4} parent=1 // pred_check_branch
      %37 = sbr.rel (0) target = $region13
    $region12: #{generator_forward.4} parent=1 // pred_region
      _
    $region13: #{generator_forward.4} parent=1 // pred_fallthru
      _
    // Predicated region
    $region14: #{generator_forward.4} parent=1 // pred_check
      _
    $region15: #{generator_forward.4} parent=1 // pred_check_branch
      %39 = sbr.rel (0) target = $region17
    $region16: #{generator_forward.4} parent=1 // pred_region
      %s41 = ssub.s32 8192, 8192
      %42 = vsyncadd [#allocation5], %s41
      %s43 = sshll.u32 [#allocation6], 4
      %s44 = int_to_ptr.vmem [resolvable:$true] %s43
      %49 = dma.hbm_to_vmem [thread:$0]  %s3, 8192, %s44, [#allocation5], 1024, 1024, 64
    $region17: #{generator_forward.4} parent=1 // pred_fallthru
      _
    // Predicated region
    $region18: #{generator_forward.4} parent=1 // pred_check
      _
    $region19: #{generator_forward.4} parent=1 // pred_check_branch
      %51 = sbr.rel (0) target = $region21
    $region20: #{generator_forward.4} parent=1 // pred_region
      %s53 = ssub.s32 16, 16
      %54 = vsyncadd [#allocation8], %s53
      %s56 = sshll.u32 [#allocation7], 4
      %s57 = int_to_ptr.vmem [resolvable:$true] %s56
      %59 = dma.hbm_to_vmem [thread:$0]  %s4, 16, %s57, [#allocation8]
    $region21: #{generator_forward.4} parent=1 // pred_fallthru
      _
    // Predicated region
    $region22: #{generator_forward.4} parent=1 // pred_check
      _
    $region23: #{generator_forward.4} parent=1 // pred_check_branch
      %61 = sbr.rel (0) target = $region25
    $region24: #{generator_forward.4} parent=1 // pred_region
      %s63 = ssub.s32 16, 16
      %64 = vsyncadd [#allocation8], %s63
      %s66 = sshll.u32 [#allocation9], 4
      %s67 = int_to_ptr.vmem [resolvable:$true] %s66
      %69 = dma.hbm_to_vmem [thread:$0]  %s5, 16, %s67, [#allocation8]
    $region25: #{generator_forward.4} parent=1 // pred_fallthru
      _
    // Predicated region
    $region26: #{generator_forward.4} parent=1 // pred_check
      _
    $region27: #{generator_forward.4} parent=1 // pred_check_branch
      %71 = sbr.rel (0) target = $region29
    $region28: #{generator_forward.4} parent=1 // pred_region
      %72 = dma.done [#allocation3], 32
    $region29: #{generator_forward.4} parent=1 // pred_fallthru
      _
    // Predicated region
    $region30: #{generator_forward.4} parent=1 // pred_check
      _
    $region31: #{generator_forward.4} parent=1 // pred_check_branch
      %74 = sbr.rel (0) target = $region33
    $region32: #{generator_forward.4} parent=1 // pred_region
      %75 = dma.done [#allocation5], 4096
    $region33: #{generator_forward.4} parent=1 // pred_fallthru
      _
    // Predicated region
    $region34: #{generator_forward.4} parent=1 // pred_check
      _
    $region35: #{generator_forward.4} parent=1 // pred_check_branch
      %77 = sbr.rel (0) target = $region37
    $region36: #{generator_forward.4} parent=1 // pred_region
      %78 = dma.done [#allocation5], 8192
    $region37: #{generator_forward.4} parent=1 // pred_fallthru
      _
    // Predicated region
    $region38: #{generator_forward.4} parent=1 // pred_check
      _
    $region39: #{generator_forward.4} parent=1 // pred_check_branch
      %80 = sbr.rel (0) target = $region41
    $region40: #{generator_forward.4} parent=1 // pred_region
      %81 = dma.done [#allocation8], 16
    $region41: #{generator_forward.4} parent=1 // pred_fallthru
      _
    // Predicated region
    $region42: #{generator_forward.4} parent=1 // pred_check
      _
    $region43: #{generator_forward.4} parent=1 // pred_check_branch
      %83 = sbr.rel (0) target = $region45
    $region44: #{generator_forward.4} parent=1 // pred_region
      %84 = dma.done [#allocation8], 16
    $region45: #{generator_forward.4} parent=1 // pred_fallthru
      _
    %v85 = vld [vmem:[#allocation2] sm:$0x3]
    %v86 = vld [vmem:[#allocation4] sm:$0xff]
    %v87 = vld [vmem:[#allocation4 + $0x8] sm:$0xff]
    %v88 = vld [vmem:[#allocation4 + $0x10] sm:$0xff]
    %v89 = vld [vmem:[#allocation4 + $0x18] sm:$0xff]
    %v90 = vld [vmem:[#allocation4 + $0x20] sm:$0xff]
    %v91 = vld [vmem:[#allocation4 + $0x28] sm:$0xff]
    %v92 = vld [vmem:[#allocation4 + $0x30] sm:$0xff]
    %v93 = vld [vmem:[#allocation4 + $0x38] sm:$0xff]
    %v94 = vld [vmem:[#allocation4 + $0x40] sm:$0xff]
    %v95 = vld [vmem:[#allocation4 + $0x48] sm:$0xff]
    %v96 = vld [vmem:[#allocation4 + $0x50] sm:$0xff]
    %v97 = vld [vmem:[#allocation4 + $0x58] sm:$0xff]
    %v98 = vld [vmem:[#allocation4 + $0x60] sm:$0xff]
    %v99 = vld [vmem:[#allocation4 + $0x68] sm:$0xff]
    %v100 = vld [vmem:[#allocation4 + $0x70] sm:$0xff]
    %v101 = vld [vmem:[#allocation4 + $0x78] sm:$0xff]
    %v102 = vld [vmem:[#allocation4 + $0x80] sm:$0xff]
    %v103 = vld [vmem:[#allocation4 + $0x88] sm:$0xff]
    %v104 = vld [vmem:[#allocation4 + $0x90] sm:$0xff]
    %v105 = vld [vmem:[#allocation4 + $0x98] sm:$0xff]
    %v106 = vld [vmem:[#allocation4 + $0xa0] sm:$0xff]
    %v107 = vld [vmem:[#allocation4 + $0xa8] sm:$0xff]
    %v108 = vld [vmem:[#allocation4 + $0xb0] sm:$0xff]
    %v109 = vld [vmem:[#allocation4 + $0xb8] sm:$0xff]
    %v110 = vld [vmem:[#allocation4 + $0xc0] sm:$0xff]
    %v111 = vld [vmem:[#allocation4 + $0xc8] sm:$0xff]
    %v112 = vld [vmem:[#allocation4 + $0xd0] sm:$0xff]
    %v113 = vld [vmem:[#allocation4 + $0xd8] sm:$0xff]
    %v114 = vld [vmem:[#allocation4 + $0xe0] sm:$0xff]
    %v115 = vld [vmem:[#allocation4 + $0xe8] sm:$0xff]
    %v116 = vld [vmem:[#allocation4 + $0xf0] sm:$0xff]
    %v117 = vld [vmem:[#allocation4 + $0xf8] sm:$0xff]
    %vm118 = vcmask 261120
    %v120 = vsel %vm118, %v85, 0
    %122 = vmatprep.subr.mxu0 %v87
    %123 = vmatpush1.msra.mxu0 %v86
    %124 = vmatprep.subr.mxu0 %v95
    %125 = vmatpush1.msra.mxu0 %v94
    %126 = vmatprep.subr.mxu0 %v103
    %127 = vmatpush1.msra.mxu0 %v102
    %128 = vmatprep.subr.mxu0 %v111
    %129 = vmatpush1.msra.mxu0 %v110
    %130 = vmatprep.subr.mxu0 0.0
    %131 = vmatpush1.msra.mxu0 0.0
    %132 = vmatprep.subr.mxu0 0.0
    %133 = vmatpush1.msra.mxu0 0.0
    %134 = vmatprep.subr.mxu0 0.0
    %135 = vmatpush1.msra.mxu0 0.0
    %136 = vmatprep.subr.mxu0 0.0
    %137 = vmatpush1.msra.mxu0 0.0
    %138 = vmatprep.subr.mxu0 0.0
    %139 = vmatpush1.msra.mxu0 0.0
    %140 = vmatprep.subr.mxu0 0.0
    %141 = vmatpush1.msra.mxu0 0.0
    %142 = vmatprep.subr.mxu0 0.0
    %143 = vmatpush1.msra.mxu0 0.0
    %144 = vmatprep.subr.mxu0 0.0
    %145 = vmatpush1.msra.mxu0 0.0
    %146 = vmatprep.subr.mxu0 0.0
    %147 = vmatpush1.msra.mxu0 0.0
    %148 = vmatprep.subr.mxu0 0.0
    %149 = vmatpush1.msra.mxu0 0.0
    %150 = vmatprep.subr.mxu0 0.0
    %151 = vmatpush1.msra.mxu0 0.0
    %152 = vmatprep.subr.mxu0 0.0
    %153 = vmatpush1.msra.mxu0 0.0
    %154 = vmatprep.subr.mxu0 0.0
    %155 = vmatpush1.msra.mxu0 0.0
    %156 = vmatprep.subr.mxu0 0.0
    %157 = vmatpush1.msra.mxu0 0.0
    %158 = vmatprep.subr.mxu0 0.0
    %159 = vmatpush1.msra.mxu0 0.0
    %160 = vmatprep.subr.mxu0 0.0
    %161 = vmatpush1.msra.mxu0 0.0
    %162 = vmatprep.subr.mxu0 0.0
    %163 = vmatpush1.msra.mxu0 0.0
    %164 = vmatprep.subr.mxu0 0.0
    %165 = vmatpush1.msra.mxu0 0.0
    %166 = vmatprep.subr.mxu0 0.0
    %167 = vmatpush1.msra.mxu0 0.0
    %168 = vmatprep.subr.mxu0 0.0
    %169 = vmatpush1.msra.mxu0 0.0
    %170 = vmatprep.subr.mxu0 0.0
    %171 = vmatpush1.msra.mxu0 0.0
    %172 = vmatprep.subr.mxu0 0.0
    %173 = vmatpush1.msra.mxu0 0.0
    %174 = vmatprep.subr.mxu0 0.0
    %175 = vmatpush1.msra.mxu0 0.0
    %176 = vmatprep.subr.mxu0 0.0
    %177 = vmatpush1.msra.mxu0 0.0
    %178 = vmatprep.subr.mxu0 0.0
    %179 = vmatpush1.msra.mxu0 0.0
    %180 = vmatprep.subr.mxu0 0.0
    %181 = vmatpush1.msra.mxu0 0.0
    %182 = vmatprep.subr.mxu0 0.0
    %183 = vmatpush1.msra.mxu0 0.0
    %184 = vmatprep.subr.mxu0 0.0
    %185 = vmatpush1.msra.mxu0 0.0
    %186 = vmatprep.mubr.f32.mxu0 0.0
    %187 = vmatmul.mubr.f32.gmra.mrb[0].mxu0 %v120
    %v188 = vpop.f32.mrb[0].mxu0
    %v189 = vadd.f32 0.0, %v188
    %v190 = vpop.f32.mrb[0].mxu0
    %v191 = vadd.f32 0.0, %v190
    %192 = vdwg.mxu0
    %193 = vmatprep.subr.mxu0 %v89
    %194 = vmatpush1.msra.mxu0 %v88
    %195 = vmatprep.subr.mxu0 %v97
    %196 = vmatpush1.msra.mxu0 %v96
    %197 = vmatprep.subr.mxu0 %v105
    %198 = vmatpush1.msra.mxu0 %v104
    %199 = vmatprep.subr.mxu0 %v113
    %200 = vmatpush1.msra.mxu0 %v112
    %201 = vmatprep.subr.mxu0 0.0
    %202 = vmatpush1.msra.mxu0 0.0
    %203 = vmatprep.subr.mxu0 0.0
    %204 = vmatpush1.msra.mxu0 0.0
    %205 = vmatprep.subr.mxu0 0.0
    %206 = vmatpush1.msra.mxu0 0.0
    %207 = vmatprep.subr.mxu0 0.0
    %208 = vmatpush1.msra.mxu0 0.0
    %209 = vmatprep.subr.mxu0 0.0
    %210 = vmatpush1.msra.mxu0 0.0
    %211 = vmatprep.subr.mxu0 0.0
    %212 = vmatpush1.msra.mxu0 0.0
    %213 = vmatprep.subr.mxu0 0.0
    %214 = vmatpush1.msra.mxu0 0.0
    %215 = vmatprep.subr.mxu0 0.0
    %216 = vmatpush1.msra.mxu0 0.0
    %217 = vmatprep.subr.mxu0 0.0
    %218 = vmatpush1.msra.mxu0 0.0
    %219 = vmatprep.subr.mxu0 0.0
    %220 = vmatpush1.msra.mxu0 0.0
    %221 = vmatprep.subr.mxu0 0.0
    %222 = vmatpush1.msra.mxu0 0.0
    %223 = vmatprep.subr.mxu0 0.0
    %224 = vmatpush1.msra.mxu0 0.0
    %225 = vmatprep.subr.mxu0 0.0
    %226 = vmatpush1.msra.mxu0 0.0
    %227 = vmatprep.subr.mxu0 0.0
    %228 = vmatpush1.msra.mxu0 0.0
    %229 = vmatprep.subr.mxu0 0.0
    %230 = vmatpush1.msra.mxu0 0.0
    %231 = vmatprep.subr.mxu0 0.0
    %232 = vmatpush1.msra.mxu0 0.0
    %233 = vmatprep.subr.mxu0 0.0
    %234 = vmatpush1.msra.mxu0 0.0
    %235 = vmatprep.subr.mxu0 0.0
    %236 = vmatpush1.msra.mxu0 0.0
    %237 = vmatprep.subr.mxu0 0.0
    %238 = vmatpush1.msra.mxu0 0.0
    %239 = vmatprep.subr.mxu0 0.0
    %240 = vmatpush1.msra.mxu0 0.0
    %241 = vmatprep.subr.mxu0 0.0
    %242 = vmatpush1.msra.mxu0 0.0
    %243 = vmatprep.subr.mxu0 0.0
    %244 = vmatpush1.msra.mxu0 0.0
    %245 = vmatprep.subr.mxu0 0.0
    %246 = vmatpush1.msra.mxu0 0.0
    %247 = vmatprep.subr.mxu0 0.0
    %248 = vmatpush1.msra.mxu0 0.0
    %249 = vmatprep.subr.mxu0 0.0
    %250 = vmatpush1.msra.mxu0 0.0
    %251 = vmatprep.subr.mxu0 0.0
    %252 = vmatpush1.msra.mxu0 0.0
    %253 = vmatprep.subr.mxu0 0.0
    %254 = vmatpush1.msra.mxu0 0.0
    %255 = vmatprep.subr.mxu0 0.0
    %256 = vmatpush1.msra.mxu0 0.0
    %257 = vmatprep.mubr.f32.mxu0 0.0
    %258 = vmatmul.mubr.f32.gmra.mrb[0].mxu0 %v120
    %v259 = vpop.f32.mrb[0].mxu0
    %v260 = vadd.f32 0.0, %v259
    %v261 = vpop.f32.mrb[0].mxu0
    %v262 = vadd.f32 0.0, %v261
    %263 = vdwg.mxu0
    %264 = vmatprep.subr.mxu0 %v91
    %265 = vmatpush1.msra.mxu0 %v90
    %266 = vmatprep.subr.mxu0 %v99
    %267 = vmatpush1.msra.mxu0 %v98
    %268 = vmatprep.subr.mxu0 %v107
    %269 = vmatpush1.msra.mxu0 %v106
    %270 = vmatprep.subr.mxu0 %v115
    %271 = vmatpush1.msra.mxu0 %v114
    %272 = vmatprep.subr.mxu0 0.0
    %273 = vmatpush1.msra.mxu0 0.0
    %274 = vmatprep.subr.mxu0 0.0
    %275 = vmatpush1.msra.mxu0 0.0
    %276 = vmatprep.subr.mxu0 0.0
    %277 = vmatpush1.msra.mxu0 0.0
    %278 = vmatprep.subr.mxu0 0.0
    %279 = vmatpush1.msra.mxu0 0.0
    %280 = vmatprep.subr.mxu0 0.0
    %281 = vmatpush1.msra.mxu0 0.0
    %282 = vmatprep.subr.mxu0 0.0
    %283 = vmatpush1.msra.mxu0 0.0
    %284 = vmatprep.subr.mxu0 0.0
    %285 = vmatpush1.msra.mxu0 0.0
    %286 = vmatprep.subr.mxu0 0.0
    %287 = vmatpush1.msra.mxu0 0.0
    %288 = vmatprep.subr.mxu0 0.0
    %289 = vmatpush1.msra.mxu0 0.0
    %290 = vmatprep.subr.mxu0 0.0
    %291 = vmatpush1.msra.mxu0 0.0
    %292 = vmatprep.subr.mxu0 0.0
    %293 = vmatpush1.msra.mxu0 0.0
    %294 = vmatprep.subr.mxu0 0.0
    %295 = vmatpush1.msra.mxu0 0.0
    %296 = vmatprep.subr.mxu0 0.0
    %297 = vmatpush1.msra.mxu0 0.0
    %298 = vmatprep.subr.mxu0 0.0
    %299 = vmatpush1.msra.mxu0 0.0
    %300 = vmatprep.subr.mxu0 0.0
    %301 = vmatpush1.msra.mxu0 0.0
    %302 = vmatprep.subr.mxu0 0.0
    %303 = vmatpush1.msra.mxu0 0.0
    %304 = vmatprep.subr.mxu0 0.0
    %305 = vmatpush1.msra.mxu0 0.0
    %306 = vmatprep.subr.mxu0 0.0
    %307 = vmatpush1.msra.mxu0 0.0
    %308 = vmatprep.subr.mxu0 0.0
    %309 = vmatpush1.msra.mxu0 0.0
    %310 = vmatprep.subr.mxu0 0.0
    %311 = vmatpush1.msra.mxu0 0.0
    %312 = vmatprep.subr.mxu0 0.0
    %313 = vmatpush1.msra.mxu0 0.0
    %314 = vmatprep.subr.mxu0 0.0
    %315 = vmatpush1.msra.mxu0 0.0
    %316 = vmatprep.subr.mxu0 0.0
    %317 = vmatpush1.msra.mxu0 0.0
    %318 = vmatprep.subr.mxu0 0.0
    %319 = vmatpush1.msra.mxu0 0.0
    %320 = vmatprep.subr.mxu0 0.0
    %321 = vmatpush1.msra.mxu0 0.0
    %322 = vmatprep.subr.mxu0 0.0
    %323 = vmatpush1.msra.mxu0 0.0
    %324 = vmatprep.subr.mxu0 0.0
    %325 = vmatpush1.msra.mxu0 0.0
    %326 = vmatprep.subr.mxu0 0.0
    %327 = vmatpush1.msra.mxu0 0.0
    %328 = vmatprep.mubr.f32.mxu0 0.0
    %329 = vmatmul.mubr.f32.gmra.mrb[0].mxu0 %v120
    %v330 = vpop.f32.mrb[0].mxu0
    %v331 = vadd.f32 0.0, %v330
    %v332 = vpop.f32.mrb[0].mxu0
    %v333 = vadd.f32 0.0, %v332
    %334 = vdwg.mxu0
    %335 = vmatprep.subr.mxu0 %v93
    %336 = vmatpush1.msra.mxu0 %v92
    %337 = vmatprep.subr.mxu0 %v101
    %338 = vmatpush1.msra.mxu0 %v100
    %339 = vmatprep.subr.mxu0 %v109
    %340 = vmatpush1.msra.mxu0 %v108
    %341 = vmatprep.subr.mxu0 %v117
    %342 = vmatpush1.msra.mxu0 %v116
    %343 = vmatprep.subr.mxu0 0.0
    %344 = vmatpush1.msra.mxu0 0.0
    %345 = vmatprep.subr.mxu0 0.0
    %346 = vmatpush1.msra.mxu0 0.0
    %347 = vmatprep.subr.mxu0 0.0
    %348 = vmatpush1.msra.mxu0 0.0
    %349 = vmatprep.subr.mxu0 0.0
    %350 = vmatpush1.msra.mxu0 0.0
    %351 = vmatprep.subr.mxu0 0.0
    %352 = vmatpush1.msra.mxu0 0.0
    %353 = vmatprep.subr.mxu0 0.0
    %354 = vmatpush1.msra.mxu0 0.0
    %355 = vmatprep.subr.mxu0 0.0
    %356 = vmatpush1.msra.mxu0 0.0
    %357 = vmatprep.subr.mxu0 0.0
    %358 = vmatpush1.msra.mxu0 0.0
    %359 = vmatprep.subr.mxu0 0.0
    %360 = vmatpush1.msra.mxu0 0.0
    %361 = vmatprep.subr.mxu0 0.0
    %362 = vmatpush1.msra.mxu0 0.0
    %363 = vmatprep.subr.mxu0 0.0
    %364 = vmatpush1.msra.mxu0 0.0
    %365 = vmatprep.subr.mxu0 0.0
    %366 = vmatpush1.msra.mxu0 0.0
    %367 = vmatprep.subr.mxu0 0.0
    %368 = vmatpush1.msra.mxu0 0.0
    %369 = vmatprep.subr.mxu0 0.0
    %370 = vmatpush1.msra.mxu0 0.0
    %371 = vmatprep.subr.mxu0 0.0
    %372 = vmatpush1.msra.mxu0 0.0
    %373 = vmatprep.subr.mxu0 0.0
    %374 = vmatpush1.msra.mxu0 0.0
    %375 = vmatprep.subr.mxu0 0.0
    %376 = vmatpush1.msra.mxu0 0.0
    %377 = vmatprep.subr.mxu0 0.0
    %378 = vmatpush1.msra.mxu0 0.0
    %379 = vmatprep.subr.mxu0 0.0
    %380 = vmatpush1.msra.mxu0 0.0
    %381 = vmatprep.subr.mxu0 0.0
    %382 = vmatpush1.msra.mxu0 0.0
    %383 = vmatprep.subr.mxu0 0.0
    %384 = vmatpush1.msra.mxu0 0.0
    %385 = vmatprep.subr.mxu0 0.0
    %386 = vmatpush1.msra.mxu0 0.0
    %387 = vmatprep.subr.mxu0 0.0
    %388 = vmatpush1.msra.mxu0 0.0
    %389 = vmatprep.subr.mxu0 0.0
    %390 = vmatpush1.msra.mxu0 0.0
    %391 = vmatprep.subr.mxu0 0.0
    %392 = vmatpush1.msra.mxu0 0.0
    %393 = vmatprep.subr.mxu0 0.0
    %394 = vmatpush1.msra.mxu0 0.0
    %395 = vmatprep.subr.mxu0 0.0
    %396 = vmatpush1.msra.mxu0 0.0
    %397 = vmatprep.subr.mxu0 0.0
    %398 = vmatpush1.msra.mxu0 0.0
    %399 = vmatprep.mubr.f32.mxu0 0.0
    %400 = vmatmul.mubr.f32.gmra.mrb[0].mxu0 %v120
    %v401 = vpop.f32.mrb[0].mxu0
    %v402 = vadd.f32 0.0, %v401
    %v403 = vpop.f32.mrb[0].mxu0
    %v404 = vadd.f32 0.0, %v403
    %405 = vdwg.mxu0
    %vm406 = vcmask 1041408
    %v407 = vsel %vm406, %v189, 0.0
    %v408 = vrot.slane %v407, 4
    %v409 = vadd.f32 %v407, %v408
    %v410 = vrot.slane %v409, 2
    %v411 = vadd.f32 %v409, %v410
    %v412 = vrot.slane %v411, 1
    %v413 = vadd.f32 %v411, %v412
    %v414 = vsel %vm406, %v191, 0.0
    %v415 = vrot.slane %v414, 4
    %v416 = vadd.f32 %v414, %v415
    %v417 = vrot.slane %v416, 2
    %v418 = vadd.f32 %v416, %v417
    %v419 = vrot.slane %v418, 1
    %v420 = vadd.f32 %v418, %v419
    %v421 = vsel %vm406, %v260, 0.0
    %v422 = vrot.slane %v421, 4
    %v423 = vadd.f32 %v421, %v422
    %v424 = vrot.slane %v423, 2
    %v425 = vadd.f32 %v423, %v424
    %v426 = vrot.slane %v425, 1
    %v427 = vadd.f32 %v425, %v426
    %v428 = vsel %vm406, %v262, 0.0
    %v429 = vrot.slane %v428, 4
    %v430 = vadd.f32 %v428, %v429
    %v431 = vrot.slane %v430, 2
    %v432 = vadd.f32 %v430, %v431
    %v433 = vrot.slane %v432, 1
    %v434 = vadd.f32 %v432, %v433
    %v435 = vsel %vm406, %v331, 0.0
    %v436 = vrot.slane %v435, 4
    %v437 = vadd.f32 %v435, %v436
    %v438 = vrot.slane %v437, 2
    %v439 = vadd.f32 %v437, %v438
    %v440 = vrot.slane %v439, 1
    %v441 = vadd.f32 %v439, %v440
    %v442 = vsel %vm406, %v333, 0.0
    %v443 = vrot.slane %v442, 4
    %v444 = vadd.f32 %v442, %v443
    %v445 = vrot.slane %v444, 2
    %v446 = vadd.f32 %v444, %v445
    %v447 = vrot.slane %v446, 1
    %v448 = vadd.f32 %v446, %v447
    %v449 = vsel %vm406, %v402, 0.0
    %v450 = vrot.slane %v449, 4
    %v451 = vadd.f32 %v449, %v450
    %v452 = vrot.slane %v451, 2
    %v453 = vadd.f32 %v451, %v452
    %v454 = vrot.slane %v453, 1
    %v455 = vadd.f32 %v453, %v454
    %v456 = vsel %vm406, %v404, 0.0
    %v457 = vrot.slane %v456, 4
    %v458 = vadd.f32 %v456, %v457
    %v459 = vrot.slane %v458, 2
    %v460 = vadd.f32 %v458, %v459
    %v461 = vrot.slane %v460, 1
    %v462 = vadd.f32 %v460, %v461
    %v463 = vmul.f32 %v189, %v189
    %v464 = vmul.f32 %v191, %v191
    %v465 = vmul.f32 %v260, %v260
    %v466 = vmul.f32 %v262, %v262
    %v467 = vmul.f32 %v331, %v331
    %v468 = vmul.f32 %v333, %v333
    %v469 = vmul.f32 %v402, %v402
    %v470 = vmul.f32 %v404, %v404
    %v471 = vsel %vm406, %v463, 0.0
    %v472 = vrot.slane %v471, 4
    %v473 = vadd.f32 %v471, %v472
    %v474 = vrot.slane %v473, 2
    %v475 = vadd.f32 %v473, %v474
    %v476 = vrot.slane %v475, 1
    %v477 = vadd.f32 %v475, %v476
    %v478 = vsel %vm406, %v464, 0.0
    %v479 = vrot.slane %v478, 4
    %v480 = vadd.f32 %v478, %v479
    %v481 = vrot.slane %v480, 2
    %v482 = vadd.f32 %v480, %v481
    %v483 = vrot.slane %v482, 1
    %v484 = vadd.f32 %v482, %v483
    %v485 = vsel %vm406, %v465, 0.0
    %v486 = vrot.slane %v485, 4
    %v487 = vadd.f32 %v485, %v486
    %v488 = vrot.slane %v487, 2
    %v489 = vadd.f32 %v487, %v488
    %v490 = vrot.slane %v489, 1
    %v491 = vadd.f32 %v489, %v490
    %v492 = vsel %vm406, %v466, 0.0
    %v493 = vrot.slane %v492, 4
    %v494 = vadd.f32 %v492, %v493
    %v495 = vrot.slane %v494, 2
    %v496 = vadd.f32 %v494, %v495
    %v497 = vrot.slane %v496, 1
    %v498 = vadd.f32 %v496, %v497
    %v499 = vsel %vm406, %v467, 0.0
    %v500 = vrot.slane %v499, 4
    %v501 = vadd.f32 %v499, %v500
    %v502 = vrot.slane %v501, 2
    %v503 = vadd.f32 %v501, %v502
    %v504 = vrot.slane %v503, 1
    %v505 = vadd.f32 %v503, %v504
    %v506 = vsel %vm406, %v468, 0.0
    %v507 = vrot.slane %v506, 4
    %v508 = vadd.f32 %v506, %v507
    %v509 = vrot.slane %v508, 2
    %v510 = vadd.f32 %v508, %v509
    %v511 = vrot.slane %v510, 1
    %v512 = vadd.f32 %v510, %v511
    %v513 = vsel %vm406, %v469, 0.0
    %v514 = vrot.slane %v513, 4
    %v515 = vadd.f32 %v513, %v514
    %v516 = vrot.slane %v515, 2
    %v517 = vadd.f32 %v515, %v516
    %v518 = vrot.slane %v517, 1
    %v519 = vadd.f32 %v517, %v518
    %v520 = vsel %vm406, %v470, 0.0
    %v521 = vrot.slane %v520, 4
    %v522 = vadd.f32 %v520, %v521
    %v523 = vrot.slane %v522, 2
    %v524 = vadd.f32 %v522, %v523
    %v525 = vrot.slane %v524, 1
    %v526 = vadd.f32 %v524, %v525
    %v527 = vld [vmem:[%s2] sm:$0xff]
    %v528 = vld [vmem:[%s2 + $0x8] sm:$0xff]
    %v529 = vld [vmem:[%s2 + $0x10] sm:$0xff]
    %v530 = vld [vmem:[%s2 + $0x18] sm:$0xff]
    %v531 = vld [vmem:[%s2 + $0x20] sm:$0xff]
    %v532 = vld [vmem:[%s2 + $0x28] sm:$0xff]
    %v533 = vld [vmem:[%s2 + $0x30] sm:$0xff]
    %v534 = vld [vmem:[%s2 + $0x38] sm:$0xff]
    %v535 = vld [vmem:[%s2 + $0x40] sm:$0xff]
    %v536 = vld [vmem:[%s2 + $0x48] sm:$0xff]
    %v537 = vld [vmem:[%s2 + $0x50] sm:$0xff]
    %v538 = vld [vmem:[%s2 + $0x58] sm:$0xff]
    %v539 = vld [vmem:[%s2 + $0x60] sm:$0xff]
    %v540 = vld [vmem:[%s2 + $0x68] sm:$0xff]
    %v541 = vld [vmem:[%s2 + $0x70] sm:$0xff]
    %v542 = vld [vmem:[%s2 + $0x78] sm:$0xff]
    %v543 = vld [vmem:[%s2 + $0x80] sm:$0xff]
    %v544 = vld [vmem:[%s2 + $0x88] sm:$0xff]
    %v545 = vld [vmem:[%s2 + $0x90] sm:$0xff]
    %v546 = vld [vmem:[%s2 + $0x98] sm:$0xff]
    %v547 = vld [vmem:[%s2 + $0xa0] sm:$0xff]
    %v548 = vld [vmem:[%s2 + $0xa8] sm:$0xff]
    %v549 = vld [vmem:[%s2 + $0xb0] sm:$0xff]
    %v550 = vld [vmem:[%s2 + $0xb8] sm:$0xff]
    %v551 = vld [vmem:[%s2 + $0xc0] sm:$0xff]
    %v552 = vld [vmem:[%s2 + $0xc8] sm:$0xff]
    %v553 = vld [vmem:[%s2 + $0xd0] sm:$0xff]
    %v554 = vld [vmem:[%s2 + $0xd8] sm:$0xff]
    %v555 = vld [vmem:[%s2 + $0xe0] sm:$0xff]
    %v556 = vld [vmem:[%s2 + $0xe8] sm:$0xff]
    %v557 = vld [vmem:[%s2 + $0xf0] sm:$0xff]
    %v558 = vld [vmem:[%s2 + $0xf8] sm:$0xff]
    %v559 = vld [vmem:[%s2 + $0x100] sm:$0xff]
    %v560 = vld [vmem:[%s2 + $0x108] sm:$0xff]
    %v561 = vld [vmem:[%s2 + $0x110] sm:$0xff]
    %v562 = vld [vmem:[%s2 + $0x118] sm:$0xff]
    %v563 = vld [vmem:[%s2 + $0x120] sm:$0xff]
    %v564 = vld [vmem:[%s2 + $0x128] sm:$0xff]
    %v565 = vld [vmem:[%s2 + $0x130] sm:$0xff]
    %v566 = vld [vmem:[%s2 + $0x138] sm:$0xff]
    %v567 = vld [vmem:[%s2 + $0x140] sm:$0xff]
    %v568 = vld [vmem:[%s2 + $0x148] sm:$0xff]
    %v569 = vld [vmem:[%s2 + $0x150] sm:$0xff]
    %v570 = vld [vmem:[%s2 + $0x158] sm:$0xff]
    %v571 = vld [vmem:[%s2 + $0x160] sm:$0xff]
    %v572 = vld [vmem:[%s2 + $0x168] sm:$0xff]
    %v573 = vld [vmem:[%s2 + $0x170] sm:$0xff]
    %v574 = vld [vmem:[%s2 + $0x178] sm:$0xff]
    %v575 = vld [vmem:[%s2 + $0x180] sm:$0xff]
    %v576 = vld [vmem:[%s2 + $0x188] sm:$0xff]
    %v577 = vld [vmem:[%s2 + $0x190] sm:$0xff]
    %v578 = vld [vmem:[%s2 + $0x198] sm:$0xff]
    %v579 = vld [vmem:[%s2 + $0x1a0] sm:$0xff]
    %v580 = vld [vmem:[%s2 + $0x1a8] sm:$0xff]
    %v581 = vld [vmem:[%s2 + $0x1b0] sm:$0xff]
    %v582 = vld [vmem:[%s2 + $0x1b8] sm:$0xff]
    %v583 = vld [vmem:[%s2 + $0x1c0] sm:$0xff]
    %v584 = vld [vmem:[%s2 + $0x1c8] sm:$0xff]
    %v585 = vld [vmem:[%s2 + $0x1d0] sm:$0xff]
    %v586 = vld [vmem:[%s2 + $0x1d8] sm:$0xff]
    %v587 = vld [vmem:[%s2 + $0x1e0] sm:$0xff]
    %v588 = vld [vmem:[%s2 + $0x1e8] sm:$0xff]
    %v589 = vld [vmem:[%s2 + $0x1f0] sm:$0xff]
    %v590 = vld [vmem:[%s2 + $0x1f8] sm:$0xff]
    %v591 = vld [vmem:[%s2 + $0x200] sm:$0xff]
    %v592 = vld [vmem:[%s2 + $0x208] sm:$0xff]
    %v593 = vld [vmem:[%s2 + $0x210] sm:$0xff]
    %v594 = vld [vmem:[%s2 + $0x218] sm:$0xff]
    %v595 = vld [vmem:[%s2 + $0x220] sm:$0xff]
    %v596 = vld [vmem:[%s2 + $0x228] sm:$0xff]
    %v597 = vld [vmem:[%s2 + $0x230] sm:$0xff]
    %v598 = vld [vmem:[%s2 + $0x238] sm:$0xff]
    %v599 = vld [vmem:[%s2 + $0x240] sm:$0xff]
    %v600 = vld [vmem:[%s2 + $0x248] sm:$0xff]
    %v601 = vld [vmem:[%s2 + $0x250] sm:$0xff]
    %v602 = vld [vmem:[%s2 + $0x258] sm:$0xff]
    %v603 = vld [vmem:[%s2 + $0x260] sm:$0xff]
    %v604 = vld [vmem:[%s2 + $0x268] sm:$0xff]
    %v605 = vld [vmem:[%s2 + $0x270] sm:$0xff]
    %v606 = vld [vmem:[%s2 + $0x278] sm:$0xff]
    %v607 = vld [vmem:[%s2 + $0x280] sm:$0xff]
    %v608 = vld [vmem:[%s2 + $0x288] sm:$0xff]
    %v609 = vld [vmem:[%s2 + $0x290] sm:$0xff]
    %v610 = vld [vmem:[%s2 + $0x298] sm:$0xff]
    %v611 = vld [vmem:[%s2 + $0x2a0] sm:$0xff]
    %v612 = vld [vmem:[%s2 + $0x2a8] sm:$0xff]
    %v613 = vld [vmem:[%s2 + $0x2b0] sm:$0xff]
    %v614 = vld [vmem:[%s2 + $0x2b8] sm:$0xff]
    %v615 = vld [vmem:[%s2 + $0x2c0] sm:$0xff]
    %v616 = vld [vmem:[%s2 + $0x2c8] sm:$0xff]
    %v617 = vld [vmem:[%s2 + $0x2d0] sm:$0xff]
    %v618 = vld [vmem:[%s2 + $0x2d8] sm:$0xff]
    %v619 = vld [vmem:[%s2 + $0x2e0] sm:$0xff]
    %v620 = vld [vmem:[%s2 + $0x2e8] sm:$0xff]
    %v621 = vld [vmem:[%s2 + $0x2f0] sm:$0xff]
    %v622 = vld [vmem:[%s2 + $0x2f8] sm:$0xff]
    %v623 = vld [vmem:[%s2 + $0x300] sm:$0xff]
    %v624 = vld [vmem:[%s2 + $0x308] sm:$0xff]
    %v625 = vld [vmem:[%s2 + $0x310] sm:$0xff]
    %v626 = vld [vmem:[%s2 + $0x318] sm:$0xff]
    %v627 = vld [vmem:[%s2 + $0x320] sm:$0xff]
    %v628 = vld [vmem:[%s2 + $0x328] sm:$0xff]
    %v629 = vld [vmem:[%s2 + $0x330] sm:$0xff]
    %v630 = vld [vmem:[%s2 + $0x338] sm:$0xff]
    %v631 = vld [vmem:[%s2 + $0x340] sm:$0xff]
    %v632 = vld [vmem:[%s2 + $0x348] sm:$0xff]
    %v633 = vld [vmem:[%s2 + $0x350] sm:$0xff]
    %v634 = vld [vmem:[%s2 + $0x358] sm:$0xff]
    %v635 = vld [vmem:[%s2 + $0x360] sm:$0xff]
    %v636 = vld [vmem:[%s2 + $0x368] sm:$0xff]
    %v637 = vld [vmem:[%s2 + $0x370] sm:$0xff]
    %v638 = vld [vmem:[%s2 + $0x378] sm:$0xff]
    %v639 = vld [vmem:[%s2 + $0x380] sm:$0xff]
    %v640 = vld [vmem:[%s2 + $0x388] sm:$0xff]
    %v641 = vld [vmem:[%s2 + $0x390] sm:$0xff]
    %v642 = vld [vmem:[%s2 + $0x398] sm:$0xff]
    %v643 = vld [vmem:[%s2 + $0x3a0] sm:$0xff]
    %v644 = vld [vmem:[%s2 + $0x3a8] sm:$0xff]
    %v645 = vld [vmem:[%s2 + $0x3b0] sm:$0xff]
    %v646 = vld [vmem:[%s2 + $0x3b8] sm:$0xff]
    %v647 = vld [vmem:[%s2 + $0x3c0] sm:$0xff]
    %v648 = vld [vmem:[%s2 + $0x3c8] sm:$0xff]
    %v649 = vld [vmem:[%s2 + $0x3d0] sm:$0xff]
    %v650 = vld [vmem:[%s2 + $0x3d8] sm:$0xff]
    %v651 = vld [vmem:[%s2 + $0x3e0] sm:$0xff]
    %v652 = vld [vmem:[%s2 + $0x3e8] sm:$0xff]
    %v653 = vld [vmem:[%s2 + $0x3f0] sm:$0xff]
    %v654 = vld [vmem:[%s2 + $0x3f8] sm:$0xff]
    %655 = vmatprep.subr.mxu0 0.0
    %656 = vmatpush1.msra.mxu0 %v527
    %657 = vmatprep.subr.mxu0 0.0
    %658 = vmatpush1.msra.mxu0 %v528
    %659 = vmatprep.subr.mxu0 0.0
    %660 = vmatpush1.msra.mxu0 %v529
    %661 = vmatprep.subr.mxu0 0.0
    %662 = vmatpush1.msra.mxu0 %v530
    %663 = vmatprep.subr.mxu0 0.0
    %664 = vmatpush1.msra.mxu0 %v531
    %665 = vmatprep.subr.mxu0 0.0
    %666 = vmatpush1.msra.mxu0 %v532
    %667 = vmatprep.subr.mxu0 0.0
    %668 = vmatpush1.msra.mxu0 %v533
    %669 = vmatprep.subr.mxu0 0.0
    %670 = vmatpush1.msra.mxu0 %v534
    %671 = vmatprep.subr.mxu0 0.0
    %672 = vmatpush1.msra.mxu0 %v535
    %673 = vmatprep.subr.mxu0 0.0
    %674 = vmatpush1.msra.mxu0 %v536
    %675 = vmatprep.subr.mxu0 0.0
    %676 = vmatpush1.msra.mxu0 %v537
    %677 = vmatprep.subr.mxu0 0.0
    %678 = vmatpush1.msra.mxu0 %v538
    %679 = vmatprep.subr.mxu0 0.0
    %680 = vmatpush1.msra.mxu0 %v539
    %681 = vmatprep.subr.mxu0 0.0
    %682 = vmatpush1.msra.mxu0 %v540
    %683 = vmatprep.subr.mxu0 0.0
    %684 = vmatpush1.msra.mxu0 %v541
    %685 = vmatprep.subr.mxu0 0.0
    %686 = vmatpush1.msra.mxu0 %v542
    %687 = vmatprep.subr.mxu0 0.0
    %688 = vmatpush1.msra.mxu0 %v543
    %689 = vmatprep.subr.mxu0 0.0
    %690 = vmatpush1.msra.mxu0 %v544
    %691 = vmatprep.subr.mxu0 0.0
    %692 = vmatpush1.msra.mxu0 %v545
    %693 = vmatprep.subr.mxu0 0.0
    %694 = vmatpush1.msra.mxu0 %v546
    %695 = vmatprep.subr.mxu0 0.0
    %696 = vmatpush1.msra.mxu0 %v547
    %697 = vmatprep.subr.mxu0 0.0
    %698 = vmatpush1.msra.mxu0 %v548
    %699 = vmatprep.subr.mxu0 0.0
    %700 = vmatpush1.msra.mxu0 %v549
    %701 = vmatprep.subr.mxu0 0.0
    %702 = vmatpush1.msra.mxu0 %v550
    %703 = vmatprep.subr.mxu0 0.0
    %704 = vmatpush1.msra.mxu0 %v551
    %705 = vmatprep.subr.mxu0 0.0
    %706 = vmatpush1.msra.mxu0 %v552
    %707 = vmatprep.subr.mxu0 0.0
    %708 = vmatpush1.msra.mxu0 %v553
    %709 = vmatprep.subr.mxu0 0.0
    %710 = vmatpush1.msra.mxu0 %v554
    %711 = vmatprep.subr.mxu0 0.0
    %712 = vmatpush1.msra.mxu0 %v555
    %713 = vmatprep.subr.mxu0 0.0
    %714 = vmatpush1.msra.mxu0 %v556
    %715 = vmatprep.subr.mxu0 0.0
    %716 = vmatpush1.msra.mxu0 %v557
    %717 = vmatprep.subr.mxu0 0.0
    %718 = vmatpush1.msra.mxu0 %v558
    %719 = vmatprep.mubr.f32.mxu0 %v420
    %720 = vmatmul.mubr.f32.gmra.mrb[0].mxu0 %v413
    %v721 = vpop.f32.mrb[0].mxu0
    %v722 = vadd.f32 0.0, %v721
    %v723 = vpop.f32.mrb[0].mxu0
    %724 = vdwg.mxu0
    %725 = vmatprep.subr.mxu0 0.0
    %726 = vmatpush1.msra.mxu0 %v559
    %727 = vmatprep.subr.mxu0 0.0
    %728 = vmatpush1.msra.mxu0 %v560
    %729 = vmatprep.subr.mxu0 0.0
    %730 = vmatpush1.msra.mxu0 %v561
    %731 = vmatprep.subr.mxu0 0.0
    %732 = vmatpush1.msra.mxu0 %v562
    %733 = vmatprep.subr.mxu0 0.0
    %734 = vmatpush1.msra.mxu0 %v563
    %735 = vmatprep.subr.mxu0 0.0
    %736 = vmatpush1.msra.mxu0 %v564
    %737 = vmatprep.subr.mxu0 0.0
    %738 = vmatpush1.msra.mxu0 %v565
    %739 = vmatprep.subr.mxu0 0.0
    %740 = vmatpush1.msra.mxu0 %v566
    %741 = vmatprep.subr.mxu0 0.0
    %742 = vmatpush1.msra.mxu0 %v567
    %743 = vmatprep.subr.mxu0 0.0
    %744 = vmatpush1.msra.mxu0 %v568
    %745 = vmatprep.subr.mxu0 0.0
    %746 = vmatpush1.msra.mxu0 %v569
    %747 = vmatprep.subr.mxu0 0.0
    %748 = vmatpush1.msra.mxu0 %v570
    %749 = vmatprep.subr.mxu0 0.0
    %750 = vmatpush1.msra.mxu0 %v571
    %751 = vmatprep.subr.mxu0 0.0
    %752 = vmatpush1.msra.mxu0 %v572
    %753 = vmatprep.subr.mxu0 0.0
    %754 = vmatpush1.msra.mxu0 %v573
    %755 = vmatprep.subr.mxu0 0.0
    %756 = vmatpush1.msra.mxu0 %v574
    %757 = vmatprep.subr.mxu0 0.0
    %758 = vmatpush1.msra.mxu0 %v575
    %759 = vmatprep.subr.mxu0 0.0
    %760 = vmatpush1.msra.mxu0 %v576
    %761 = vmatprep.subr.mxu0 0.0
    %762 = vmatpush1.msra.mxu0 %v577
    %763 = vmatprep.subr.mxu0 0.0
    %764 = vmatpush1.msra.mxu0 %v578
    %765 = vmatprep.subr.mxu0 0.0
    %766 = vmatpush1.msra.mxu0 %v579
    %767 = vmatprep.subr.mxu0 0.0
    %768 = vmatpush1.msra.mxu0 %v580
    %769 = vmatprep.subr.mxu0 0.0
    %770 = vmatpush1.msra.mxu0 %v581
    %771 = vmatprep.subr.mxu0 0.0
    %772 = vmatpush1.msra.mxu0 %v582
    %773 = vmatprep.subr.mxu0 0.0
    %774 = vmatpush1.msra.mxu0 %v583
    %775 = vmatprep.subr.mxu0 0.0
    %776 = vmatpush1.msra.mxu0 %v584
    %777 = vmatprep.subr.mxu0 0.0
    %778 = vmatpush1.msra.mxu0 %v585
    %779 = vmatprep.subr.mxu0 0.0
    %780 = vmatpush1.msra.mxu0 %v586
    %781 = vmatprep.subr.mxu0 0.0
    %782 = vmatpush1.msra.mxu0 %v587
    %783 = vmatprep.subr.mxu0 0.0
    %784 = vmatpush1.msra.mxu0 %v588
    %785 = vmatprep.subr.mxu0 0.0
    %786 = vmatpush1.msra.mxu0 %v589
    %787 = vmatprep.subr.mxu0 0.0
    %788 = vmatpush1.msra.mxu0 %v590
    %789 = vmatprep.mubr.f32.mxu0 %v434
    %790 = vmatmul.mubr.f32.gmra.mrb[0].mxu0 %v427
    %v791 = vpop.f32.mrb[0].mxu0
    %v792 = vadd.f32 %v722, %v791
    %v793 = vpop.f32.mrb[0].mxu0
    %794 = vdwg.mxu0
    %795 = vmatprep.subr.mxu0 0.0
    %796 = vmatpush1.msra.mxu0 %v591
    %797 = vmatprep.subr.mxu0 0.0
    %798 = vmatpush1.msra.mxu0 %v592
    %799 = vmatprep.subr.mxu0 0.0
    %800 = vmatpush1.msra.mxu0 %v593
    %801 = vmatprep.subr.mxu0 0.0
    %802 = vmatpush1.msra.mxu0 %v594
    %803 = vmatprep.subr.mxu0 0.0
    %804 = vmatpush1.msra.mxu0 %v595
    %805 = vmatprep.subr.mxu0 0.0
    %806 = vmatpush1.msra.mxu0 %v596
    %807 = vmatprep.subr.mxu0 0.0
    %808 = vmatpush1.msra.mxu0 %v597
    %809 = vmatprep.subr.mxu0 0.0
    %810 = vmatpush1.msra.mxu0 %v598
    %811 = vmatprep.subr.mxu0 0.0
    %812 = vmatpush1.msra.mxu0 %v599
    %813 = vmatprep.subr.mxu0 0.0
    %814 = vmatpush1.msra.mxu0 %v600
    %815 = vmatprep.subr.mxu0 0.0
    %816 = vmatpush1.msra.mxu0 %v601
    %817 = vmatprep.subr.mxu0 0.0
    %818 = vmatpush1.msra.mxu0 %v602
    %819 = vmatprep.subr.mxu0 0.0
    %820 = vmatpush1.msra.mxu0 %v603
    %821 = vmatprep.subr.mxu0 0.0
    %822 = vmatpush1.msra.mxu0 %v604
    %823 = vmatprep.subr.mxu0 0.0
    %824 = vmatpush1.msra.mxu0 %v605
    %825 = vmatprep.subr.mxu0 0.0
    %826 = vmatpush1.msra.mxu0 %v606
    %827 = vmatprep.subr.mxu0 0.0
    %828 = vmatpush1.msra.mxu0 %v607
    %829 = vmatprep.subr.mxu0 0.0
    %830 = vmatpush1.msra.mxu0 %v608
    %831 = vmatprep.subr.mxu0 0.0
    %832 = vmatpush1.msra.mxu0 %v609
    %833 = vmatprep.subr.mxu0 0.0
    %834 = vmatpush1.msra.mxu0 %v610
    %835 = vmatprep.subr.mxu0 0.0
    %836 = vmatpush1.msra.mxu0 %v611
    %837 = vmatprep.subr.mxu0 0.0
    %838 = vmatpush1.msra.mxu0 %v612
    %839 = vmatprep.subr.mxu0 0.0
    %840 = vmatpush1.msra.mxu0 %v613
    %841 = vmatprep.subr.mxu0 0.0
    %842 = vmatpush1.msra.mxu0 %v614
    %843 = vmatprep.subr.mxu0 0.0
    %844 = vmatpush1.msra.mxu0 %v615
    %845 = vmatprep.subr.mxu0 0.0
    %846 = vmatpush1.msra.mxu0 %v616
    %847 = vmatprep.subr.mxu0 0.0
    %848 = vmatpush1.msra.mxu0 %v617
    %849 = vmatprep.subr.mxu0 0.0
    %850 = vmatpush1.msra.mxu0 %v618
    %851 = vmatprep.subr.mxu0 0.0
    %852 = vmatpush1.msra.mxu0 %v619
    %853 = vmatprep.subr.mxu0 0.0
    %854 = vmatpush1.msra.mxu0 %v620
    %855 = vmatprep.subr.mxu0 0.0
    %856 = vmatpush1.msra.mxu0 %v621
    %857 = vmatprep.subr.mxu0 0.0
    %858 = vmatpush1.msra.mxu0 %v622
    %859 = vmatprep.mubr.f32.mxu0 %v448
    %860 = vmatmul.mubr.f32.gmra.mrb[0].mxu0 %v441
    %v861 = vpop.f32.mrb[0].mxu0
    %v862 = vadd.f32 %v792, %v861
    %v863 = vpop.f32.mrb[0].mxu0
    %864 = vdwg.mxu0
    %865 = vmatprep.subr.mxu0 0.0
    %866 = vmatpush1.msra.mxu0 %v623
    %867 = vmatprep.subr.mxu0 0.0
    %868 = vmatpush1.msra.mxu0 %v624
    %869 = vmatprep.subr.mxu0 0.0
    %870 = vmatpush1.msra.mxu0 %v625
    %871 = vmatprep.subr.mxu0 0.0
    %872 = vmatpush1.msra.mxu0 %v626
    %873 = vmatprep.subr.mxu0 0.0
    %874 = vmatpush1.msra.mxu0 %v627
    %875 = vmatprep.subr.mxu0 0.0
    %876 = vmatpush1.msra.mxu0 %v628
    %877 = vmatprep.subr.mxu0 0.0
    %878 = vmatpush1.msra.mxu0 %v629
    %879 = vmatprep.subr.mxu0 0.0
    %880 = vmatpush1.msra.mxu0 %v630
    %881 = vmatprep.subr.mxu0 0.0
    %882 = vmatpush1.msra.mxu0 %v631
    %883 = vmatprep.subr.mxu0 0.0
    %884 = vmatpush1.msra.mxu0 %v632
    %885 = vmatprep.subr.mxu0 0.0
    %886 = vmatpush1.msra.mxu0 %v633
    %887 = vmatprep.subr.mxu0 0.0
    %888 = vmatpush1.msra.mxu0 %v634
    %889 = vmatprep.subr.mxu0 0.0
    %890 = vmatpush1.msra.mxu0 %v635
    %891 = vmatprep.subr.mxu0 0.0
    %892 = vmatpush1.msra.mxu0 %v636
    %893 = vmatprep.subr.mxu0 0.0
    %894 = vmatpush1.msra.mxu0 %v637
    %895 = vmatprep.subr.mxu0 0.0
    %896 = vmatpush1.msra.mxu0 %v638
    %897 = vmatprep.subr.mxu0 0.0
    %898 = vmatpush1.msra.mxu0 %v639
    %899 = vmatprep.subr.mxu0 0.0
    %900 = vmatpush1.msra.mxu0 %v640
    %901 = vmatprep.subr.mxu0 0.0
    %902 = vmatpush1.msra.mxu0 %v641
    %903 = vmatprep.subr.mxu0 0.0
    %904 = vmatpush1.msra.mxu0 %v642
    %905 = vmatprep.subr.mxu0 0.0
    %906 = vmatpush1.msra.mxu0 %v643
    %907 = vmatprep.subr.mxu0 0.0
    %908 = vmatpush1.msra.mxu0 %v644
    %909 = vmatprep.subr.mxu0 0.0
    %910 = vmatpush1.msra.mxu0 %v645
    %911 = vmatprep.subr.mxu0 0.0
    %912 = vmatpush1.msra.mxu0 %v646
    %913 = vmatprep.subr.mxu0 0.0
    %914 = vmatpush1.msra.mxu0 %v647
    %915 = vmatprep.subr.mxu0 0.0
    %916 = vmatpush1.msra.mxu0 %v648
    %917 = vmatprep.subr.mxu0 0.0
    %918 = vmatpush1.msra.mxu0 %v649
    %919 = vmatprep.subr.mxu0 0.0
    %920 = vmatpush1.msra.mxu0 %v650
    %921 = vmatprep.subr.mxu0 0.0
    %922 = vmatpush1.msra.mxu0 %v651
    %923 = vmatprep.subr.mxu0 0.0
    %924 = vmatpush1.msra.mxu0 %v652
    %925 = vmatprep.subr.mxu0 0.0
    %926 = vmatpush1.msra.mxu0 %v653
    %927 = vmatprep.subr.mxu0 0.0
    %928 = vmatpush1.msra.mxu0 %v654
    %929 = vmatprep.mubr.f32.mxu0 %v462
    %930 = vmatmul.mubr.f32.gmra.mrb[0].mxu0 %v455
    %v931 = vpop.f32.mrb[0].mxu0
    %v932 = vadd.f32 %v862, %v931
    %v933 = vpop.f32.mrb[0].mxu0
    %934 = vdwg.mxu0
    %935 = vmatprep.subr.mxu0 0.0
    %936 = vmatpush1.msra.mxu0 %v527
    %937 = vmatprep.subr.mxu0 0.0
    %938 = vmatpush1.msra.mxu0 %v528
    %939 = vmatprep.subr.mxu0 0.0
    %940 = vmatpush1.msra.mxu0 %v529
    %941 = vmatprep.subr.mxu0 0.0
    %942 = vmatpush1.msra.mxu0 %v530
    %943 = vmatprep.subr.mxu0 0.0
    %944 = vmatpush1.msra.mxu0 %v531
    %945 = vmatprep.subr.mxu0 0.0
    %946 = vmatpush1.msra.mxu0 %v532
    %947 = vmatprep.subr.mxu0 0.0
    %948 = vmatpush1.msra.mxu0 %v533
    %949 = vmatprep.subr.mxu0 0.0
    %950 = vmatpush1.msra.mxu0 %v534
    %951 = vmatprep.subr.mxu0 0.0
    %952 = vmatpush1.msra.mxu0 %v535
    %953 = vmatprep.subr.mxu0 0.0
    %954 = vmatpush1.msra.mxu0 %v536
    %955 = vmatprep.subr.mxu0 0.0
    %956 = vmatpush1.msra.mxu0 %v537
    %957 = vmatprep.subr.mxu0 0.0
    %958 = vmatpush1.msra.mxu0 %v538
    %959 = vmatprep.subr.mxu0 0.0
    %960 = vmatpush1.msra.mxu0 %v539
    %961 = vmatprep.subr.mxu0 0.0
    %962 = vmatpush1.msra.mxu0 %v540
    %963 = vmatprep.subr.mxu0 0.0
    %964 = vmatpush1.msra.mxu0 %v541
    %965 = vmatprep.subr.mxu0 0.0
    %966 = vmatpush1.msra.mxu0 %v542
    %967 = vmatprep.subr.mxu0 0.0
    %968 = vmatpush1.msra.mxu0 %v543
    %969 = vmatprep.subr.mxu0 0.0
    %970 = vmatpush1.msra.mxu0 %v544
    %971 = vmatprep.subr.mxu0 0.0
    %972 = vmatpush1.msra.mxu0 %v545
    %973 = vmatprep.subr.mxu0 0.0
    %974 = vmatpush1.msra.mxu0 %v546
    %975 = vmatprep.subr.mxu0 0.0
    %976 = vmatpush1.msra.mxu0 %v547
    %977 = vmatprep.subr.mxu0 0.0
    %978 = vmatpush1.msra.mxu0 %v548
    %979 = vmatprep.subr.mxu0 0.0
    %980 = vmatpush1.msra.mxu0 %v549
    %981 = vmatprep.subr.mxu0 0.0
    %982 = vmatpush1.msra.mxu0 %v550
    %983 = vmatprep.subr.mxu0 0.0
    %984 = vmatpush1.msra.mxu0 %v551
    %985 = vmatprep.subr.mxu0 0.0
    %986 = vmatpush1.msra.mxu0 %v552
    %987 = vmatprep.subr.mxu0 0.0
    %988 = vmatpush1.msra.mxu0 %v553
    %989 = vmatprep.subr.mxu0 0.0
    %990 = vmatpush1.msra.mxu0 %v554
    %991 = vmatprep.subr.mxu0 0.0
    %992 = vmatpush1.msra.mxu0 %v555
    %993 = vmatprep.subr.mxu0 0.0
    %994 = vmatpush1.msra.mxu0 %v556
    %995 = vmatprep.subr.mxu0 0.0
    %996 = vmatpush1.msra.mxu0 %v557
    %997 = vmatprep.subr.mxu0 0.0
    %998 = vmatpush1.msra.mxu0 %v558
    %999 = vmatprep.mubr.f32.mxu0 %v484
    %1000 = vmatmul.mubr.f32.gmra.mrb[0].mxu0 %v477
    %v1001 = vpop.f32.mrb[0].mxu0
    %v1002 = vadd.f32 0.0, %v1001
    %v1003 = vpop.f32.mrb[0].mxu0
    %1004 = vdwg.mxu0
    %1005 = vmatprep.subr.mxu0 0.0
    %1006 = vmatpush1.msra.mxu0 %v559
    %1007 = vmatprep.subr.mxu0 0.0
    %1008 = vmatpush1.msra.mxu0 %v560
    %1009 = vmatprep.subr.mxu0 0.0
    %1010 = vmatpush1.msra.mxu0 %v561
    %1011 = vmatprep.subr.mxu0 0.0
    %1012 = vmatpush1.msra.mxu0 %v562
    %1013 = vmatprep.subr.mxu0 0.0
    %1014 = vmatpush1.msra.mxu0 %v563
    %1015 = vmatprep.subr.mxu0 0.0
    %1016 = vmatpush1.msra.mxu0 %v564
    %1017 = vmatprep.subr.mxu0 0.0
    %1018 = vmatpush1.msra.mxu0 %v565
    %1019 = vmatprep.subr.mxu0 0.0
    %1020 = vmatpush1.msra.mxu0 %v566
    %1021 = vmatprep.subr.mxu0 0.0
    %1022 = vmatpush1.msra.mxu0 %v567
    %1023 = vmatprep.subr.mxu0 0.0
    %1024 = vmatpush1.msra.mxu0 %v568
    %1025 = vmatprep.subr.mxu0 0.0
    %1026 = vmatpush1.msra.mxu0 %v569
    %1027 = vmatprep.subr.mxu0 0.0
    %1028 = vmatpush1.msra.mxu0 %v570
    %1029 = vmatprep.subr.mxu0 0.0
    %1030 = vmatpush1.msra.mxu0 %v571
    %1031 = vmatprep.subr.mxu0 0.0
    %1032 = vmatpush1.msra.mxu0 %v572
    %1033 = vmatprep.subr.mxu0 0.0
    %1034 = vmatpush1.msra.mxu0 %v573
    %1035 = vmatprep.subr.mxu0 0.0
    %1036 = vmatpush1.msra.mxu0 %v574
    %1037 = vmatprep.subr.mxu0 0.0
    %1038 = vmatpush1.msra.mxu0 %v575
    %1039 = vmatprep.subr.mxu0 0.0
    %1040 = vmatpush1.msra.mxu0 %v576
    %1041 = vmatprep.subr.mxu0 0.0
    %1042 = vmatpush1.msra.mxu0 %v577
    %1043 = vmatprep.subr.mxu0 0.0
    %1044 = vmatpush1.msra.mxu0 %v578
    %1045 = vmatprep.subr.mxu0 0.0
    %1046 = vmatpush1.msra.mxu0 %v579
    %1047 = vmatprep.subr.mxu0 0.0
    %1048 = vmatpush1.msra.mxu0 %v580
    %1049 = vmatprep.subr.mxu0 0.0
    %1050 = vmatpush1.msra.mxu0 %v581
    %1051 = vmatprep.subr.mxu0 0.0
    %1052 = vmatpush1.msra.mxu0 %v582
    %1053 = vmatprep.subr.mxu0 0.0
    %1054 = vmatpush1.msra.mxu0 %v583
    %1055 = vmatprep.subr.mxu0 0.0
    %1056 = vmatpush1.msra.mxu0 %v584
    %1057 = vmatprep.subr.mxu0 0.0
    %1058 = vmatpush1.msra.mxu0 %v585
    %1059 = vmatprep.subr.mxu0 0.0
    %1060 = vmatpush1.msra.mxu0 %v586
    %1061 = vmatprep.subr.mxu0 0.0
    %1062 = vmatpush1.msra.mxu0 %v587
    %1063 = vmatprep.subr.mxu0 0.0
    %1064 = vmatpush1.msra.mxu0 %v588
    %1065 = vmatprep.subr.mxu0 0.0
    %1066 = vmatpush1.msra.mxu0 %v589
    %1067 = vmatprep.subr.mxu0 0.0
    %1068 = vmatpush1.msra.mxu0 %v590
    %1069 = vmatprep.mubr.f32.mxu0 %v498
    %1070 = vmatmul.mubr.f32.gmra.mrb[0].mxu0 %v491
    %v1071 = vpop.f32.mrb[0].mxu0
    %v1072 = vadd.f32 %v1002, %v1071
    %v1073 = vpop.f32.mrb[0].mxu0
    %1074 = vdwg.mxu0
    %1075 = vmatprep.subr.mxu0 0.0
    %1076 = vmatpush1.msra.mxu0 %v591
    %1077 = vmatprep.subr.mxu0 0.0
    %1078 = vmatpush1.msra.mxu0 %v592
    %1079 = vmatprep.subr.mxu0 0.0
    %1080 = vmatpush1.msra.mxu0 %v593
    %1081 = vmatprep.subr.mxu0 0.0
    %1082 = vmatpush1.msra.mxu0 %v594
    %1083 = vmatprep.subr.mxu0 0.0
    %1084 = vmatpush1.msra.mxu0 %v595
    %1085 = vmatprep.subr.mxu0 0.0
    %1086 = vmatpush1.msra.mxu0 %v596
    %1087 = vmatprep.subr.mxu0 0.0
    %1088 = vmatpush1.msra.mxu0 %v597
    %1089 = vmatprep.subr.mxu0 0.0
    %1090 = vmatpush1.msra.mxu0 %v598
    %1091 = vmatprep.subr.mxu0 0.0
    %1092 = vmatpush1.msra.mxu0 %v599
    %1093 = vmatprep.subr.mxu0 0.0
    %1094 = vmatpush1.msra.mxu0 %v600
    %1095 = vmatprep.subr.mxu0 0.0
    %1096 = vmatpush1.msra.mxu0 %v601
    %1097 = vmatprep.subr.mxu0 0.0
    %1098 = vmatpush1.msra.mxu0 %v602
    %1099 = vmatprep.subr.mxu0 0.0
    %1100 = vmatpush1.msra.mxu0 %v603
    %1101 = vmatprep.subr.mxu0 0.0
    %1102 = vmatpush1.msra.mxu0 %v604
    %1103 = vmatprep.subr.mxu0 0.0
    %1104 = vmatpush1.msra.mxu0 %v605
    %1105 = vmatprep.subr.mxu0 0.0
    %1106 = vmatpush1.msra.mxu0 %v606
    %1107 = vmatprep.subr.mxu0 0.0
    %1108 = vmatpush1.msra.mxu0 %v607
    %1109 = vmatprep.subr.mxu0 0.0
    %1110 = vmatpush1.msra.mxu0 %v608
    %1111 = vmatprep.subr.mxu0 0.0
    %1112 = vmatpush1.msra.mxu0 %v609
    %1113 = vmatprep.subr.mxu0 0.0
    %1114 = vmatpush1.msra.mxu0 %v610
    %1115 = vmatprep.subr.mxu0 0.0
    %1116 = vmatpush1.msra.mxu0 %v611
    %1117 = vmatprep.subr.mxu0 0.0
    %1118 = vmatpush1.msra.mxu0 %v612
    %1119 = vmatprep.subr.mxu0 0.0
    %1120 = vmatpush1.msra.mxu0 %v613
    %1121 = vmatprep.subr.mxu0 0.0
    %1122 = vmatpush1.msra.mxu0 %v614
    %1123 = vmatprep.subr.mxu0 0.0
    %1124 = vmatpush1.msra.mxu0 %v615
    %1125 = vmatprep.subr.mxu0 0.0
    %1126 = vmatpush1.msra.mxu0 %v616
    %1127 = vmatprep.subr.mxu0 0.0
    %1128 = vmatpush1.msra.mxu0 %v617
    %1129 = vmatprep.subr.mxu0 0.0
    %1130 = vmatpush1.msra.mxu0 %v618
    %1131 = vmatprep.subr.mxu0 0.0
    %1132 = vmatpush1.msra.mxu0 %v619
    %1133 = vmatprep.subr.mxu0 0.0
    %1134 = vmatpush1.msra.mxu0 %v620
    %1135 = vmatprep.subr.mxu0 0.0
    %1136 = vmatpush1.msra.mxu0 %v621
    %1137 = vmatprep.subr.mxu0 0.0
    %1138 = vmatpush1.msra.mxu0 %v622
    %1139 = vmatprep.mubr.f32.mxu0 %v512
    %1140 = vmatmul.mubr.f32.gmra.mrb[0].mxu0 %v505
    %v1141 = vpop.f32.mrb[0].mxu0
    %v1142 = vadd.f32 %v1072, %v1141
    %v1143 = vpop.f32.mrb[0].mxu0
    %1144 = vdwg.mxu0
    %1145 = vmatprep.subr.mxu0 0.0
    %1146 = vmatpush1.msra.mxu0 %v623
    %1147 = vmatprep.subr.mxu0 0.0
    %1148 = vmatpush1.msra.mxu0 %v624
    %1149 = vmatprep.subr.mxu0 0.0
    %1150 = vmatpush1.msra.mxu0 %v625
    %1151 = vmatprep.subr.mxu0 0.0
    %1152 = vmatpush1.msra.mxu0 %v626
    %1153 = vmatprep.subr.mxu0 0.0
    %1154 = vmatpush1.msra.mxu0 %v627
    %1155 = vmatprep.subr.mxu0 0.0
    %1156 = vmatpush1.msra.mxu0 %v628
    %1157 = vmatprep.subr.mxu0 0.0
    %1158 = vmatpush1.msra.mxu0 %v629
    %1159 = vmatprep.subr.mxu0 0.0
    %1160 = vmatpush1.msra.mxu0 %v630
    %1161 = vmatprep.subr.mxu0 0.0
    %1162 = vmatpush1.msra.mxu0 %v631
    %1163 = vmatprep.subr.mxu0 0.0
    %1164 = vmatpush1.msra.mxu0 %v632
    %1165 = vmatprep.subr.mxu0 0.0
    %1166 = vmatpush1.msra.mxu0 %v633
    %1167 = vmatprep.subr.mxu0 0.0
    %1168 = vmatpush1.msra.mxu0 %v634
    %1169 = vmatprep.subr.mxu0 0.0
    %1170 = vmatpush1.msra.mxu0 %v635
    %1171 = vmatprep.subr.mxu0 0.0
    %1172 = vmatpush1.msra.mxu0 %v636
    %1173 = vmatprep.subr.mxu0 0.0
    %1174 = vmatpush1.msra.mxu0 %v637
    %1175 = vmatprep.subr.mxu0 0.0
    %1176 = vmatpush1.msra.mxu0 %v638
    %1177 = vmatprep.subr.mxu0 0.0
    %1178 = vmatpush1.msra.mxu0 %v639
    %1179 = vmatprep.subr.mxu0 0.0
    %1180 = vmatpush1.msra.mxu0 %v640
    %1181 = vmatprep.subr.mxu0 0.0
    %1182 = vmatpush1.msra.mxu0 %v641
    %1183 = vmatprep.subr.mxu0 0.0
    %1184 = vmatpush1.msra.mxu0 %v642
    %1185 = vmatprep.subr.mxu0 0.0
    %1186 = vmatpush1.msra.mxu0 %v643
    %1187 = vmatprep.subr.mxu0 0.0
    %1188 = vmatpush1.msra.mxu0 %v644
    %1189 = vmatprep.subr.mxu0 0.0
    %1190 = vmatpush1.msra.mxu0 %v645
    %1191 = vmatprep.subr.mxu0 0.0
    %1192 = vmatpush1.msra.mxu0 %v646
    %1193 = vmatprep.subr.mxu0 0.0
    %1194 = vmatpush1.msra.mxu0 %v647
    %1195 = vmatprep.subr.mxu0 0.0
    %1196 = vmatpush1.msra.mxu0 %v648
    %1197 = vmatprep.subr.mxu0 0.0
    %1198 = vmatpush1.msra.mxu0 %v649
    %1199 = vmatprep.subr.mxu0 0.0
    %1200 = vmatpush1.msra.mxu0 %v650
    %1201 = vmatprep.subr.mxu0 0.0
    %1202 = vmatpush1.msra.mxu0 %v651
    %1203 = vmatprep.subr.mxu0 0.0
    %1204 = vmatpush1.msra.mxu0 %v652
    %1205 = vmatprep.subr.mxu0 0.0
    %1206 = vmatpush1.msra.mxu0 %v653
    %1207 = vmatprep.subr.mxu0 0.0
    %1208 = vmatpush1.msra.mxu0 %v654
    %1209 = vmatprep.mubr.f32.mxu0 %v526
    %1210 = vmatmul.mubr.f32.gmra.mrb[0].mxu0 %v519
    %v1211 = vpop.f32.mrb[0].mxu0
    %v1212 = vadd.f32 %v1142, %v1211
    %v1213 = vpop.f32.mrb[0].mxu0
    %1214 = vdwg.mxu0
    %v1215 = vmul.f32 %v932, 0.03125
    %v1216 = vmul.f32 %v1212, 0.03125
    %v1217 = vmul.f32 %v1215, %v1215
    %v1218 = vsub.f32 %v1216, %v1217
    %v1219 = vadd.f32 %v1218, 1e-05
    %v1220 = vrsqrt.pop %v1219
    %v1221 = vld [vmem:[#allocation7] sm:$0x1]
    %v1222 = vmul.f32 %v1221, %v1220
    %v1223 = vld [vmem:[#allocation9] sm:$0x1]
    %v1224 = vmul.f32 %v1215, %v1222
    %v1225 = vsub.f32 %v1223, %v1224
    %v1226 = vld [vmem:[#allocation6] sm:$0xff]
    %v1227 = vld [vmem:[#allocation6 + $0x8] sm:$0xff]
    %v1228 = vld [vmem:[#allocation6 + $0x10] sm:$0xff]
    %v1229 = vld [vmem:[#allocation6 + $0x18] sm:$0xff]
    %v1230 = vld [vmem:[#allocation6 + $0x20] sm:$0xff]
    %v1231 = vld [vmem:[#allocation6 + $0x28] sm:$0xff]
    %v1232 = vld [vmem:[#allocation6 + $0x30] sm:$0xff]
    %v1233 = vld [vmem:[#allocation6 + $0x38] sm:$0xff]
    %v1234 = vld [vmem:[#allocation6 + $0x40] sm:$0xff]
    %v1235 = vld [vmem:[#allocation6 + $0x48] sm:$0xff]
    %v1236 = vld [vmem:[#allocation6 + $0x50] sm:$0xff]
    %v1237 = vld [vmem:[#allocation6 + $0x58] sm:$0xff]
    %v1238 = vld [vmem:[#allocation6 + $0x60] sm:$0xff]
    %v1239 = vld [vmem:[#allocation6 + $0x68] sm:$0xff]
    %v1240 = vld [vmem:[#allocation6 + $0x70] sm:$0xff]
    %v1241 = vld [vmem:[#allocation6 + $0x78] sm:$0xff]
    %v1242 = vld [vmem:[#allocation6 + $0x80] sm:$0xff]
    %v1243 = vld [vmem:[#allocation6 + $0x88] sm:$0xff]
    %v1244 = vld [vmem:[#allocation6 + $0x90] sm:$0xff]
    %v1245 = vld [vmem:[#allocation6 + $0x98] sm:$0xff]
    %v1246 = vld [vmem:[#allocation6 + $0xa0] sm:$0xff]
    %v1247 = vld [vmem:[#allocation6 + $0xa8] sm:$0xff]
    %v1248 = vld [vmem:[#allocation6 + $0xb0] sm:$0xff]
    %v1249 = vld [vmem:[#allocation6 + $0xb8] sm:$0xff]
    %v1250 = vld [vmem:[#allocation6 + $0xc0] sm:$0xff]
    %v1251 = vld [vmem:[#allocation6 + $0xc8] sm:$0xff]
    %v1252 = vld [vmem:[#allocation6 + $0xd0] sm:$0xff]
    %v1253 = vld [vmem:[#allocation6 + $0xd8] sm:$0xff]
    %v1254 = vld [vmem:[#allocation6 + $0xe0] sm:$0xff]
    %v1255 = vld [vmem:[#allocation6 + $0xe8] sm:$0xff]
    %v1256 = vld [vmem:[#allocation6 + $0xf0] sm:$0xff]
    %v1257 = vld [vmem:[#allocation6 + $0xf8] sm:$0xff]
    %v1258 = vld [vmem:[#allocation6 + $0x100] sm:$0xff]
    %v1259 = vld [vmem:[#allocation6 + $0x108] sm:$0xff]
    %v1260 = vld [vmem:[#allocation6 + $0x110] sm:$0xff]
    %v1261 = vld [vmem:[#allocation6 + $0x118] sm:$0xff]
    %v1262 = vld [vmem:[#allocation6 + $0x120] sm:$0xff]
    %v1263 = vld [vmem:[#allocation6 + $0x128] sm:$0xff]
    %v1264 = vld [vmem:[#allocation6 + $0x130] sm:$0xff]
    %v1265 = vld [vmem:[#allocation6 + $0x138] sm:$0xff]
    %v1266 = vld [vmem:[#allocation6 + $0x140] sm:$0xff]
    %v1267 = vld [vmem:[#allocation6 + $0x148] sm:$0xff]
    %v1268 = vld [vmem:[#allocation6 + $0x150] sm:$0xff]
    %v1269 = vld [vmem:[#allocation6 + $0x158] sm:$0xff]
    %v1270 = vld [vmem:[#allocation6 + $0x160] sm:$0xff]
    %v1271 = vld [vmem:[#allocation6 + $0x168] sm:$0xff]
    %v1272 = vld [vmem:[#allocation6 + $0x170] sm:$0xff]
    %v1273 = vld [vmem:[#allocation6 + $0x178] sm:$0xff]
    %v1274 = vld [vmem:[#allocation6 + $0x180] sm:$0xff]
    %v1275 = vld [vmem:[#allocation6 + $0x188] sm:$0xff]
    %v1276 = vld [vmem:[#allocation6 + $0x190] sm:$0xff]
    %v1277 = vld [vmem:[#allocation6 + $0x198] sm:$0xff]
    %v1278 = vld [vmem:[#allocation6 + $0x1a0] sm:$0xff]
    %v1279 = vld [vmem:[#allocation6 + $0x1a8] sm:$0xff]
    %v1280 = vld [vmem:[#allocation6 + $0x1b0] sm:$0xff]
    %v1281 = vld [vmem:[#allocation6 + $0x1b8] sm:$0xff]
    %v1282 = vld [vmem:[#allocation6 + $0x1c0] sm:$0xff]
    %v1283 = vld [vmem:[#allocation6 + $0x1c8] sm:$0xff]
    %v1284 = vld [vmem:[#allocation6 + $0x1d0] sm:$0xff]
    %v1285 = vld [vmem:[#allocation6 + $0x1d8] sm:$0xff]
    %v1286 = vld [vmem:[#allocation6 + $0x1e0] sm:$0xff]
    %v1287 = vld [vmem:[#allocation6 + $0x1e8] sm:$0xff]
    %v1288 = vld [vmem:[#allocation6 + $0x1f0] sm:$0xff]
    %v1289 = vld [vmem:[#allocation6 + $0x1f8] sm:$0xff]
    %vm1290 = vcmask 523264
    %v1292 = vsel %vm1290, %v1222, 0
    %1294 = vmatprep.subr.mxu0 %v1227
    %1295 = vmatpush1.msra.mxu0 %v1226
    %1296 = vmatprep.subr.mxu0 %v1235
    %1297 = vmatpush1.msra.mxu0 %v1234
    %1298 = vmatprep.subr.mxu0 %v1243
    %1299 = vmatpush1.msra.mxu0 %v1242
    %1300 = vmatprep.subr.mxu0 %v1251
    %1301 = vmatpush1.msra.mxu0 %v1250
    %1302 = vmatprep.subr.mxu0 %v1259
    %1303 = vmatpush1.msra.mxu0 %v1258
    %1304 = vmatprep.subr.mxu0 %v1267
    %1305 = vmatpush1.msra.mxu0 %v1266
    %1306 = vmatprep.subr.mxu0 %v1275
    %1307 = vmatpush1.msra.mxu0 %v1274
    %1308 = vmatprep.subr.mxu0 %v1283
    %1309 = vmatpush1.msra.mxu0 %v1282
    %1310 = vmatprep.subr.mxu0 0.0
    %1311 = vmatpush1.msra.mxu0 0.0
    %1312 = vmatprep.subr.mxu0 0.0
    %1313 = vmatpush1.msra.mxu0 0.0
    %1314 = vmatprep.subr.mxu0 0.0
    %1315 = vmatpush1.msra.mxu0 0.0
    %1316 = vmatprep.subr.mxu0 0.0
    %1317 = vmatpush1.msra.mxu0 0.0
    %1318 = vmatprep.subr.mxu0 0.0
    %1319 = vmatpush1.msra.mxu0 0.0
    %1320 = vmatprep.subr.mxu0 0.0
    %1321 = vmatpush1.msra.mxu0 0.0
    %1322 = vmatprep.subr.mxu0 0.0
    %1323 = vmatpush1.msra.mxu0 0.0
    %1324 = vmatprep.subr.mxu0 0.0
    %1325 = vmatpush1.msra.mxu0 0.0
    %1326 = vmatprep.subr.mxu0 0.0
    %1327 = vmatpush1.msra.mxu0 0.0
    %1328 = vmatprep.subr.mxu0 0.0
    %1329 = vmatpush1.msra.mxu0 0.0
    %1330 = vmatprep.subr.mxu0 0.0
    %1331 = vmatpush1.msra.mxu0 0.0
    %1332 = vmatprep.subr.mxu0 0.0
    %1333 = vmatpush1.msra.mxu0 0.0
    %1334 = vmatprep.subr.mxu0 0.0
    %1335 = vmatpush1.msra.mxu0 0.0
    %1336 = vmatprep.subr.mxu0 0.0
    %1337 = vmatpush1.msra.mxu0 0.0
    %1338 = vmatprep.subr.mxu0 0.0
    %1339 = vmatpush1.msra.mxu0 0.0
    %1340 = vmatprep.subr.mxu0 0.0
    %1341 = vmatpush1.msra.mxu0 0.0
    %1342 = vmatprep.subr.mxu0 0.0
    %1343 = vmatpush1.msra.mxu0 0.0
    %1344 = vmatprep.subr.mxu0 0.0
    %1345 = vmatpush1.msra.mxu0 0.0
    %1346 = vmatprep.subr.mxu0 0.0
    %1347 = vmatpush1.msra.mxu0 0.0
    %1348 = vmatprep.subr.mxu0 0.0
    %1349 = vmatpush1.msra.mxu0 0.0
    %1350 = vmatprep.subr.mxu0 0.0
    %1351 = vmatpush1.msra.mxu0 0.0
    %1352 = vmatprep.subr.mxu0 0.0
    %1353 = vmatpush1.msra.mxu0 0.0
    %1354 = vmatprep.subr.mxu0 0.0
    %1355 = vmatpush1.msra.mxu0 0.0
    %1356 = vmatprep.subr.mxu0 0.0
    %1357 = vmatpush1.msra.mxu0 0.0
    %1358 = vmatprep.mubr.f32.mxu0 0.0
    %1359 = vmatmul.mubr.f32.gmra.mrb[0].mxu0 %v1292
    %v1360 = vpop.f32.mrb[0].mxu0
    %v1361 = vadd.f32 0.0, %v1360
    %v1362 = vpop.f32.mrb[0].mxu0
    %v1363 = vadd.f32 0.0, %v1362
    %1364 = vdwg.mxu0
    %1365 = vmatprep.subr.mxu0 %v1229
    %1366 = vmatpush1.msra.mxu0 %v1228
    %1367 = vmatprep.subr.mxu0 %v1237
    %1368 = vmatpush1.msra.mxu0 %v1236
    %1369 = vmatprep.subr.mxu0 %v1245
    %1370 = vmatpush1.msra.mxu0 %v1244
    %1371 = vmatprep.subr.mxu0 %v1253
    %1372 = vmatpush1.msra.mxu0 %v1252
    %1373 = vmatprep.subr.mxu0 %v1261
    %1374 = vmatpush1.msra.mxu0 %v1260
    %1375 = vmatprep.subr.mxu0 %v1269
    %1376 = vmatpush1.msra.mxu0 %v1268
    %1377 = vmatprep.subr.mxu0 %v1277
    %1378 = vmatpush1.msra.mxu0 %v1276
    %1379 = vmatprep.subr.mxu0 %v1285
    %1380 = vmatpush1.msra.mxu0 %v1284
    %1381 = vmatprep.subr.mxu0 0.0
    %1382 = vmatpush1.msra.mxu0 0.0
    %1383 = vmatprep.subr.mxu0 0.0
    %1384 = vmatpush1.msra.mxu0 0.0
    %1385 = vmatprep.subr.mxu0 0.0
    %1386 = vmatpush1.msra.mxu0 0.0
    %1387 = vmatprep.subr.mxu0 0.0
    %1388 = vmatpush1.msra.mxu0 0.0
    %1389 = vmatprep.subr.mxu0 0.0
    %1390 = vmatpush1.msra.mxu0 0.0
    %1391 = vmatprep.subr.mxu0 0.0
    %1392 = vmatpush1.msra.mxu0 0.0
    %1393 = vmatprep.subr.mxu0 0.0
    %1394 = vmatpush1.msra.mxu0 0.0
    %1395 = vmatprep.subr.mxu0 0.0
    %1396 = vmatpush1.msra.mxu0 0.0
    %1397 = vmatprep.subr.mxu0 0.0
    %1398 = vmatpush1.msra.mxu0 0.0
    %1399 = vmatprep.subr.mxu0 0.0
    %1400 = vmatpush1.msra.mxu0 0.0
    %1401 = vmatprep.subr.mxu0 0.0
    %1402 = vmatpush1.msra.mxu0 0.0
    %1403 = vmatprep.subr.mxu0 0.0
    %1404 = vmatpush1.msra.mxu0 0.0
    %1405 = vmatprep.subr.mxu0 0.0
    %1406 = vmatpush1.msra.mxu0 0.0
    %1407 = vmatprep.subr.mxu0 0.0
    %1408 = vmatpush1.msra.mxu0 0.0
    %1409 = vmatprep.subr.mxu0 0.0
    %1410 = vmatpush1.msra.mxu0 0.0
    %1411 = vmatprep.subr.mxu0 0.0
    %1412 = vmatpush1.msra.mxu0 0.0
    %1413 = vmatprep.subr.mxu0 0.0
    %1414 = vmatpush1.msra.mxu0 0.0
    %1415 = vmatprep.subr.mxu0 0.0
    %1416 = vmatpush1.msra.mxu0 0.0
    %1417 = vmatprep.subr.mxu0 0.0
    %1418 = vmatpush1.msra.mxu0 0.0
    %1419 = vmatprep.subr.mxu0 0.0
    %1420 = vmatpush1.msra.mxu0 0.0
    %1421 = vmatprep.subr.mxu0 0.0
    %1422 = vmatpush1.msra.mxu0 0.0
    %1423 = vmatprep.subr.mxu0 0.0
    %1424 = vmatpush1.msra.mxu0 0.0
    %1425 = vmatprep.subr.mxu0 0.0
    %1426 = vmatpush1.msra.mxu0 0.0
    %1427 = vmatprep.subr.mxu0 0.0
    %1428 = vmatpush1.msra.mxu0 0.0
    %1429 = vmatprep.mubr.f32.mxu0 0.0
    %1430 = vmatmul.mubr.f32.gmra.mrb[0].mxu0 %v1292
    %v1431 = vpop.f32.mrb[0].mxu0
    %v1432 = vadd.f32 0.0, %v1431
    %v1433 = vpop.f32.mrb[0].mxu0
    %v1434 = vadd.f32 0.0, %v1433
    %1435 = vdwg.mxu0
    %1436 = vmatprep.subr.mxu0 %v1231
    %1437 = vmatpush1.msra.mxu0 %v1230
    %1438 = vmatprep.subr.mxu0 %v1239
    %1439 = vmatpush1.msra.mxu0 %v1238
    %1440 = vmatprep.subr.mxu0 %v1247
    %1441 = vmatpush1.msra.mxu0 %v1246
    %1442 = vmatprep.subr.mxu0 %v1255
    %1443 = vmatpush1.msra.mxu0 %v1254
    %1444 = vmatprep.subr.mxu0 %v1263
    %1445 = vmatpush1.msra.mxu0 %v1262
    %1446 = vmatprep.subr.mxu0 %v1271
    %1447 = vmatpush1.msra.mxu0 %v1270
    %1448 = vmatprep.subr.mxu0 %v1279
    %1449 = vmatpush1.msra.mxu0 %v1278
    %1450 = vmatprep.subr.mxu0 %v1287
    %1451 = vmatpush1.msra.mxu0 %v1286
    %1452 = vmatprep.subr.mxu0 0.0
    %1453 = vmatpush1.msra.mxu0 0.0
    %1454 = vmatprep.subr.mxu0 0.0
    %1455 = vmatpush1.msra.mxu0 0.0
    %1456 = vmatprep.subr.mxu0 0.0
    %1457 = vmatpush1.msra.mxu0 0.0
    %1458 = vmatprep.subr.mxu0 0.0
    %1459 = vmatpush1.msra.mxu0 0.0
    %1460 = vmatprep.subr.mxu0 0.0
    %1461 = vmatpush1.msra.mxu0 0.0
    %1462 = vmatprep.subr.mxu0 0.0
    %1463 = vmatpush1.msra.mxu0 0.0
    %1464 = vmatprep.subr.mxu0 0.0
    %1465 = vmatpush1.msra.mxu0 0.0
    %1466 = vmatprep.subr.mxu0 0.0
    %1467 = vmatpush1.msra.mxu0 0.0
    %1468 = vmatprep.subr.mxu0 0.0
    %1469 = vmatpush1.msra.mxu0 0.0
    %1470 = vmatprep.subr.mxu0 0.0
    %1471 = vmatpush1.msra.mxu0 0.0
    %1472 = vmatprep.subr.mxu0 0.0
    %1473 = vmatpush1.msra.mxu0 0.0
    %1474 = vmatprep.subr.mxu0 0.0
    %1475 = vmatpush1.msra.mxu0 0.0
    %1476 = vmatprep.subr.mxu0 0.0
    %1477 = vmatpush1.msra.mxu0 0.0
    %1478 = vmatprep.subr.mxu0 0.0
    %1479 = vmatpush1.msra.mxu0 0.0
    %1480 = vmatprep.subr.mxu0 0.0
    %1481 = vmatpush1.msra.mxu0 0.0
    %1482 = vmatprep.subr.mxu0 0.0
    %1483 = vmatpush1.msra.mxu0 0.0
    %1484 = vmatprep.subr.mxu0 0.0
    %1485 = vmatpush1.msra.mxu0 0.0
    %1486 = vmatprep.subr.mxu0 0.0
    %1487 = vmatpush1.msra.mxu0 0.0
    %1488 = vmatprep.subr.mxu0 0.0
    %1489 = vmatpush1.msra.mxu0 0.0
    %1490 = vmatprep.subr.mxu0 0.0
    %1491 = vmatpush1.msra.mxu0 0.0
    %1492 = vmatprep.subr.mxu0 0.0
    %1493 = vmatpush1.msra.mxu0 0.0
    %1494 = vmatprep.subr.mxu0 0.0
    %1495 = vmatpush1.msra.mxu0 0.0
    %1496 = vmatprep.subr.mxu0 0.0
    %1497 = vmatpush1.msra.mxu0 0.0
    %1498 = vmatprep.subr.mxu0 0.0
    %1499 = vmatpush1.msra.mxu0 0.0
    %1500 = vmatprep.mubr.f32.mxu0 0.0
    %1501 = vmatmul.mubr.f32.gmra.mrb[0].mxu0 %v1292
    %v1502 = vpop.f32.mrb[0].mxu0
    %v1503 = vadd.f32 0.0, %v1502
    %v1504 = vpop.f32.mrb[0].mxu0
    %v1505 = vadd.f32 0.0, %v1504
    %1506 = vdwg.mxu0
    %1507 = vmatprep.subr.mxu0 %v1233
    %1508 = vmatpush1.msra.mxu0 %v1232
    %1509 = vmatprep.subr.mxu0 %v1241
    %1510 = vmatpush1.msra.mxu0 %v1240
    %1511 = vmatprep.subr.mxu0 %v1249
    %1512 = vmatpush1.msra.mxu0 %v1248
    %1513 = vmatprep.subr.mxu0 %v1257
    %1514 = vmatpush1.msra.mxu0 %v1256
    %1515 = vmatprep.subr.mxu0 %v1265
    %1516 = vmatpush1.msra.mxu0 %v1264
    %1517 = vmatprep.subr.mxu0 %v1273
    %1518 = vmatpush1.msra.mxu0 %v1272
    %1519 = vmatprep.subr.mxu0 %v1281
    %1520 = vmatpush1.msra.mxu0 %v1280
    %1521 = vmatprep.subr.mxu0 %v1289
    %1522 = vmatpush1.msra.mxu0 %v1288
    %1523 = vmatprep.subr.mxu0 0.0
    %1524 = vmatpush1.msra.mxu0 0.0
    %1525 = vmatprep.subr.mxu0 0.0
    %1526 = vmatpush1.msra.mxu0 0.0
    %1527 = vmatprep.subr.mxu0 0.0
    %1528 = vmatpush1.msra.mxu0 0.0
    %1529 = vmatprep.subr.mxu0 0.0
    %1530 = vmatpush1.msra.mxu0 0.0
    %1531 = vmatprep.subr.mxu0 0.0
    %1532 = vmatpush1.msra.mxu0 0.0
    %1533 = vmatprep.subr.mxu0 0.0
    %1534 = vmatpush1.msra.mxu0 0.0
    %1535 = vmatprep.subr.mxu0 0.0
    %1536 = vmatpush1.msra.mxu0 0.0
    %1537 = vmatprep.subr.mxu0 0.0
    %1538 = vmatpush1.msra.mxu0 0.0
    %1539 = vmatprep.subr.mxu0 0.0
    %1540 = vmatpush1.msra.mxu0 0.0
    %1541 = vmatprep.subr.mxu0 0.0
    %1542 = vmatpush1.msra.mxu0 0.0
    %1543 = vmatprep.subr.mxu0 0.0
    %1544 = vmatpush1.msra.mxu0 0.0
    %1545 = vmatprep.subr.mxu0 0.0
    %1546 = vmatpush1.msra.mxu0 0.0
    %1547 = vmatprep.subr.mxu0 0.0
    %1548 = vmatpush1.msra.mxu0 0.0
    %1549 = vmatprep.subr.mxu0 0.0
    %1550 = vmatpush1.msra.mxu0 0.0
    %1551 = vmatprep.subr.mxu0 0.0
    %1552 = vmatpush1.msra.mxu0 0.0
    %1553 = vmatprep.subr.mxu0 0.0
    %1554 = vmatpush1.msra.mxu0 0.0
    %1555 = vmatprep.subr.mxu0 0.0
    %1556 = vmatpush1.msra.mxu0 0.0
    %1557 = vmatprep.subr.mxu0 0.0
    %1558 = vmatpush1.msra.mxu0 0.0
    %1559 = vmatprep.subr.mxu0 0.0
    %1560 = vmatpush1.msra.mxu0 0.0
    %1561 = vmatprep.subr.mxu0 0.0
    %1562 = vmatpush1.msra.mxu0 0.0
    %1563 = vmatprep.subr.mxu0 0.0
    %1564 = vmatpush1.msra.mxu0 0.0
    %1565 = vmatprep.subr.mxu0 0.0
    %1566 = vmatpush1.msra.mxu0 0.0
    %1567 = vmatprep.subr.mxu0 0.0
    %1568 = vmatpush1.msra.mxu0 0.0
    %1569 = vmatprep.subr.mxu0 0.0
    %1570 = vmatpush1.msra.mxu0 0.0
    %1571 = vmatprep.mubr.f32.mxu0 0.0
    %1572 = vmatmul.mubr.f32.gmra.mrb[0].mxu0 %v1292
    %v1573 = vpop.f32.mrb[0].mxu0
    %v1574 = vadd.f32 0.0, %v1573
    %v1575 = vpop.f32.mrb[0].mxu0
    %v1576 = vadd.f32 0.0, %v1575
    %1577 = vdwg.mxu0
    %v1579 = vsel %vm1290, %v1225, 0
    %1581 = vmatprep.subr.mxu0 %v1227
    %1582 = vmatpush1.msra.mxu0 %v1226
    %1583 = vmatprep.subr.mxu0 %v1235
    %1584 = vmatpush1.msra.mxu0 %v1234
    %1585 = vmatprep.subr.mxu0 %v1243
    %1586 = vmatpush1.msra.mxu0 %v1242
    %1587 = vmatprep.subr.mxu0 %v1251
    %1588 = vmatpush1.msra.mxu0 %v1250
    %1589 = vmatprep.subr.mxu0 %v1259
    %1590 = vmatpush1.msra.mxu0 %v1258
    %1591 = vmatprep.subr.mxu0 %v1267
    %1592 = vmatpush1.msra.mxu0 %v1266
    %1593 = vmatprep.subr.mxu0 %v1275
    %1594 = vmatpush1.msra.mxu0 %v1274
    %1595 = vmatprep.subr.mxu0 %v1283
    %1596 = vmatpush1.msra.mxu0 %v1282
    %1597 = vmatprep.subr.mxu0 0.0
    %1598 = vmatpush1.msra.mxu0 0.0
    %1599 = vmatprep.subr.mxu0 0.0
    %1600 = vmatpush1.msra.mxu0 0.0
    %1601 = vmatprep.subr.mxu0 0.0
    %1602 = vmatpush1.msra.mxu0 0.0
    %1603 = vmatprep.subr.mxu0 0.0
    %1604 = vmatpush1.msra.mxu0 0.0
    %1605 = vmatprep.subr.mxu0 0.0
    %1606 = vmatpush1.msra.mxu0 0.0
    %1607 = vmatprep.subr.mxu0 0.0
    %1608 = vmatpush1.msra.mxu0 0.0
    %1609 = vmatprep.subr.mxu0 0.0
    %1610 = vmatpush1.msra.mxu0 0.0
    %1611 = vmatprep.subr.mxu0 0.0
    %1612 = vmatpush1.msra.mxu0 0.0
    %1613 = vmatprep.subr.mxu0 0.0
    %1614 = vmatpush1.msra.mxu0 0.0
    %1615 = vmatprep.subr.mxu0 0.0
    %1616 = vmatpush1.msra.mxu0 0.0
    %1617 = vmatprep.subr.mxu0 0.0
    %1618 = vmatpush1.msra.mxu0 0.0
    %1619 = vmatprep.subr.mxu0 0.0
    %1620 = vmatpush1.msra.mxu0 0.0
    %1621 = vmatprep.subr.mxu0 0.0
    %1622 = vmatpush1.msra.mxu0 0.0
    %1623 = vmatprep.subr.mxu0 0.0
    %1624 = vmatpush1.msra.mxu0 0.0
    %1625 = vmatprep.subr.mxu0 0.0
    %1626 = vmatpush1.msra.mxu0 0.0
    %1627 = vmatprep.subr.mxu0 0.0
    %1628 = vmatpush1.msra.mxu0 0.0
    %1629 = vmatprep.subr.mxu0 0.0
    %1630 = vmatpush1.msra.mxu0 0.0
    %1631 = vmatprep.subr.mxu0 0.0
    %1632 = vmatpush1.msra.mxu0 0.0
    %1633 = vmatprep.subr.mxu0 0.0
    %1634 = vmatpush1.msra.mxu0 0.0
    %1635 = vmatprep.subr.mxu0 0.0
    %1636 = vmatpush1.msra.mxu0 0.0
    %1637 = vmatprep.subr.mxu0 0.0
    %1638 = vmatpush1.msra.mxu0 0.0
    %1639 = vmatprep.subr.mxu0 0.0
    %1640 = vmatpush1.msra.mxu0 0.0
    %1641 = vmatprep.subr.mxu0 0.0
    %1642 = vmatpush1.msra.mxu0 0.0
    %1643 = vmatprep.subr.mxu0 0.0
    %1644 = vmatpush1.msra.mxu0 0.0
    %1645 = vmatprep.mubr.f32.mxu0 0.0
    %1646 = vmatmul.mubr.f32.gmra.mrb[0].mxu0 %v1579
    %v1647 = vpop.f32.mrb[0].mxu0
    %v1648 = vadd.f32 0.0, %v1647
    %v1649 = vpop.f32.mrb[0].mxu0
    %v1650 = vadd.f32 0.0, %v1649
    %1651 = vdwg.mxu0
    %1652 = vmatprep.subr.mxu0 %v1229
    %1653 = vmatpush1.msra.mxu0 %v1228
    %1654 = vmatprep.subr.mxu0 %v1237
    %1655 = vmatpush1.msra.mxu0 %v1236
    %1656 = vmatprep.subr.mxu0 %v1245
    %1657 = vmatpush1.msra.mxu0 %v1244
    %1658 = vmatprep.subr.mxu0 %v1253
    %1659 = vmatpush1.msra.mxu0 %v1252
    %1660 = vmatprep.subr.mxu0 %v1261
    %1661 = vmatpush1.msra.mxu0 %v1260
    %1662 = vmatprep.subr.mxu0 %v1269
    %1663 = vmatpush1.msra.mxu0 %v1268
    %1664 = vmatprep.subr.mxu0 %v1277
    %1665 = vmatpush1.msra.mxu0 %v1276
    %1666 = vmatprep.subr.mxu0 %v1285
    %1667 = vmatpush1.msra.mxu0 %v1284
    %1668 = vmatprep.subr.mxu0 0.0
    %1669 = vmatpush1.msra.mxu0 0.0
    %1670 = vmatprep.subr.mxu0 0.0
    %1671 = vmatpush1.msra.mxu0 0.0
    %1672 = vmatprep.subr.mxu0 0.0
    %1673 = vmatpush1.msra.mxu0 0.0
    %1674 = vmatprep.subr.mxu0 0.0
    %1675 = vmatpush1.msra.mxu0 0.0
    %1676 = vmatprep.subr.mxu0 0.0
    %1677 = vmatpush1.msra.mxu0 0.0
    %1678 = vmatprep.subr.mxu0 0.0
    %1679 = vmatpush1.msra.mxu0 0.0
    %1680 = vmatprep.subr.mxu0 0.0
    %1681 = vmatpush1.msra.mxu0 0.0
    %1682 = vmatprep.subr.mxu0 0.0
    %1683 = vmatpush1.msra.mxu0 0.0
    %1684 = vmatprep.subr.mxu0 0.0
    %1685 = vmatpush1.msra.mxu0 0.0
    %1686 = vmatprep.subr.mxu0 0.0
    %1687 = vmatpush1.msra.mxu0 0.0
    %1688 = vmatprep.subr.mxu0 0.0
    %1689 = vmatpush1.msra.mxu0 0.0
    %1690 = vmatprep.subr.mxu0 0.0
    %1691 = vmatpush1.msra.mxu0 0.0
    %1692 = vmatprep.subr.mxu0 0.0
    %1693 = vmatpush1.msra.mxu0 0.0
    %1694 = vmatprep.subr.mxu0 0.0
    %1695 = vmatpush1.msra.mxu0 0.0
    %1696 = vmatprep.subr.mxu0 0.0
    %1697 = vmatpush1.msra.mxu0 0.0
    %1698 = vmatprep.subr.mxu0 0.0
    %1699 = vmatpush1.msra.mxu0 0.0
    %1700 = vmatprep.subr.mxu0 0.0
    %1701 = vmatpush1.msra.mxu0 0.0
    %1702 = vmatprep.subr.mxu0 0.0
    %1703 = vmatpush1.msra.mxu0 0.0
    %1704 = vmatprep.subr.mxu0 0.0
    %1705 = vmatpush1.msra.mxu0 0.0
    %1706 = vmatprep.subr.mxu0 0.0
    %1707 = vmatpush1.msra.mxu0 0.0
    %1708 = vmatprep.subr.mxu0 0.0
    %1709 = vmatpush1.msra.mxu0 0.0
    %1710 = vmatprep.subr.mxu0 0.0
    %1711 = vmatpush1.msra.mxu0 0.0
    %1712 = vmatprep.subr.mxu0 0.0
    %1713 = vmatpush1.msra.mxu0 0.0
    %1714 = vmatprep.subr.mxu0 0.0
    %1715 = vmatpush1.msra.mxu0 0.0
    %1716 = vmatprep.mubr.f32.mxu0 0.0
    %1717 = vmatmul.mubr.f32.gmra.mrb[0].mxu0 %v1579
    %v1718 = vpop.f32.mrb[0].mxu0
    %v1719 = vadd.f32 0.0, %v1718
    %v1720 = vpop.f32.mrb[0].mxu0
    %v1721 = vadd.f32 0.0, %v1720
    %1722 = vdwg.mxu0
    %1723 = vmatprep.subr.mxu0 %v1231
    %1724 = vmatpush1.msra.mxu0 %v1230
    %1725 = vmatprep.subr.mxu0 %v1239
    %1726 = vmatpush1.msra.mxu0 %v1238
    %1727 = vmatprep.subr.mxu0 %v1247
    %1728 = vmatpush1.msra.mxu0 %v1246
    %1729 = vmatprep.subr.mxu0 %v1255
    %1730 = vmatpush1.msra.mxu0 %v1254
    %1731 = vmatprep.subr.mxu0 %v1263
    %1732 = vmatpush1.msra.mxu0 %v1262
    %1733 = vmatprep.subr.mxu0 %v1271
    %1734 = vmatpush1.msra.mxu0 %v1270
    %1735 = vmatprep.subr.mxu0 %v1279
    %1736 = vmatpush1.msra.mxu0 %v1278
    %1737 = vmatprep.subr.mxu0 %v1287
    %1738 = vmatpush1.msra.mxu0 %v1286
    %1739 = vmatprep.subr.mxu0 0.0
    %1740 = vmatpush1.msra.mxu0 0.0
    %1741 = vmatprep.subr.mxu0 0.0
    %1742 = vmatpush1.msra.mxu0 0.0
    %1743 = vmatprep.subr.mxu0 0.0
    %1744 = vmatpush1.msra.mxu0 0.0
    %1745 = vmatprep.subr.mxu0 0.0
    %1746 = vmatpush1.msra.mxu0 0.0
    %1747 = vmatprep.subr.mxu0 0.0
    %1748 = vmatpush1.msra.mxu0 0.0
    %1749 = vmatprep.subr.mxu0 0.0
    %1750 = vmatpush1.msra.mxu0 0.0
    %1751 = vmatprep.subr.mxu0 0.0
    %1752 = vmatpush1.msra.mxu0 0.0
    %1753 = vmatprep.subr.mxu0 0.0
    %1754 = vmatpush1.msra.mxu0 0.0
    %1755 = vmatprep.subr.mxu0 0.0
    %1756 = vmatpush1.msra.mxu0 0.0
    %1757 = vmatprep.subr.mxu0 0.0
    %1758 = vmatpush1.msra.mxu0 0.0
    %1759 = vmatprep.subr.mxu0 0.0
    %1760 = vmatpush1.msra.mxu0 0.0
    %1761 = vmatprep.subr.mxu0 0.0
    %1762 = vmatpush1.msra.mxu0 0.0
    %1763 = vmatprep.subr.mxu0 0.0
    %1764 = vmatpush1.msra.mxu0 0.0
    %1765 = vmatprep.subr.mxu0 0.0
    %1766 = vmatpush1.msra.mxu0 0.0
    %1767 = vmatprep.subr.mxu0 0.0
    %1768 = vmatpush1.msra.mxu0 0.0
    %1769 = vmatprep.subr.mxu0 0.0
    %1770 = vmatpush1.msra.mxu0 0.0
    %1771 = vmatprep.subr.mxu0 0.0
    %1772 = vmatpush1.msra.mxu0 0.0
    %1773 = vmatprep.subr.mxu0 0.0
    %1774 = vmatpush1.msra.mxu0 0.0
    %1775 = vmatprep.subr.mxu0 0.0
    %1776 = vmatpush1.msra.mxu0 0.0
    %1777 = vmatprep.subr.mxu0 0.0
    %1778 = vmatpush1.msra.mxu0 0.0
    %1779 = vmatprep.subr.mxu0 0.0
    %1780 = vmatpush1.msra.mxu0 0.0
    %1781 = vmatprep.subr.mxu0 0.0
    %1782 = vmatpush1.msra.mxu0 0.0
    %1783 = vmatprep.subr.mxu0 0.0
    %1784 = vmatpush1.msra.mxu0 0.0
    %1785 = vmatprep.subr.mxu0 0.0
    %1786 = vmatpush1.msra.mxu0 0.0
    %1787 = vmatprep.mubr.f32.mxu0 0.0
    %1788 = vmatmul.mubr.f32.gmra.mrb[0].mxu0 %v1579
    %v1789 = vpop.f32.mrb[0].mxu0
    %v1790 = vadd.f32 0.0, %v1789
    %v1791 = vpop.f32.mrb[0].mxu0
    %v1792 = vadd.f32 0.0, %v1791
    %1793 = vdwg.mxu0
    %1794 = vmatprep.subr.mxu0 %v1233
    %1795 = vmatpush1.msra.mxu0 %v1232
    %1796 = vmatprep.subr.mxu0 %v1241
    %1797 = vmatpush1.msra.mxu0 %v1240
    %1798 = vmatprep.subr.mxu0 %v1249
    %1799 = vmatpush1.msra.mxu0 %v1248
    %1800 = vmatprep.subr.mxu0 %v1257
    %1801 = vmatpush1.msra.mxu0 %v1256
    %1802 = vmatprep.subr.mxu0 %v1265
    %1803 = vmatpush1.msra.mxu0 %v1264
    %1804 = vmatprep.subr.mxu0 %v1273
    %1805 = vmatpush1.msra.mxu0 %v1272
    %1806 = vmatprep.subr.mxu0 %v1281
    %1807 = vmatpush1.msra.mxu0 %v1280
    %1808 = vmatprep.subr.mxu0 %v1289
    %1809 = vmatpush1.msra.mxu0 %v1288
    %1810 = vmatprep.subr.mxu0 0.0
    %1811 = vmatpush1.msra.mxu0 0.0
    %1812 = vmatprep.subr.mxu0 0.0
    %1813 = vmatpush1.msra.mxu0 0.0
    %1814 = vmatprep.subr.mxu0 0.0
    %1815 = vmatpush1.msra.mxu0 0.0
    %1816 = vmatprep.subr.mxu0 0.0
    %1817 = vmatpush1.msra.mxu0 0.0
    %1818 = vmatprep.subr.mxu0 0.0
    %1819 = vmatpush1.msra.mxu0 0.0
    %1820 = vmatprep.subr.mxu0 0.0
    %1821 = vmatpush1.msra.mxu0 0.0
    %1822 = vmatprep.subr.mxu0 0.0
    %1823 = vmatpush1.msra.mxu0 0.0
    %1824 = vmatprep.subr.mxu0 0.0
    %1825 = vmatpush1.msra.mxu0 0.0
    %1826 = vmatprep.subr.mxu0 0.0
    %1827 = vmatpush1.msra.mxu0 0.0
    %1828 = vmatprep.subr.mxu0 0.0
    %1829 = vmatpush1.msra.mxu0 0.0
    %1830 = vmatprep.subr.mxu0 0.0
    %1831 = vmatpush1.msra.mxu0 0.0
    %1832 = vmatprep.subr.mxu0 0.0
    %1833 = vmatpush1.msra.mxu0 0.0
    %1834 = vmatprep.subr.mxu0 0.0
    %1835 = vmatpush1.msra.mxu0 0.0
    %1836 = vmatprep.subr.mxu0 0.0
    %1837 = vmatpush1.msra.mxu0 0.0
    %1838 = vmatprep.subr.mxu0 0.0
    %1839 = vmatpush1.msra.mxu0 0.0
    %1840 = vmatprep.subr.mxu0 0.0
    %1841 = vmatpush1.msra.mxu0 0.0
    %1842 = vmatprep.subr.mxu0 0.0
    %1843 = vmatpush1.msra.mxu0 0.0
    %1844 = vmatprep.subr.mxu0 0.0
    %1845 = vmatpush1.msra.mxu0 0.0
    %1846 = vmatprep.subr.mxu0 0.0
    %1847 = vmatpush1.msra.mxu0 0.0
    %1848 = vmatprep.subr.mxu0 0.0
    %1849 = vmatpush1.msra.mxu0 0.0
    %1850 = vmatprep.subr.mxu0 0.0
    %1851 = vmatpush1.msra.mxu0 0.0
    %1852 = vmatprep.subr.mxu0 0.0
    %1853 = vmatpush1.msra.mxu0 0.0
    %1854 = vmatprep.subr.mxu0 0.0
    %1855 = vmatpush1.msra.mxu0 0.0
    %1856 = vmatprep.subr.mxu0 0.0
    %1857 = vmatpush1.msra.mxu0 0.0
    %1858 = vmatprep.mubr.f32.mxu0 0.0
    %1859 = vmatmul.mubr.f32.gmra.mrb[0].mxu0 %v1579
    %v1860 = vpop.f32.mrb[0].mxu0
    %v1861 = vadd.f32 0.0, %v1860
    %v1862 = vpop.f32.mrb[0].mxu0
    %v1863 = vadd.f32 0.0, %v1862
    %1864 = vdwg.mxu0
    %v1865 = vlaneseq
    %v1866 = vshrl.u32 %v1865, 7
    %v1867 = vsub.s32 0, %v1866
    %v1868 = vrot.slane %v1361, %v1867
    %v1869 = vlaneseq
    %v1870 = vshrl.u32 %v1869, 7
    %v1871 = vsub.s32 0, %v1870
    %v1872 = vrot.slane %v1363, %v1871
    %v1873 = vlaneseq
    %v1874 = vshrl.u32 %v1873, 7
    %v1875 = vsub.s32 0, %v1874
    %v1876 = vrot.slane %v1432, %v1875
    %v1877 = vlaneseq
    %v1878 = vshrl.u32 %v1877, 7
    %v1879 = vsub.s32 0, %v1878
    %v1880 = vrot.slane %v1434, %v1879
    %v1881 = vlaneseq
    %v1882 = vshrl.u32 %v1881, 7
    %v1883 = vsub.s32 0, %v1882
    %v1884 = vrot.slane %v1503, %v1883
    %v1885 = vlaneseq
    %v1886 = vshrl.u32 %v1885, 7
    %v1887 = vsub.s32 0, %v1886
    %v1888 = vrot.slane %v1505, %v1887
    %v1889 = vlaneseq
    %v1890 = vshrl.u32 %v1889, 7
    %v1891 = vsub.s32 0, %v1890
    %v1892 = vrot.slane %v1574, %v1891
    %v1893 = vlaneseq
    %v1894 = vshrl.u32 %v1893, 7
    %v1895 = vsub.s32 0, %v1894
    %v1896 = vrot.slane %v1576, %v1895
    %v1897 = vmul.f32 %v189, %v1868
    %v1898 = vmul.f32 %v191, %v1872
    %v1899 = vmul.f32 %v260, %v1876
    %v1900 = vmul.f32 %v262, %v1880
    %v1901 = vmul.f32 %v331, %v1884
    %v1902 = vmul.f32 %v333, %v1888
    %v1903 = vmul.f32 %v402, %v1892
    %v1904 = vmul.f32 %v404, %v1896
    %v1905 = vlaneseq
    %v1906 = vshrl.u32 %v1905, 7
    %v1907 = vsub.s32 0, %v1906
    %v1908 = vrot.slane %v1648, %v1907
    %v1909 = vlaneseq
    %v1910 = vshrl.u32 %v1909, 7
    %v1911 = vsub.s32 0, %v1910
    %v1912 = vrot.slane %v1650, %v1911
    %v1913 = vlaneseq
    %v1914 = vshrl.u32 %v1913, 7
    %v1915 = vsub.s32 0, %v1914
    %v1916 = vrot.slane %v1719, %v1915
    %v1917 = vlaneseq
    %v1918 = vshrl.u32 %v1917, 7
    %v1919 = vsub.s32 0, %v1918
    %v1920 = vrot.slane %v1721, %v1919
    %v1921 = vlaneseq
    %v1922 = vshrl.u32 %v1921, 7
    %v1923 = vsub.s32 0, %v1922
    %v1924 = vrot.slane %v1790, %v1923
    %v1925 = vlaneseq
    %v1926 = vshrl.u32 %v1925, 7
    %v1927 = vsub.s32 0, %v1926
    %v1928 = vrot.slane %v1792, %v1927
    %v1929 = vlaneseq
    %v1930 = vshrl.u32 %v1929, 7
    %v1931 = vsub.s32 0, %v1930
    %v1932 = vrot.slane %v1861, %v1931
    %v1933 = vlaneseq
    %v1934 = vshrl.u32 %v1933, 7
    %v1935 = vsub.s32 0, %v1934
    %v1936 = vrot.slane %v1863, %v1935
    %v1937 = vadd.f32 %v1897, %v1908
    %v1938 = vadd.f32 %v1898, %v1912
    %v1939 = vadd.f32 %v1899, %v1916
    %v1940 = vadd.f32 %v1900, %v1920
    %v1941 = vadd.f32 %v1901, %v1924
    %v1942 = vadd.f32 %v1902, %v1928
    %v1943 = vadd.f32 %v1903, %v1932
    %v1944 = vadd.f32 %v1904, %v1936
    %v1945 = vmax.f32 %v1937, 0.0
    %v1946 = vmax.f32 %v1938, 0.0
    %v1947 = vmax.f32 %v1939, 0.0
    %v1948 = vmax.f32 %v1940, 0.0
    %v1949 = vmax.f32 %v1941, 0.0
    %v1950 = vmax.f32 %v1942, 0.0
    %v1951 = vmax.f32 %v1943, 0.0
    %v1952 = vmax.f32 %v1944, 0.0
    %v1961 = vcombine.low %v1945, %v1946
    %v1962 = vcombine.low %v1947, %v1948
    %v1964 = vunpack.c.l.s4 1983009808
    %v1965 = vunpack.c.0.s8 %v1964
    %v1966 = vlaneseq
    %v1967 = vshrl.u32 %v1966, 7
    %v1968 = vsub.s32 %v1965, %v1967
    %v1969 = vrot.slane %v1961, %v1968
    %v1971 = vunpack.c.l.s4 1983009808
    %v1972 = vunpack.c.0.s8 %v1971
    %v1973 = vlaneseq
    %v1974 = vshrl.u32 %v1973, 7
    %v1975 = vsub.s32 %v1972, %v1974
    %v1976 = vrot.slane %v1962, %v1975
    %v1977 = vcombine.low %v1969, %v1976
    %v1978 = vcombine.low %v1949, %v1950
    %v1979 = vcombine.low %v1951, %v1952
    %v1981 = vunpack.c.l.s4 1983009808
    %v1982 = vunpack.c.0.s8 %v1981
    %v1983 = vlaneseq
    %v1984 = vshrl.u32 %v1983, 7
    %v1985 = vsub.s32 %v1982, %v1984
    %v1986 = vrot.slane %v1978, %v1985
    %v1988 = vunpack.c.l.s4 1983009808
    %v1989 = vunpack.c.0.s8 %v1988
    %v1990 = vlaneseq
    %v1991 = vshrl.u32 %v1990, 7
    %v1992 = vsub.s32 %v1989, %v1991
    %v1993 = vrot.slane %v1979, %v1992
    %v1994 = vcombine.low %v1986, %v1993
    %1997 = vst [vmem:[%s6] sm:$0xff] %v1977
    %1998 = vst [vmem:[%s6 + $0x8] sm:$0xff] %v1994
    // Predicated region
    $region46: #{generator_forward.4} parent=1 // pred_check
      _
    $region47: #{generator_forward.4} parent=1 // pred_check_branch
      %2000 = sbr.rel (0) target = $region49
    $region48: #{generator_forward.4} parent=1 // pred_region
      _
    $region49: #{generator_forward.4} parent=1 // pred_fallthru
      _
    // Predicated region
    $region50: #{generator_forward.4} parent=1 // pred_check
      _
    $region51: #{generator_forward.4} parent=1 // pred_check_branch
      %2002 = sbr.rel (0) target = $region53
    $region52: #{generator_forward.4} parent=1 // pred_region
      _
    $region53: #{generator_forward.4} parent=1 // pred_fallthru
      _
    %2003 = vsyncpa [#allocation3], 1
    %2004 = vsyncpa [#allocation5], 1
    %2005 = vsyncpa [#allocation8], 1

// kernel: generator_forward.5
$region0: #{generator_forward.5}
  #allocation0 [shape = 'u32[]', space=smem, size = 0x4, offset = 0x4, fixed_abs, tag = 'smem constant byte address 0x4 - core index']
  #allocation1 [shape = 'u32[144,128]{1,0:T(1,128)}', space=vmem, size = 0x12000, scoped, tag = 'internal scratch']
  %s0 = inlined_call_operand.vmem [shape: f32[32,576], index: 0, kind: input, shape index: {}]
  %s1 = inlined_call_operand.vmem [shape: f32[576,128], index: 1, kind: input, shape index: {}]
  %s2 = inlined_call_operand.vmem [shape: f32[128,32], index: 2, kind: input, shape index: {}]
  %s3 = inlined_call_operand.vmem [shape: f32[32,128], index: 3, kind: input, shape index: {}]
  %s4 = inlined_call_operand.vmem [shape: f32[1,32], index: 4, kind: input, shape index: {}]
  %s5 = inlined_call_operand.vmem [shape: f32[1,32], index: 5, kind: input, shape index: {}]
  %s6 = inlined_call_operand.vmem [shape: f32[32,128], index: 6, kind: output, shape index: {}]
  %s7 = sld [smem:[#allocation0]]
  $region34: #{generator_forward.5} parent=0
    _
  %s9 = ssub.s32 1, %s7
  %s10 = scalar_select 0, %s9, %s7
  // Predicated region
  $region2: #{generator_forward.5} parent=0 // pred_check
    _
  $region3: #{generator_forward.5} parent=0 // pred_check_branch
    %12 = sbr.rel (0) target = $region5
  $region4: #{generator_forward.5} parent=0 // pred_region
    _
  $region5: #{generator_forward.5} parent=0 // pred_fallthru
    _
  // Predicated region
  $region6: #{generator_forward.5} parent=0 // pred_check
    _
  $region7: #{generator_forward.5} parent=0 // pred_check_branch
    %14 = sbr.rel (0) target = $region9
  $region8: #{generator_forward.5} parent=0 // pred_region
    _
  $region9: #{generator_forward.5} parent=0 // pred_fallthru
    _
  // Predicated region
  $region10: #{generator_forward.5} parent=0 // pred_check
    _
  $region11: #{generator_forward.5} parent=0 // pred_check_branch
    %16 = sbr.rel (0) target = $region13
  $region12: #{generator_forward.5} parent=0 // pred_region
    _
  $region13: #{generator_forward.5} parent=0 // pred_fallthru
    _
  // Predicated region
  $region14: #{generator_forward.5} parent=0 // pred_check
    _
  $region15: #{generator_forward.5} parent=0 // pred_check_branch
    %18 = sbr.rel (0) target = $region17
  $region16: #{generator_forward.5} parent=0 // pred_region
    _
  $region17: #{generator_forward.5} parent=0 // pred_fallthru
    _
  // Predicated region
  $region18: #{generator_forward.5} parent=0 // pred_check
    _
  $region19: #{generator_forward.5} parent=0 // pred_check_branch
    %20 = sbr.rel (0) target = $region21
  $region20: #{generator_forward.5} parent=0 // pred_region
    _
  $region21: #{generator_forward.5} parent=0 // pred_fallthru
    _
  // Predicated region
  $region22: #{generator_forward.5} parent=0 // pred_check
    _
  $region23: #{generator_forward.5} parent=0 // pred_check_branch
    %22 = sbr.rel (0) target = $region25
  $region24: #{generator_forward.5} parent=0 // pred_region
    _
  $region25: #{generator_forward.5} parent=0 // pred_fallthru
    _
  %v23 = vld [vmem:[%s0] sm:$0xff]
  %v24 = vld [vmem:[%s0 + $0x8] sm:$0xff]
  %v25 = vld [vmem:[%s0 + $0x10] sm:$0xff]
  %v26 = vld [vmem:[%s0 + $0x18] sm:$0xff]
  %v27 = vld [vmem:[%s0 + $0x20] sm:$0xff]
  %v28 = vld [vmem:[%s0 + $0x28] sm:$0xff]
  %v29 = vld [vmem:[%s0 + $0x30] sm:$0xff]
  %v30 = vld [vmem:[%s0 + $0x38] sm:$0xff]
  %v31 = vld [vmem:[%s0 + $0x40] sm:$0xff]
  %v32 = vld [vmem:[%s0 + $0x48] sm:$0xff]
  %v33 = vld [vmem:[%s0 + $0x50] sm:$0xff]
  %v34 = vld [vmem:[%s0 + $0x58] sm:$0xff]
  %v35 = vld [vmem:[%s0 + $0x60] sm:$0xff]
  %v36 = vld [vmem:[%s0 + $0x68] sm:$0xff]
  %v37 = vld [vmem:[%s0 + $0x70] sm:$0xff]
  %v38 = vld [vmem:[%s0 + $0x78] sm:$0xff]
  %v39 = vld [vmem:[%s0 + $0x80] sm:$0xff]
  %v40 = vld [vmem:[%s0 + $0x88] sm:$0xff]
  %v41 = vld [vmem:[%s0 + $0x90] sm:$0xff]
  %v42 = vld [vmem:[%s0 + $0x98] sm:$0xff]
  %v43 = vld [vmem:[%s1] sm:$0xff]
  %v44 = vld [vmem:[%s1 + $0x8] sm:$0xff]
  %v45 = vld [vmem:[%s1 + $0x10] sm:$0xff]
  %v46 = vld [vmem:[%s1 + $0x18] sm:$0xff]
  %v47 = vld [vmem:[%s1 + $0x20] sm:$0xff]
  %v48 = vld [vmem:[%s1 + $0x28] sm:$0xff]
  %v49 = vld [vmem:[%s1 + $0x30] sm:$0xff]
  %v50 = vld [vmem:[%s1 + $0x38] sm:$0xff]
  %v51 = vld [vmem:[%s1 + $0x40] sm:$0xff]
  %v52 = vld [vmem:[%s1 + $0x48] sm:$0xff]
  %v53 = vld [vmem:[%s1 + $0x50] sm:$0xff]
  %v54 = vld [vmem:[%s1 + $0x58] sm:$0xff]
  %v55 = vld [vmem:[%s1 + $0x60] sm:$0xff]
  %v56 = vld [vmem:[%s1 + $0x68] sm:$0xff]
  %v57 = vld [vmem:[%s1 + $0x70] sm:$0xff]
  %v58 = vld [vmem:[%s1 + $0x78] sm:$0xff]
  %v59 = vld [vmem:[%s1 + $0x80] sm:$0xff]
  %v60 = vld [vmem:[%s1 + $0x88] sm:$0xff]
  %v61 = vld [vmem:[%s1 + $0x90] sm:$0xff]
  %v62 = vld [vmem:[%s1 + $0x98] sm:$0xff]
  %v63 = vld [vmem:[%s1 + $0xa0] sm:$0xff]
  %v64 = vld [vmem:[%s1 + $0xa8] sm:$0xff]
  %v65 = vld [vmem:[%s1 + $0xb0] sm:$0xff]
  %v66 = vld [vmem:[%s1 + $0xb8] sm:$0xff]
  %v67 = vld [vmem:[%s1 + $0xc0] sm:$0xff]
  %v68 = vld [vmem:[%s1 + $0xc8] sm:$0xff]
  %v69 = vld [vmem:[%s1 + $0xd0] sm:$0xff]
  %v70 = vld [vmem:[%s1 + $0xd8] sm:$0xff]
  %v71 = vld [vmem:[%s1 + $0xe0] sm:$0xff]
  %v72 = vld [vmem:[%s1 + $0xe8] sm:$0xff]
  %v73 = vld [vmem:[%s1 + $0xf0] sm:$0xff]
  %v74 = vld [vmem:[%s1 + $0xf8] sm:$0xff]
  %v75 = vld [vmem:[%s1 + $0x100] sm:$0xff]
  %v76 = vld [vmem:[%s1 + $0x108] sm:$0xff]
  %v77 = vld [vmem:[%s1 + $0x110] sm:$0xff]
  %v78 = vld [vmem:[%s1 + $0x118] sm:$0xff]
  %v79 = vld [vmem:[%s1 + $0x120] sm:$0xff]
  %v80 = vld [vmem:[%s1 + $0x128] sm:$0xff]
  %v81 = vld [vmem:[%s1 + $0x130] sm:$0xff]
  %v82 = vld [vmem:[%s1 + $0x138] sm:$0xff]
  %v83 = vld [vmem:[%s1 + $0x140] sm:$0xff]
  %v84 = vld [vmem:[%s1 + $0x148] sm:$0xff]
  %v85 = vld [vmem:[%s1 + $0x150] sm:$0xff]
  %v86 = vld [vmem:[%s1 + $0x158] sm:$0xff]
  %v87 = vld [vmem:[%s1 + $0x160] sm:$0xff]
  %v88 = vld [vmem:[%s1 + $0x168] sm:$0xff]
  %v89 = vld [vmem:[%s1 + $0x170] sm:$0xff]
  %v90 = vld [vmem:[%s1 + $0x178] sm:$0xff]
  %v91 = vld [vmem:[%s1 + $0x180] sm:$0xff]
  %v92 = vld [vmem:[%s1 + $0x188] sm:$0xff]
  %v93 = vld [vmem:[%s1 + $0x190] sm:$0xff]
  %v94 = vld [vmem:[%s1 + $0x198] sm:$0xff]
  %v95 = vld [vmem:[%s1 + $0x1a0] sm:$0xff]
  %v96 = vld [vmem:[%s1 + $0x1a8] sm:$0xff]
  %v97 = vld [vmem:[%s1 + $0x1b0] sm:$0xff]
  %v98 = vld [vmem:[%s1 + $0x1b8] sm:$0xff]
  %v99 = vld [vmem:[%s1 + $0x1c0] sm:$0xff]
  %v100 = vld [vmem:[%s1 + $0x1c8] sm:$0xff]
  %v101 = vld [vmem:[%s1 + $0x1d0] sm:$0xff]
  %v102 = vld [vmem:[%s1 + $0x1d8] sm:$0xff]
  %v103 = vld [vmem:[%s1 + $0x1e0] sm:$0xff]
  %v104 = vld [vmem:[%s1 + $0x1e8] sm:$0xff]
  %v105 = vld [vmem:[%s1 + $0x1f0] sm:$0xff]
  %v106 = vld [vmem:[%s1 + $0x1f8] sm:$0xff]
  %v107 = vld [vmem:[%s1 + $0x200] sm:$0xff]
  %v108 = vld [vmem:[%s1 + $0x208] sm:$0xff]
  %v109 = vld [vmem:[%s1 + $0x210] sm:$0xff]
  %v110 = vld [vmem:[%s1 + $0x218] sm:$0xff]
  %v111 = vld [vmem:[%s1 + $0x220] sm:$0xff]
  %v112 = vld [vmem:[%s1 + $0x228] sm:$0xff]
  %v113 = vld [vmem:[%s1 + $0x230] sm:$0xff]
  %v114 = vld [vmem:[%s1 + $0x238] sm:$0xff]
  %vm115 = vcmask 523264
  %v117 = vsel %vm115, %v27, 0
  %v120 = vsel %vm115, %v32, 0
  %v123 = vsel %vm115, %v37, 0
  %v126 = vsel %vm115, %v42, 0
  %128 = vmatprep.subr.mxu0 0.0
  %129 = vmatpush1.msra.mxu0 %v43
  %130 = vmatprep.subr.mxu0 0.0
  %131 = vmatpush1.msra.mxu0 %v44
  %132 = vmatprep.subr.mxu0 0.0
  %133 = vmatpush1.msra.mxu0 %v45
  %134 = vmatprep.subr.mxu0 0.0
  %135 = vmatpush1.msra.mxu0 %v46
  %136 = vmatprep.subr.mxu0 0.0
  %137 = vmatpush1.msra.mxu0 %v47
  %138 = vmatprep.subr.mxu0 0.0
  %139 = vmatpush1.msra.mxu0 %v48
  %140 = vmatprep.subr.mxu0 0.0
  %141 = vmatpush1.msra.mxu0 %v49
  %142 = vmatprep.subr.mxu0 0.0
  %143 = vmatpush1.msra.mxu0 %v50
  %144 = vmatprep.subr.mxu0 0.0
  %145 = vmatpush1.msra.mxu0 %v51
  %146 = vmatprep.subr.mxu0 0.0
  %147 = vmatpush1.msra.mxu0 %v52
  %148 = vmatprep.subr.mxu0 0.0
  %149 = vmatpush1.msra.mxu0 %v53
  %150 = vmatprep.subr.mxu0 0.0
  %151 = vmatpush1.msra.mxu0 %v54
  %152 = vmatprep.subr.mxu0 0.0
  %153 = vmatpush1.msra.mxu0 %v55
  %154 = vmatprep.subr.mxu0 0.0
  %155 = vmatpush1.msra.mxu0 %v56
  %156 = vmatprep.subr.mxu0 0.0
  %157 = vmatpush1.msra.mxu0 %v57
  %158 = vmatprep.subr.mxu0 0.0
  %159 = vmatpush1.msra.mxu0 %v58
  %160 = vmatprep.subr.mxu0 0.0
  %161 = vmatpush1.msra.mxu0 %v59
  %162 = vmatprep.subr.mxu0 0.0
  %163 = vmatpush1.msra.mxu0 %v60
  %164 = vmatprep.subr.mxu0 0.0
  %165 = vmatpush1.msra.mxu0 %v61
  %166 = vmatprep.subr.mxu0 0.0
  %167 = vmatpush1.msra.mxu0 %v62
  %168 = vmatprep.subr.mxu0 0.0
  %169 = vmatpush1.msra.mxu0 %v63
  %170 = vmatprep.subr.mxu0 0.0
  %171 = vmatpush1.msra.mxu0 %v64
  %172 = vmatprep.subr.mxu0 0.0
  %173 = vmatpush1.msra.mxu0 %v65
  %174 = vmatprep.subr.mxu0 0.0
  %175 = vmatpush1.msra.mxu0 %v66
  %176 = vmatprep.subr.mxu0 0.0
  %177 = vmatpush1.msra.mxu0 %v67
  %178 = vmatprep.subr.mxu0 0.0
  %179 = vmatpush1.msra.mxu0 %v68
  %180 = vmatprep.subr.mxu0 0.0
  %181 = vmatpush1.msra.mxu0 %v69
  %182 = vmatprep.subr.mxu0 0.0
  %183 = vmatpush1.msra.mxu0 %v70
  %184 = vmatprep.subr.mxu0 0.0
  %185 = vmatpush1.msra.mxu0 %v71
  %186 = vmatprep.subr.mxu0 0.0
  %187 = vmatpush1.msra.mxu0 %v72
  %188 = vmatprep.subr.mxu0 0.0
  %189 = vmatpush1.msra.mxu0 %v73
  %190 = vmatprep.subr.mxu0 0.0
  %191 = vmatpush1.msra.mxu0 %v74
  %192 = vmatprep.mubr.f32.mxu0 %v24
  %193 = vmatmul.mubr.f32.gmra.mrb[0].mxu0 %v23
  %v194 = vpop.f32.mrb[0].mxu0
  %v195 = vadd.f32 0.0, %v194
  %v196 = vpop.f32.mrb[0].mxu0
  %197 = vmatprep.mubr.f32.mxu0 %v29
  %198 = vmatmul.mubr.f32.gmra.mrb[0].mxu0 %v28
  %v199 = vpop.f32.mrb[0].mxu0
  %v200 = vadd.f32 0.0, %v199
  %v201 = vpop.f32.mrb[0].mxu0
  %202 = vmatprep.mubr.f32.mxu0 %v34
  %203 = vmatmul.mubr.f32.gmra.mrb[0].mxu0 %v33
  %v204 = vpop.f32.mrb[0].mxu0
  %v205 = vadd.f32 0.0, %v204
  %v206 = vpop.f32.mrb[0].mxu0
  %207 = vmatprep.mubr.f32.mxu0 %v39
  %208 = vmatmul.mubr.f32.gmra.mrb[0].mxu0 %v38
  %v209 = vpop.f32.mrb[0].mxu0
  %v210 = vadd.f32 0.0, %v209
  %v211 = vpop.f32.mrb[0].mxu0
  %212 = vdwg.mxu0
  %213 = vmatprep.subr.mxu0 0.0
  %214 = vmatpush1.msra.mxu0 %v75
  %215 = vmatprep.subr.mxu0 0.0
  %216 = vmatpush1.msra.mxu0 %v76
  %217 = vmatprep.subr.mxu0 0.0
  %218 = vmatpush1.msra.mxu0 %v77
  %219 = vmatprep.subr.mxu0 0.0
  %220 = vmatpush1.msra.mxu0 %v78
  %221 = vmatprep.subr.mxu0 0.0
  %222 = vmatpush1.msra.mxu0 %v79
  %223 = vmatprep.subr.mxu0 0.0
  %224 = vmatpush1.msra.mxu0 %v80
  %225 = vmatprep.subr.mxu0 0.0
  %226 = vmatpush1.msra.mxu0 %v81
  %227 = vmatprep.subr.mxu0 0.0
  %228 = vmatpush1.msra.mxu0 %v82
  %229 = vmatprep.subr.mxu0 0.0
  %230 = vmatpush1.msra.mxu0 %v83
  %231 = vmatprep.subr.mxu0 0.0
  %232 = vmatpush1.msra.mxu0 %v84
  %233 = vmatprep.subr.mxu0 0.0
  %234 = vmatpush1.msra.mxu0 %v85
  %235 = vmatprep.subr.mxu0 0.0
  %236 = vmatpush1.msra.mxu0 %v86
  %237 = vmatprep.subr.mxu0 0.0
  %238 = vmatpush1.msra.mxu0 %v87
  %239 = vmatprep.subr.mxu0 0.0
  %240 = vmatpush1.msra.mxu0 %v88
  %241 = vmatprep.subr.mxu0 0.0
  %242 = vmatpush1.msra.mxu0 %v89
  %243 = vmatprep.subr.mxu0 0.0
  %244 = vmatpush1.msra.mxu0 %v90
  %245 = vmatprep.subr.mxu0 0.0
  %246 = vmatpush1.msra.mxu0 %v91
  %247 = vmatprep.subr.mxu0 0.0
  %248 = vmatpush1.msra.mxu0 %v92
  %249 = vmatprep.subr.mxu0 0.0
  %250 = vmatpush1.msra.mxu0 %v93
  %251 = vmatprep.subr.mxu0 0.0
  %252 = vmatpush1.msra.mxu0 %v94
  %253 = vmatprep.subr.mxu0 0.0
  %254 = vmatpush1.msra.mxu0 %v95
  %255 = vmatprep.subr.mxu0 0.0
  %256 = vmatpush1.msra.mxu0 %v96
  %257 = vmatprep.subr.mxu0 0.0
  %258 = vmatpush1.msra.mxu0 %v97
  %259 = vmatprep.subr.mxu0 0.0
  %260 = vmatpush1.msra.mxu0 %v98
  %261 = vmatprep.subr.mxu0 0.0
  %262 = vmatpush1.msra.mxu0 %v99
  %263 = vmatprep.subr.mxu0 0.0
  %264 = vmatpush1.msra.mxu0 %v100
  %265 = vmatprep.subr.mxu0 0.0
  %266 = vmatpush1.msra.mxu0 %v101
  %267 = vmatprep.subr.mxu0 0.0
  %268 = vmatpush1.msra.mxu0 %v102
  %269 = vmatprep.subr.mxu0 0.0
  %270 = vmatpush1.msra.mxu0 %v103
  %271 = vmatprep.subr.mxu0 0.0
  %272 = vmatpush1.msra.mxu0 %v104
  %273 = vmatprep.subr.mxu0 0.0
  %274 = vmatpush1.msra.mxu0 %v105
  %275 = vmatprep.subr.mxu0 0.0
  %276 = vmatpush1.msra.mxu0 %v106
  %277 = vmatprep.mubr.f32.mxu0 %v26
  %278 = vmatmul.mubr.f32.gmra.mrb[0].mxu0 %v25
  %v279 = vpop.f32.mrb[0].mxu0
  %v280 = vadd.f32 %v195, %v279
  %v281 = vpop.f32.mrb[0].mxu0
  %282 = vmatprep.mubr.f32.mxu0 %v31
  %283 = vmatmul.mubr.f32.gmra.mrb[0].mxu0 %v30
  %v284 = vpop.f32.mrb[0].mxu0
  %v285 = vadd.f32 %v200, %v284
  %v286 = vpop.f32.mrb[0].mxu0
  %287 = vmatprep.mubr.f32.mxu0 %v36
  %288 = vmatmul.mubr.f32.gmra.mrb[0].mxu0 %v35
  %v289 = vpop.f32.mrb[0].mxu0
  %v290 = vadd.f32 %v205, %v289
  %v291 = vpop.f32.mrb[0].mxu0
  %292 = vmatprep.mubr.f32.mxu0 %v41
  %293 = vmatmul.mubr.f32.gmra.mrb[0].mxu0 %v40
  %v294 = vpop.f32.mrb[0].mxu0
  %v295 = vadd.f32 %v210, %v294
  %v296 = vpop.f32.mrb[0].mxu0
  %297 = vdwg.mxu0
  %298 = vmatprep.subr.mxu0 0.0
  %299 = vmatpush1.msra.mxu0 %v107
  %300 = vmatprep.subr.mxu0 0.0
  %301 = vmatpush1.msra.mxu0 %v108
  %302 = vmatprep.subr.mxu0 0.0
  %303 = vmatpush1.msra.mxu0 %v109
  %304 = vmatprep.subr.mxu0 0.0
  %305 = vmatpush1.msra.mxu0 %v110
  %306 = vmatprep.subr.mxu0 0.0
  %307 = vmatpush1.msra.mxu0 %v111
  %308 = vmatprep.subr.mxu0 0.0
  %309 = vmatpush1.msra.mxu0 %v112
  %310 = vmatprep.subr.mxu0 0.0
  %311 = vmatpush1.msra.mxu0 %v113
  %312 = vmatprep.subr.mxu0 0.0
  %313 = vmatpush1.msra.mxu0 %v114
  %314 = vmatprep.subr.mxu0 0.0
  %315 = vmatpush1.msra.mxu0 0.0
  %316 = vmatprep.subr.mxu0 0.0
  %317 = vmatpush1.msra.mxu0 0.0
  %318 = vmatprep.subr.mxu0 0.0
  %319 = vmatpush1.msra.mxu0 0.0
  %320 = vmatprep.subr.mxu0 0.0
  %321 = vmatpush1.msra.mxu0 0.0
  %322 = vmatprep.subr.mxu0 0.0
  %323 = vmatpush1.msra.mxu0 0.0
  %324 = vmatprep.subr.mxu0 0.0
  %325 = vmatpush1.msra.mxu0 0.0
  %326 = vmatprep.subr.mxu0 0.0
  %327 = vmatpush1.msra.mxu0 0.0
  %328 = vmatprep.subr.mxu0 0.0
  %329 = vmatpush1.msra.mxu0 0.0
  %330 = vmatprep.subr.mxu0 0.0
  %331 = vmatpush1.msra.mxu0 0.0
  %332 = vmatprep.subr.mxu0 0.0
  %333 = vmatpush1.msra.mxu0 0.0
  %334 = vmatprep.subr.mxu0 0.0
  %335 = vmatpush1.msra.mxu0 0.0
  %336 = vmatprep.subr.mxu0 0.0
  %337 = vmatpush1.msra.mxu0 0.0
  %338 = vmatprep.subr.mxu0 0.0
  %339 = vmatpush1.msra.mxu0 0.0
  %340 = vmatprep.subr.mxu0 0.0
  %341 = vmatpush1.msra.mxu0 0.0
  %342 = vmatprep.subr.mxu0 0.0
  %343 = vmatpush1.msra.mxu0 0.0
  %344 = vmatprep.subr.mxu0 0.0
  %345 = vmatpush1.msra.mxu0 0.0
  %346 = vmatprep.subr.mxu0 0.0
  %347 = vmatpush1.msra.mxu0 0.0
  %348 = vmatprep.subr.mxu0 0.0
  %349 = vmatpush1.msra.mxu0 0.0
  %350 = vmatprep.subr.mxu0 0.0
  %351 = vmatpush1.msra.mxu0 0.0
  %352 = vmatprep.subr.mxu0 0.0
  %353 = vmatpush1.msra.mxu0 0.0
  %354 = vmatprep.subr.mxu0 0.0
  %355 = vmatpush1.msra.mxu0 0.0
  %356 = vmatprep.subr.mxu0 0.0
  %357 = vmatpush1.msra.mxu0 0.0
  %358 = vmatprep.subr.mxu0 0.0
  %359 = vmatpush1.msra.mxu0 0.0
  %360 = vmatprep.subr.mxu0 0.0
  %361 = vmatpush1.msra.mxu0 0.0
  %362 = vmatprep.mubr.f32.mxu0 0.0
  %363 = vmatmul.mubr.f32.gmra.mrb[0].mxu0 %v117
  %v364 = vpop.f32.mrb[0].mxu0
  %v365 = vadd.f32 %v280, %v364
  %v366 = vpop.f32.mrb[0].mxu0
  %367 = vmatprep.mubr.f32.mxu0 0.0
  %368 = vmatmul.mubr.f32.gmra.mrb[0].mxu0 %v120
  %v369 = vpop.f32.mrb[0].mxu0
  %v370 = vadd.f32 %v285, %v369
  %v371 = vpop.f32.mrb[0].mxu0
  %372 = vmatprep.mubr.f32.mxu0 0.0
  %373 = vmatmul.mubr.f32.gmra.mrb[0].mxu0 %v123
  %v374 = vpop.f32.mrb[0].mxu0
  %v375 = vadd.f32 %v290, %v374
  %v376 = vpop.f32.mrb[0].mxu0
  %377 = vmatprep.mubr.f32.mxu0 0.0
  %378 = vmatmul.mubr.f32.gmra.mrb[0].mxu0 %v126
  %v379 = vpop.f32.mrb[0].mxu0
  %v380 = vadd.f32 %v295, %v379
  %v381 = vpop.f32.mrb[0].mxu0
  %382 = vdwg.mxu0
  %v383 = vadd.f32 %v365, %v370
  %v384 = vadd.f32 %v383, %v375
  %v385 = vadd.f32 %v384, %v380
  %v386 = vrot.slane %v385, 4
  %v387 = vadd.f32 %v385, %v386
  %v388 = vrot.slane %v387, 2
  %v389 = vadd.f32 %v387, %v388
  %v390 = vrot.slane %v389, 1
  %v391 = vadd.f32 %v389, %v390
  %v392 = vmul.f32 %v365, %v365
  %v393 = vmul.f32 %v370, %v370
  %v394 = vmul.f32 %v375, %v375
  %v395 = vmul.f32 %v380, %v380
  %v396 = vadd.f32 %v392, %v393
  %v397 = vadd.f32 %v396, %v394
  %v398 = vadd.f32 %v397, %v395
  %v399 = vrot.slane %v398, 4
  %v400 = vadd.f32 %v398, %v399
  %v401 = vrot.slane %v400, 2
  %v402 = vadd.f32 %v400, %v401
  %v403 = vrot.slane %v402, 1
  %v404 = vadd.f32 %v402, %v403
  %v405 = vld [vmem:[%s2] sm:$0xff]
  %v406 = vld [vmem:[%s2 + $0x8] sm:$0xff]
  %v407 = vld [vmem:[%s2 + $0x10] sm:$0xff]
  %v408 = vld [vmem:[%s2 + $0x18] sm:$0xff]
  %v409 = vld [vmem:[%s2 + $0x20] sm:$0xff]
  %v410 = vld [vmem:[%s2 + $0x28] sm:$0xff]
  %v411 = vld [vmem:[%s2 + $0x30] sm:$0xff]
  %v412 = vld [vmem:[%s2 + $0x38] sm:$0xff]
  %v413 = vld [vmem:[%s2 + $0x40] sm:$0xff]
  %v414 = vld [vmem:[%s2 + $0x48] sm:$0xff]
  %v415 = vld [vmem:[%s2 + $0x50] sm:$0xff]
  %v416 = vld [vmem:[%s2 + $0x58] sm:$0xff]
  %v417 = vld [vmem:[%s2 + $0x60] sm:$0xff]
  %v418 = vld [vmem:[%s2 + $0x68] sm:$0xff]
  %v419 = vld [vmem:[%s2 + $0x70] sm:$0xff]
  %v420 = vld [vmem:[%s2 + $0x78] sm:$0xff]
  %421 = vmatprep.subr.mxu0 0.0
  %422 = vmatpush1.msra.mxu0 %v405
  %423 = vmatprep.subr.mxu0 0.0
  %424 = vmatpush1.msra.mxu0 %v406
  %425 = vmatprep.subr.mxu0 0.0
  %426 = vmatpush1.msra.mxu0 %v407
  %427 = vmatprep.subr.mxu0 0.0
  %428 = vmatpush1.msra.mxu0 %v408
  %429 = vmatprep.subr.mxu0 0.0
  %430 = vmatpush1.msra.mxu0 %v409
  %431 = vmatprep.subr.mxu0 0.0
  %432 = vmatpush1.msra.mxu0 %v410
  %433 = vmatprep.subr.mxu0 0.0
  %434 = vmatpush1.msra.mxu0 %v411
  %435 = vmatprep.subr.mxu0 0.0
  %436 = vmatpush1.msra.mxu0 %v412
  %437 = vmatprep.subr.mxu0 0.0
  %438 = vmatpush1.msra.mxu0 %v413
  %439 = vmatprep.subr.mxu0 0.0
  %440 = vmatpush1.msra.mxu0 %v414
  %441 = vmatprep.subr.mxu0 0.0
  %442 = vmatpush1.msra.mxu0 %v415
  %443 = vmatprep.subr.mxu0 0.0
  %444 = vmatpush1.msra.mxu0 %v416
  %445 = vmatprep.subr.mxu0 0.0
  %446 = vmatpush1.msra.mxu0 %v417
  %447 = vmatprep.subr.mxu0 0.0
  %448 = vmatpush1.msra.mxu0 %v418
  %449 = vmatprep.subr.mxu0 0.0
  %450 = vmatpush1.msra.mxu0 %v419
  %451 = vmatprep.subr.mxu0 0.0
  %452 = vmatpush1.msra.mxu0 %v420
  %453 = vmatprep.subr.mxu0 0.0
  %454 = vmatpush1.msra.mxu0 0.0
  %455 = vmatprep.subr.mxu0 0.0
  %456 = vmatpush1.msra.mxu0 0.0
  %457 = vmatprep.subr.mxu0 0.0
  %458 = vmatpush1.msra.mxu0 0.0
  %459 = vmatprep.subr.mxu0 0.0
  %460 = vmatpush1.msra.mxu0 0.0
  %461 = vmatprep.subr.mxu0 0.0
  %462 = vmatpush1.msra.mxu0 0.0
  %463 = vmatprep.subr.mxu0 0.0
  %464 = vmatpush1.msra.mxu0 0.0
  %465 = vmatprep.subr.mxu0 0.0
  %466 = vmatpush1.msra.mxu0 0.0
  %467 = vmatprep.subr.mxu0 0.0
  %468 = vmatpush1.msra.mxu0 0.0
  %469 = vmatprep.subr.mxu0 0.0
  %470 = vmatpush1.msra.mxu0 0.0
  %471 = vmatprep.subr.mxu0 0.0
  %472 = vmatpush1.msra.mxu0 0.0
  %473 = vmatprep.subr.mxu0 0.0
  %474 = vmatpush1.msra.mxu0 0.0
  %475 = vmatprep.subr.mxu0 0.0
  %476 = vmatpush1.msra.mxu0 0.0
  %477 = vmatprep.subr.mxu0 0.0
  %478 = vmatpush1.msra.mxu0 0.0
  %479 = vmatprep.subr.mxu0 0.0
  %480 = vmatpush1.msra.mxu0 0.0
  %481 = vmatprep.subr.mxu0 0.0
  %482 = vmatpush1.msra.mxu0 0.0
  %483 = vmatprep.subr.mxu0 0.0
  %484 = vmatpush1.msra.mxu0 0.0
  %485 = vmatprep.mubr.f32.mxu0 0.0
  %486 = vmatmul.mubr.f32.gmra.mrb[0].mxu0 %v391
  %v487 = vpop.f32.mrb[0].mxu0
  %v488 = vadd.f32 0.0, %v487
  %v489 = vpop.f32.mrb[0].mxu0
  %490 = vdwg.mxu0
  %491 = vmatprep.subr.mxu0 0.0
  %492 = vmatpush1.msra.mxu0 %v405
  %493 = vmatprep.subr.mxu0 0.0
  %494 = vmatpush1.msra.mxu0 %v406
  %495 = vmatprep.subr.mxu0 0.0
  %496 = vmatpush1.msra.mxu0 %v407
  %497 = vmatprep.subr.mxu0 0.0
  %498 = vmatpush1.msra.mxu0 %v408
  %499 = vmatprep.subr.mxu0 0.0
  %500 = vmatpush1.msra.mxu0 %v409
  %501 = vmatprep.subr.mxu0 0.0
  %502 = vmatpush1.msra.mxu0 %v410
  %503 = vmatprep.subr.mxu0 0.0
  %504 = vmatpush1.msra.mxu0 %v411
  %505 = vmatprep.subr.mxu0 0.0
  %506 = vmatpush1.msra.mxu0 %v412
  %507 = vmatprep.subr.mxu0 0.0
  %508 = vmatpush1.msra.mxu0 %v413
  %509 = vmatprep.subr.mxu0 0.0
  %510 = vmatpush1.msra.mxu0 %v414
  %511 = vmatprep.subr.mxu0 0.0
  %512 = vmatpush1.msra.mxu0 %v415
  %513 = vmatprep.subr.mxu0 0.0
  %514 = vmatpush1.msra.mxu0 %v416
  %515 = vmatprep.subr.mxu0 0.0
  %516 = vmatpush1.msra.mxu0 %v417
  %517 = vmatprep.subr.mxu0 0.0
  %518 = vmatpush1.msra.mxu0 %v418
  %519 = vmatprep.subr.mxu0 0.0
  %520 = vmatpush1.msra.mxu0 %v419
  %521 = vmatprep.subr.mxu0 0.0
  %522 = vmatpush1.msra.mxu0 %v420
  %523 = vmatprep.subr.mxu0 0.0
  %524 = vmatpush1.msra.mxu0 0.0
  %525 = vmatprep.subr.mxu0 0.0
  %526 = vmatpush1.msra.mxu0 0.0
  %527 = vmatprep.subr.mxu0 0.0
  %528 = vmatpush1.msra.mxu0 0.0
  %529 = vmatprep.subr.mxu0 0.0
  %530 = vmatpush1.msra.mxu0 0.0
  %531 = vmatprep.subr.mxu0 0.0
  %532 = vmatpush1.msra.mxu0 0.0
  %533 = vmatprep.subr.mxu0 0.0
  %534 = vmatpush1.msra.mxu0 0.0
  %535 = vmatprep.subr.mxu0 0.0
  %536 = vmatpush1.msra.mxu0 0.0
  %537 = vmatprep.subr.mxu0 0.0
  %538 = vmatpush1.msra.mxu0 0.0
  %539 = vmatprep.subr.mxu0 0.0
  %540 = vmatpush1.msra.mxu0 0.0
  %541 = vmatprep.subr.mxu0 0.0
  %542 = vmatpush1.msra.mxu0 0.0
  %543 = vmatprep.subr.mxu0 0.0
  %544 = vmatpush1.msra.mxu0 0.0
  %545 = vmatprep.subr.mxu0 0.0
  %546 = vmatpush1.msra.mxu0 0.0
  %547 = vmatprep.subr.mxu0 0.0
  %548 = vmatpush1.msra.mxu0 0.0
  %549 = vmatprep.subr.mxu0 0.0
  %550 = vmatpush1.msra.mxu0 0.0
  %551 = vmatprep.subr.mxu0 0.0
  %552 = vmatpush1.msra.mxu0 0.0
  %553 = vmatprep.subr.mxu0 0.0
  %554 = vmatpush1.msra.mxu0 0.0
  %555 = vmatprep.mubr.f32.mxu0 0.0
  %556 = vmatmul.mubr.f32.gmra.mrb[0].mxu0 %v404
  %v557 = vpop.f32.mrb[0].mxu0
  %v558 = vadd.f32 0.0, %v557
  %v559 = vpop.f32.mrb[0].mxu0
  %560 = vdwg.mxu0
  %v561 = vmul.f32 %v488, 0.0078125
  %v562 = vmul.f32 %v558, 0.0078125
  %v563 = vmul.f32 %v561, %v561
  %v564 = vsub.f32 %v562, %v563
  %v565 = vadd.f32 %v564, 1e-05
  %v566 = vrsqrt.pop %v565
  %v567 = vld [vmem:[%s4] sm:$0x1]
  %v568 = vmul.f32 %v567, %v566
  %v569 = vld [vmem:[%s5] sm:$0x1]
  %v570 = vmul.f32 %v561, %v568
  %v571 = vsub.f32 %v569, %v570
  %v572 = vld [vmem:[%s3] sm:$0xff]
  %v573 = vld [vmem:[%s3 + $0x8] sm:$0xff]
  %v574 = vld [vmem:[%s3 + $0x10] sm:$0xff]
  %v575 = vld [vmem:[%s3 + $0x18] sm:$0xff]
  %vm576 = vcmask 261120
  %v578 = vsel %vm576, %v568, 0
  %580 = vmatprep.subr.mxu0 0.0
  %581 = vmatpush1.msra.mxu0 %v572
  %582 = vmatprep.subr.mxu0 0.0
  %583 = vmatpush1.msra.mxu0 %v573
  %584 = vmatprep.subr.mxu0 0.0
  %585 = vmatpush1.msra.mxu0 %v574
  %586 = vmatprep.subr.mxu0 0.0
  %587 = vmatpush1.msra.mxu0 %v575
  %588 = vmatprep.subr.mxu0 0.0
  %589 = vmatpush1.msra.mxu0 0.0
  %590 = vmatprep.subr.mxu0 0.0
  %591 = vmatpush1.msra.mxu0 0.0
  %592 = vmatprep.subr.mxu0 0.0
  %593 = vmatpush1.msra.mxu0 0.0
  %594 = vmatprep.subr.mxu0 0.0
  %595 = vmatpush1.msra.mxu0 0.0
  %596 = vmatprep.subr.mxu0 0.0
  %597 = vmatpush1.msra.mxu0 0.0
  %598 = vmatprep.subr.mxu0 0.0
  %599 = vmatpush1.msra.mxu0 0.0
  %600 = vmatprep.subr.mxu0 0.0
  %601 = vmatpush1.msra.mxu0 0.0
  %602 = vmatprep.subr.mxu0 0.0
  %603 = vmatpush1.msra.mxu0 0.0
  %604 = vmatprep.subr.mxu0 0.0
  %605 = vmatpush1.msra.mxu0 0.0
  %606 = vmatprep.subr.mxu0 0.0
  %607 = vmatpush1.msra.mxu0 0.0
  %608 = vmatprep.subr.mxu0 0.0
  %609 = vmatpush1.msra.mxu0 0.0
  %610 = vmatprep.subr.mxu0 0.0
  %611 = vmatpush1.msra.mxu0 0.0
  %612 = vmatprep.subr.mxu0 0.0
  %613 = vmatpush1.msra.mxu0 0.0
  %614 = vmatprep.subr.mxu0 0.0
  %615 = vmatpush1.msra.mxu0 0.0
  %616 = vmatprep.subr.mxu0 0.0
  %617 = vmatpush1.msra.mxu0 0.0
  %618 = vmatprep.subr.mxu0 0.0
  %619 = vmatpush1.msra.mxu0 0.0
  %620 = vmatprep.subr.mxu0 0.0
  %621 = vmatpush1.msra.mxu0 0.0
  %622 = vmatprep.subr.mxu0 0.0
  %623 = vmatpush1.msra.mxu0 0.0
  %624 = vmatprep.subr.mxu0 0.0
  %625 = vmatpush1.msra.mxu0 0.0
  %626 = vmatprep.subr.mxu0 0.0
  %627 = vmatpush1.msra.mxu0 0.0
  %628 = vmatprep.subr.mxu0 0.0
  %629 = vmatpush1.msra.mxu0 0.0
  %630 = vmatprep.subr.mxu0 0.0
  %631 = vmatpush1.msra.mxu0 0.0
  %632 = vmatprep.subr.mxu0 0.0
  %633 = vmatpush1.msra.mxu0 0.0
  %634 = vmatprep.subr.mxu0 0.0
  %635 = vmatpush1.msra.mxu0 0.0
  %636 = vmatprep.subr.mxu0 0.0
  %637 = vmatpush1.msra.mxu0 0.0
  %638 = vmatprep.subr.mxu0 0.0
  %639 = vmatpush1.msra.mxu0 0.0
  %640 = vmatprep.subr.mxu0 0.0
  %641 = vmatpush1.msra.mxu0 0.0
  %642 = vmatprep.subr.mxu0 0.0
  %643 = vmatpush1.msra.mxu0 0.0
  %644 = vmatprep.mubr.f32.mxu0 0.0
  %645 = vmatmul.mubr.f32.gmra.mrb[0].mxu0 %v578
  %v646 = vpop.f32.mrb[0].mxu0
  %v647 = vadd.f32 0.0, %v646
  %v648 = vpop.f32.mrb[0].mxu0
  %649 = vdwg.mxu0
  %v651 = vsel %vm576, %v571, 0
  %653 = vmatprep.subr.mxu0 0.0
  %654 = vmatpush1.msra.mxu0 %v572
  %655 = vmatprep.subr.mxu0 0.0
  %656 = vmatpush1.msra.mxu0 %v573
  %657 = vmatprep.subr.mxu0 0.0
  %658 = vmatpush1.msra.mxu0 %v574
  %659 = vmatprep.subr.mxu0 0.0
  %660 = vmatpush1.msra.mxu0 %v575
  %661 = vmatprep.subr.mxu0 0.0
  %662 = vmatpush1.msra.mxu0 0.0
  %663 = vmatprep.subr.mxu0 0.0
  %664 = vmatpush1.msra.mxu0 0.0
  %665 = vmatprep.subr.mxu0 0.0
  %666 = vmatpush1.msra.mxu0 0.0
  %667 = vmatprep.subr.mxu0 0.0
  %668 = vmatpush1.msra.mxu0 0.0
  %669 = vmatprep.subr.mxu0 0.0
  %670 = vmatpush1.msra.mxu0 0.0
  %671 = vmatprep.subr.mxu0 0.0
  %672 = vmatpush1.msra.mxu0 0.0
  %673 = vmatprep.subr.mxu0 0.0
  %674 = vmatpush1.msra.mxu0 0.0
  %675 = vmatprep.subr.mxu0 0.0
  %676 = vmatpush1.msra.mxu0 0.0
  %677 = vmatprep.subr.mxu0 0.0
  %678 = vmatpush1.msra.mxu0 0.0
  %679 = vmatprep.subr.mxu0 0.0
  %680 = vmatpush1.msra.mxu0 0.0
  %681 = vmatprep.subr.mxu0 0.0
  %682 = vmatpush1.msra.mxu0 0.0
  %683 = vmatprep.subr.mxu0 0.0
  %684 = vmatpush1.msra.mxu0 0.0
  %685 = vmatprep.subr.mxu0 0.0
  %686 = vmatpush1.msra.mxu0 0.0
  %687 = vmatprep.subr.mxu0 0.0
  %688 = vmatpush1.msra.mxu0 0.0
  %689 = vmatprep.subr.mxu0 0.0
  %690 = vmatpush1.msra.mxu0 0.0
  %691 = vmatprep.subr.mxu0 0.0
  %692 = vmatpush1.msra.mxu0 0.0
  %693 = vmatprep.subr.mxu0 0.0
  %694 = vmatpush1.msra.mxu0 0.0
  %695 = vmatprep.subr.mxu0 0.0
  %696 = vmatpush1.msra.mxu0 0.0
  %697 = vmatprep.subr.mxu0 0.0
  %698 = vmatpush1.msra.mxu0 0.0
  %699 = vmatprep.subr.mxu0 0.0
  %700 = vmatpush1.msra.mxu0 0.0
  %701 = vmatprep.subr.mxu0 0.0
  %702 = vmatpush1.msra.mxu0 0.0
  %703 = vmatprep.subr.mxu0 0.0
  %704 = vmatpush1.msra.mxu0 0.0
  %705 = vmatprep.subr.mxu0 0.0
  %706 = vmatpush1.msra.mxu0 0.0
  %707 = vmatprep.subr.mxu0 0.0
  %708 = vmatpush1.msra.mxu0 0.0
  %709 = vmatprep.subr.mxu0 0.0
  %710 = vmatpush1.msra.mxu0 0.0
  %711 = vmatprep.subr.mxu0 0.0
  %712 = vmatpush1.msra.mxu0 0.0
  %713 = vmatprep.subr.mxu0 0.0
  %714 = vmatpush1.msra.mxu0 0.0
  %715 = vmatprep.subr.mxu0 0.0
  %716 = vmatpush1.msra.mxu0 0.0
  %717 = vmatprep.mubr.f32.mxu0 0.0
  %718 = vmatmul.mubr.f32.gmra.mrb[0].mxu0 %v651
  %v719 = vpop.f32.mrb[0].mxu0
  %v720 = vadd.f32 0.0, %v719
  %v721 = vpop.f32.mrb[0].mxu0
  %722 = vdwg.mxu0
  %v723 = vlaneseq
  %v724 = vshrl.u32 %v723, 7
  %v725 = vsub.s32 0, %v724
  %v726 = vrot.slane %v647, %v725
  %v727 = vmul.f32 %v365, %v726
  %v728 = vmul.f32 %v370, %v726
  %v729 = vmul.f32 %v375, %v726
  %v730 = vmul.f32 %v380, %v726
  %v731 = vlaneseq
  %v732 = vshrl.u32 %v731, 7
  %v733 = vsub.s32 0, %v732
  %v734 = vrot.slane %v720, %v733
  %v735 = vadd.f32 %v727, %v734
  %v736 = vadd.f32 %v728, %v734
  %v737 = vadd.f32 %v729, %v734
  %v738 = vadd.f32 %v730, %v734
  %v739 = vmax.f32 %v735, 0.0
  %v740 = vmax.f32 %v736, 0.0
  %v741 = vmax.f32 %v737, 0.0
  %v742 = vmax.f32 %v738, 0.0
  %743 = vst [vmem:[%s6] sm:$0xff] %v739
  %744 = vst [vmem:[%s6 + $0x8] sm:$0xff] %v740
  %745 = vst [vmem:[%s6 + $0x10] sm:$0xff] %v741
  %746 = vst [vmem:[%s6 + $0x18] sm:$0xff] %v742
  // Predicated region
  $region26: #{generator_forward.5} parent=0 // pred_check
    _
  $region27: #{generator_forward.5} parent=0 // pred_check_branch
    %748 = sbr.rel (0) target = $region29
  $region28: #{generator_forward.5} parent=0 // pred_region
    _
  $region29: #{generator_forward.5} parent=0 // pred_fallthru
    _
  // Predicated region
  $region30: #{generator_forward.5} parent=0 // pred_check
    _
  $region31: #{generator_forward.5} parent=0 // pred_check_branch
    %750 = sbr.rel (0) target = $region33
  $region32: #{generator_forward.5} parent=0 // pred_region
    _
  $region33: #{generator_forward.5} parent=0 // pred_fallthru
    _

// kernel: generator_forward.6
$region0: #{generator_forward.6}
  #allocation0 [shape = 'u32[]', space=smem, size = 0x4, offset = 0x4, fixed_abs, tag = 'smem constant byte address 0x4 - core index']
  #allocation1 [shape = 'u32[144,128]{1,0:T(1,128)}', space=vmem, size = 0x12000, scoped, tag = 'internal scratch']
  %s0 = inlined_call_operand.vmem [shape: f32[128,288], index: 0, kind: input, shape index: {}]
  %s1 = inlined_call_operand.vmem [shape: f32[288,64], index: 1, kind: input, shape index: {}]
  %s2 = inlined_call_operand.vmem [shape: f32[64,16], index: 2, kind: input, shape index: {}]
  %s3 = inlined_call_operand.vmem [shape: f32[16,64], index: 3, kind: input, shape index: {}]
  %s4 = inlined_call_operand.vmem [shape: f32[1,16], index: 4, kind: input, shape index: {}]
  %s5 = inlined_call_operand.vmem [shape: f32[1,16], index: 5, kind: input, shape index: {}]
  %s6 = inlined_call_operand.vmem [shape: f32[128,64], index: 6, kind: output, shape index: {}]
  %s7 = sld [smem:[#allocation0]]
  $region34: #{generator_forward.6} parent=0
    _
  %s9 = ssub.s32 1, %s7
  %s10 = scalar_select 0, %s9, %s7
  // Predicated region
  $region2: #{generator_forward.6} parent=0 // pred_check
    _
  $region3: #{generator_forward.6} parent=0 // pred_check_branch
    %12 = sbr.rel (0) target = $region5
  $region4: #{generator_forward.6} parent=0 // pred_region
    _
  $region5: #{generator_forward.6} parent=0 // pred_fallthru
    _
  // Predicated region
  $region6: #{generator_forward.6} parent=0 // pred_check
    _
  $region7: #{generator_forward.6} parent=0 // pred_check_branch
    %14 = sbr.rel (0) target = $region9
  $region8: #{generator_forward.6} parent=0 // pred_region
    _
  $region9: #{generator_forward.6} parent=0 // pred_fallthru
    _
  // Predicated region
  $region10: #{generator_forward.6} parent=0 // pred_check
    _
  $region11: #{generator_forward.6} parent=0 // pred_check_branch
    %16 = sbr.rel (0) target = $region13
  $region12: #{generator_forward.6} parent=0 // pred_region
    _
  $region13: #{generator_forward.6} parent=0 // pred_fallthru
    _
  // Predicated region
  $region14: #{generator_forward.6} parent=0 // pred_check
    _
  $region15: #{generator_forward.6} parent=0 // pred_check_branch
    %18 = sbr.rel (0) target = $region17
  $region16: #{generator_forward.6} parent=0 // pred_region
    _
  $region17: #{generator_forward.6} parent=0 // pred_fallthru
    _
  // Predicated region
  $region18: #{generator_forward.6} parent=0 // pred_check
    _
  $region19: #{generator_forward.6} parent=0 // pred_check_branch
    %20 = sbr.rel (0) target = $region21
  $region20: #{generator_forward.6} parent=0 // pred_region
    _
  $region21: #{generator_forward.6} parent=0 // pred_fallthru
    _
  // Predicated region
  $region22: #{generator_forward.6} parent=0 // pred_check
    _
  $region23: #{generator_forward.6} parent=0 // pred_check_branch
    %22 = sbr.rel (0) target = $region25
  $region24: #{generator_forward.6} parent=0 // pred_region
    _
  $region25: #{generator_forward.6} parent=0 // pred_fallthru
    _
  %v23 = vld [vmem:[%s0] sm:$0xff]
  %v24 = vld [vmem:[%s0 + $0x8] sm:$0xff]
  %v25 = vld [vmem:[%s0 + $0x10] sm:$0xff]
  %v26 = vld [vmem:[%s0 + $0x18] sm:$0xff]
  %v27 = vld [vmem:[%s0 + $0x20] sm:$0xff]
  %v28 = vld [vmem:[%s0 + $0x28] sm:$0xff]
  %v29 = vld [vmem:[%s0 + $0x30] sm:$0xff]
  %v30 = vld [vmem:[%s0 + $0x38] sm:$0xff]
  %v31 = vld [vmem:[%s0 + $0x40] sm:$0xff]
  %v32 = vld [vmem:[%s0 + $0x48] sm:$0xff]
  %v33 = vld [vmem:[%s0 + $0x50] sm:$0xff]
  %v34 = vld [vmem:[%s0 + $0x58] sm:$0xff]
  %v35 = vld [vmem:[%s0 + $0x60] sm:$0xff]
  %v36 = vld [vmem:[%s0 + $0x68] sm:$0xff]
  %v37 = vld [vmem:[%s0 + $0x70] sm:$0xff]
  %v38 = vld [vmem:[%s0 + $0x78] sm:$0xff]
  %v39 = vld [vmem:[%s0 + $0x80] sm:$0xff]
  %v40 = vld [vmem:[%s0 + $0x88] sm:$0xff]
  %v41 = vld [vmem:[%s0 + $0x90] sm:$0xff]
  %v42 = vld [vmem:[%s0 + $0x98] sm:$0xff]
  %v43 = vld [vmem:[%s0 + $0xa0] sm:$0xff]
  %v44 = vld [vmem:[%s0 + $0xa8] sm:$0xff]
  %v45 = vld [vmem:[%s0 + $0xb0] sm:$0xff]
  %v46 = vld [vmem:[%s0 + $0xb8] sm:$0xff]
  %v47 = vld [vmem:[%s0 + $0xc0] sm:$0xff]
  %v48 = vld [vmem:[%s0 + $0xc8] sm:$0xff]
  %v49 = vld [vmem:[%s0 + $0xd0] sm:$0xff]
  %v50 = vld [vmem:[%s0 + $0xd8] sm:$0xff]
  %v51 = vld [vmem:[%s0 + $0xe0] sm:$0xff]
  %v52 = vld [vmem:[%s0 + $0xe8] sm:$0xff]
  %v53 = vld [vmem:[%s0 + $0xf0] sm:$0xff]
  %v54 = vld [vmem:[%s0 + $0xf8] sm:$0xff]
  %v55 = vld [vmem:[%s0 + $0x100] sm:$0xff]
  %v56 = vld [vmem:[%s0 + $0x108] sm:$0xff]
  %v57 = vld [vmem:[%s0 + $0x110] sm:$0xff]
  %v58 = vld [vmem:[%s0 + $0x118] sm:$0xff]
  %v59 = vld [vmem:[%s0 + $0x120] sm:$0xff]
  %v60 = vld [vmem:[%s0 + $0x128] sm:$0xff]
  %v61 = vld [vmem:[%s0 + $0x130] sm:$0xff]
  %v62 = vld [vmem:[%s0 + $0x138] sm:$0xff]
  %v63 = vld [vmem:[%s0 + $0x140] sm:$0xff]
  %v64 = vld [vmem:[%s0 + $0x148] sm:$0xff]
  %v65 = vld [vmem:[%s0 + $0x150] sm:$0xff]
  %v66 = vld [vmem:[%s0 + $0x158] sm:$0xff]
  %v67 = vld [vmem:[%s0 + $0x160] sm:$0xff]
  %v68 = vld [vmem:[%s0 + $0x168] sm:$0xff]
  %v69 = vld [vmem:[%s0 + $0x170] sm:$0xff]
  %v70 = vld [vmem:[%s0 + $0x178] sm:$0xff]
  %v71 = vld [vmem:[%s1] sm:$0xff]
  %v72 = vld [vmem:[%s1 + $0x8] sm:$0xff]
  %v73 = vld [vmem:[%s1 + $0x10] sm:$0xff]
  %v74 = vld [vmem:[%s1 + $0x18] sm:$0xff]
  %v75 = vld [vmem:[%s1 + $0x20] sm:$0xff]
  %v76 = vld [vmem:[%s1 + $0x28] sm:$0xff]
  %v77 = vld [vmem:[%s1 + $0x30] sm:$0xff]
  %v78 = vld [vmem:[%s1 + $0x38] sm:$0xff]
  %v79 = vld [vmem:[%s1 + $0x40] sm:$0xff]
  %v80 = vld [vmem:[%s1 + $0x48] sm:$0xff]
  %v81 = vld [vmem:[%s1 + $0x50] sm:$0xff]
  %v82 = vld [vmem:[%s1 + $0x58] sm:$0xff]
  %v83 = vld [vmem:[%s1 + $0x60] sm:$0xff]
  %v84 = vld [vmem:[%s1 + $0x68] sm:$0xff]
  %v85 = vld [vmem:[%s1 + $0x70] sm:$0xff]
  %v86 = vld [vmem:[%s1 + $0x78] sm:$0xff]
  %v87 = vld [vmem:[%s1 + $0x80] sm:$0xff]
  %v88 = vld [vmem:[%s1 + $0x88] sm:$0xff]
  %v89 = vld [vmem:[%s1 + $0x90] sm:$0xff]
  %v90 = vld [vmem:[%s1 + $0x98] sm:$0xff]
  %v91 = vld [vmem:[%s1 + $0xa0] sm:$0xff]
  %v92 = vld [vmem:[%s1 + $0xa8] sm:$0xff]
  %v93 = vld [vmem:[%s1 + $0xb0] sm:$0xff]
  %v94 = vld [vmem:[%s1 + $0xb8] sm:$0xff]
  %v95 = vld [vmem:[%s1 + $0xc0] sm:$0xff]
  %v96 = vld [vmem:[%s1 + $0xc8] sm:$0xff]
  %v97 = vld [vmem:[%s1 + $0xd0] sm:$0xff]
  %v98 = vld [vmem:[%s1 + $0xd8] sm:$0xff]
  %v99 = vld [vmem:[%s1 + $0xe0] sm:$0xff]
  %v100 = vld [vmem:[%s1 + $0xe8] sm:$0xff]
  %v101 = vld [vmem:[%s1 + $0xf0] sm:$0xff]
  %v102 = vld [vmem:[%s1 + $0xf8] sm:$0xff]
  %v103 = vld [vmem:[%s1 + $0x100] sm:$0xff]
  %v104 = vld [vmem:[%s1 + $0x108] sm:$0xff]
  %v105 = vld [vmem:[%s1 + $0x110] sm:$0xff]
  %v106 = vld [vmem:[%s1 + $0x118] sm:$0xff]
  %vm107 = vcmask 261120
  %v109 = vsel %vm107, %v25, 0
  %v112 = vsel %vm107, %v28, 0
  %v115 = vsel %vm107, %v31, 0
  %v118 = vsel %vm107, %v34, 0
  %v121 = vsel %vm107, %v37, 0
  %v124 = vsel %vm107, %v40, 0
  %v127 = vsel %vm107, %v43, 0
  %v130 = vsel %vm107, %v46, 0
  %v133 = vsel %vm107, %v49, 0
  %v136 = vsel %vm107, %v52, 0
  %v139 = vsel %vm107, %v55, 0
  %v142 = vsel %vm107, %v58, 0
  %v145 = vsel %vm107, %v61, 0
  %v148 = vsel %vm107, %v64, 0
  %v151 = vsel %vm107, %v67, 0
  %v154 = vsel %vm107, %v70, 0
  %156 = vmatprep.subr.mxu0 0.0
  %157 = vmatpush1.msra.mxu0 %v71
  %158 = vmatprep.subr.mxu0 0.0
  %159 = vmatpush1.msra.mxu0 %v72
  %160 = vmatprep.subr.mxu0 0.0
  %161 = vmatpush1.msra.mxu0 %v73
  %162 = vmatprep.subr.mxu0 0.0
  %163 = vmatpush1.msra.mxu0 %v74
  %164 = vmatprep.subr.mxu0 0.0
  %165 = vmatpush1.msra.mxu0 %v75
  %166 = vmatprep.subr.mxu0 0.0
  %167 = vmatpush1.msra.mxu0 %v76
  %168 = vmatprep.subr.mxu0 0.0
  %169 = vmatpush1.msra.mxu0 %v77
  %170 = vmatprep.subr.mxu0 0.0
  %171 = vmatpush1.msra.mxu0 %v78
  %172 = vmatprep.subr.mxu0 0.0
  %173 = vmatpush1.msra.mxu0 %v79
  %174 = vmatprep.subr.mxu0 0.0
  %175 = vmatpush1.msra.mxu0 %v80
  %176 = vmatprep.subr.mxu0 0.0
  %177 = vmatpush1.msra.mxu0 %v81
  %178 = vmatprep.subr.mxu0 0.0
  %179 = vmatpush1.msra.mxu0 %v82
  %180 = vmatprep.subr.mxu0 0.0
  %181 = vmatpush1.msra.mxu0 %v83
  %182 = vmatprep.subr.mxu0 0.0
  %183 = vmatpush1.msra.mxu0 %v84
  %184 = vmatprep.subr.mxu0 0.0
  %185 = vmatpush1.msra.mxu0 %v85
  %186 = vmatprep.subr.mxu0 0.0
  %187 = vmatpush1.msra.mxu0 %v86
  %188 = vmatprep.subr.mxu0 0.0
  %189 = vmatpush1.msra.mxu0 %v87
  %190 = vmatprep.subr.mxu0 0.0
  %191 = vmatpush1.msra.mxu0 %v88
  %192 = vmatprep.subr.mxu0 0.0
  %193 = vmatpush1.msra.mxu0 %v89
  %194 = vmatprep.subr.mxu0 0.0
  %195 = vmatpush1.msra.mxu0 %v90
  %196 = vmatprep.subr.mxu0 0.0
  %197 = vmatpush1.msra.mxu0 %v91
  %198 = vmatprep.subr.mxu0 0.0
  %199 = vmatpush1.msra.mxu0 %v92
  %200 = vmatprep.subr.mxu0 0.0
  %201 = vmatpush1.msra.mxu0 %v93
  %202 = vmatprep.subr.mxu0 0.0
  %203 = vmatpush1.msra.mxu0 %v94
  %204 = vmatprep.subr.mxu0 0.0
  %205 = vmatpush1.msra.mxu0 %v95
  %206 = vmatprep.subr.mxu0 0.0
  %207 = vmatpush1.msra.mxu0 %v96
  %208 = vmatprep.subr.mxu0 0.0
  %209 = vmatpush1.msra.mxu0 %v97
  %210 = vmatprep.subr.mxu0 0.0
  %211 = vmatpush1.msra.mxu0 %v98
  %212 = vmatprep.subr.mxu0 0.0
  %213 = vmatpush1.msra.mxu0 %v99
  %214 = vmatprep.subr.mxu0 0.0
  %215 = vmatpush1.msra.mxu0 %v100
  %216 = vmatprep.subr.mxu0 0.0
  %217 = vmatpush1.msra.mxu0 %v101
  %218 = vmatprep.subr.mxu0 0.0
  %219 = vmatpush1.msra.mxu0 %v102
  %220 = vmatprep.mubr.f32.mxu0 %v24
  %221 = vmatmul.mubr.f32.gmra.mrb[0].mxu0 %v23
  %v222 = vpop.f32.mrb[0].mxu0
  %v223 = vadd.f32 0.0, %v222
  %v224 = vpop.f32.mrb[0].mxu0
  %225 = vmatprep.mubr.f32.mxu0 %v27
  %226 = vmatmul.mubr.f32.gmra.mrb[0].mxu0 %v26
  %v227 = vpop.f32.mrb[0].mxu0
  %v228 = vadd.f32 0.0, %v227
  %v229 = vpop.f32.mrb[0].mxu0
  %230 = vmatprep.mubr.f32.mxu0 %v30
  %231 = vmatmul.mubr.f32.gmra.mrb[0].mxu0 %v29
  %v232 = vpop.f32.mrb[0].mxu0
  %v233 = vadd.f32 0.0, %v232
  %v234 = vpop.f32.mrb[0].mxu0
  %235 = vmatprep.mubr.f32.mxu0 %v33
  %236 = vmatmul.mubr.f32.gmra.mrb[0].mxu0 %v32
  %v237 = vpop.f32.mrb[0].mxu0
  %v238 = vadd.f32 0.0, %v237
  %v239 = vpop.f32.mrb[0].mxu0
  %240 = vmatprep.mubr.f32.mxu0 %v36
  %241 = vmatmul.mubr.f32.gmra.mrb[0].mxu0 %v35
  %v242 = vpop.f32.mrb[0].mxu0
  %v243 = vadd.f32 0.0, %v242
  %v244 = vpop.f32.mrb[0].mxu0
  %245 = vmatprep.mubr.f32.mxu0 %v39
  %246 = vmatmul.mubr.f32.gmra.mrb[0].mxu0 %v38
  %v247 = vpop.f32.mrb[0].mxu0
  %v248 = vadd.f32 0.0, %v247
  %v249 = vpop.f32.mrb[0].mxu0
  %250 = vmatprep.mubr.f32.mxu0 %v42
  %251 = vmatmul.mubr.f32.gmra.mrb[0].mxu0 %v41
  %v252 = vpop.f32.mrb[0].mxu0
  %v253 = vadd.f32 0.0, %v252
  %v254 = vpop.f32.mrb[0].mxu0
  %255 = vmatprep.mubr.f32.mxu0 %v45
  %256 = vmatmul.mubr.f32.gmra.mrb[0].mxu0 %v44
  %v257 = vpop.f32.mrb[0].mxu0
  %v258 = vadd.f32 0.0, %v257
  %v259 = vpop.f32.mrb[0].mxu0
  %260 = vmatprep.mubr.f32.mxu0 %v48
  %261 = vmatmul.mubr.f32.gmra.mrb[0].mxu0 %v47
  %v262 = vpop.f32.mrb[0].mxu0
  %v263 = vadd.f32 0.0, %v262
  %v264 = vpop.f32.mrb[0].mxu0
  %265 = vmatprep.mubr.f32.mxu0 %v51
  %266 = vmatmul.mubr.f32.gmra.mrb[0].mxu0 %v50
  %v267 = vpop.f32.mrb[0].mxu0
  %v268 = vadd.f32 0.0, %v267
  %v269 = vpop.f32.mrb[0].mxu0
  %270 = vmatprep.mubr.f32.mxu0 %v54
  %271 = vmatmul.mubr.f32.gmra.mrb[0].mxu0 %v53
  %v272 = vpop.f32.mrb[0].mxu0
  %v273 = vadd.f32 0.0, %v272
  %v274 = vpop.f32.mrb[0].mxu0
  %275 = vmatprep.mubr.f32.mxu0 %v57
  %276 = vmatmul.mubr.f32.gmra.mrb[0].mxu0 %v56
  %v277 = vpop.f32.mrb[0].mxu0
  %v278 = vadd.f32 0.0, %v277
  %v279 = vpop.f32.mrb[0].mxu0
  %280 = vmatprep.mubr.f32.mxu0 %v60
  %281 = vmatmul.mubr.f32.gmra.mrb[0].mxu0 %v59
  %v282 = vpop.f32.mrb[0].mxu0
  %v283 = vadd.f32 0.0, %v282
  %v284 = vpop.f32.mrb[0].mxu0
  %285 = vmatprep.mubr.f32.mxu0 %v63
  %286 = vmatmul.mubr.f32.gmra.mrb[0].mxu0 %v62
  %v287 = vpop.f32.mrb[0].mxu0
  %v288 = vadd.f32 0.0, %v287
  %v289 = vpop.f32.mrb[0].mxu0
  %290 = vmatprep.mubr.f32.mxu0 %v66
  %291 = vmatmul.mubr.f32.gmra.mrb[0].mxu0 %v65
  %v292 = vpop.f32.mrb[0].mxu0
  %v293 = vadd.f32 0.0, %v292
  %v294 = vpop.f32.mrb[0].mxu0
  %295 = vmatprep.mubr.f32.mxu0 %v69
  %296 = vmatmul.mubr.f32.gmra.mrb[0].mxu0 %v68
  %v297 = vpop.f32.mrb[0].mxu0
  %v298 = vadd.f32 0.0, %v297
  %v299 = vpop.f32.mrb[0].mxu0
  %300 = vdwg.mxu0
  %301 = vmatprep.subr.mxu0 0.0
  %302 = vmatpush1.msra.mxu0 %v103
  %303 = vmatprep.subr.mxu0 0.0
  %304 = vmatpush1.msra.mxu0 %v104
  %305 = vmatprep.subr.mxu0 0.0
  %306 = vmatpush1.msra.mxu0 %v105
  %307 = vmatprep.subr.mxu0 0.0
  %308 = vmatpush1.msra.mxu0 %v106
  %309 = vmatprep.subr.mxu0 0.0
  %310 = vmatpush1.msra.mxu0 0.0
  %311 = vmatprep.subr.mxu0 0.0
  %312 = vmatpush1.msra.mxu0 0.0
  %313 = vmatprep.subr.mxu0 0.0
  %314 = vmatpush1.msra.mxu0 0.0
  %315 = vmatprep.subr.mxu0 0.0
  %316 = vmatpush1.msra.mxu0 0.0
  %317 = vmatprep.subr.mxu0 0.0
  %318 = vmatpush1.msra.mxu0 0.0
  %319 = vmatprep.subr.mxu0 0.0
  %320 = vmatpush1.msra.mxu0 0.0
  %321 = vmatprep.subr.mxu0 0.0
  %322 = vmatpush1.msra.mxu0 0.0
  %323 = vmatprep.subr.mxu0 0.0
  %324 = vmatpush1.msra.mxu0 0.0
  %325 = vmatprep.subr.mxu0 0.0
  %326 = vmatpush1.msra.mxu0 0.0
  %327 = vmatprep.subr.mxu0 0.0
  %328 = vmatpush1.msra.mxu0 0.0
  %329 = vmatprep.subr.mxu0 0.0
  %330 = vmatpush1.msra.mxu0 0.0
  %331 = vmatprep.subr.mxu0 0.0
  %332 = vmatpush1.msra.mxu0 0.0
  %333 = vmatprep.subr.mxu0 0.0
  %334 = vmatpush1.msra.mxu0 0.0
  %335 = vmatprep.subr.mxu0 0.0
  %336 = vmatpush1.msra.mxu0 0.0
  %337 = vmatprep.subr.mxu0 0.0
  %338 = vmatpush1.msra.mxu0 0.0
  %339 = vmatprep.subr.mxu0 0.0
  %340 = vmatpush1.msra.mxu0 0.0
  %341 = vmatprep.subr.mxu0 0.0
  %342 = vmatpush1.msra.mxu0 0.0
  %343 = vmatprep.subr.mxu0 0.0
  %344 = vmatpush1.msra.mxu0 0.0
  %345 = vmatprep.subr.mxu0 0.0
  %346 = vmatpush1.msra.mxu0 0.0
  %347 = vmatprep.subr.mxu0 0.0
  %348 = vmatpush1.msra.mxu0 0.0
  %349 = vmatprep.subr.mxu0 0.0
  %350 = vmatpush1.msra.mxu0 0.0
  %351 = vmatprep.subr.mxu0 0.0
  %352 = vmatpush1.msra.mxu0 0.0
  %353 = vmatprep.subr.mxu0 0.0
  %354 = vmatpush1.msra.mxu0 0.0
  %355 = vmatprep.subr.mxu0 0.0
  %356 = vmatpush1.msra.mxu0 0.0
  %357 = vmatprep.subr.mxu0 0.0
  %358 = vmatpush1.msra.mxu0 0.0
  %359 = vmatprep.subr.mxu0 0.0
  %360 = vmatpush1.msra.mxu0 0.0
  %361 = vmatprep.subr.mxu0 0.0
  %362 = vmatpush1.msra.mxu0 0.0
  %363 = vmatprep.subr.mxu0 0.0
  %364 = vmatpush1.msra.mxu0 0.0
  %365 = vmatprep.mubr.f32.mxu0 0.0
  %366 = vmatmul.mubr.f32.gmra.mrb[0].mxu0 %v109
  %v367 = vpop.f32.mrb[0].mxu0
  %v368 = vadd.f32 %v223, %v367
  %v369 = vpop.f32.mrb[0].mxu0
  %370 = vmatprep.mubr.f32.mxu0 0.0
  %371 = vmatmul.mubr.f32.gmra.mrb[0].mxu0 %v112
  %v372 = vpop.f32.mrb[0].mxu0
  %v373 = vadd.f32 %v228, %v372
  %v374 = vpop.f32.mrb[0].mxu0
  %375 = vmatprep.mubr.f32.mxu0 0.0
  %376 = vmatmul.mubr.f32.gmra.mrb[0].mxu0 %v115
  %v377 = vpop.f32.mrb[0].mxu0
  %v378 = vadd.f32 %v233, %v377
  %v379 = vpop.f32.mrb[0].mxu0
  %380 = vmatprep.mubr.f32.mxu0 0.0
  %381 = vmatmul.mubr.f32.gmra.mrb[0].mxu0 %v118
  %v382 = vpop.f32.mrb[0].mxu0
  %v383 = vadd.f32 %v238, %v382
  %v384 = vpop.f32.mrb[0].mxu0
  %385 = vmatprep.mubr.f32.mxu0 0.0
  %386 = vmatmul.mubr.f32.gmra.mrb[0].mxu0 %v121
  %v387 = vpop.f32.mrb[0].mxu0
  %v388 = vadd.f32 %v243, %v387
  %v389 = vpop.f32.mrb[0].mxu0
  %390 = vmatprep.mubr.f32.mxu0 0.0
  %391 = vmatmul.mubr.f32.gmra.mrb[0].mxu0 %v124
  %v392 = vpop.f32.mrb[0].mxu0
  %v393 = vadd.f32 %v248, %v392
  %v394 = vpop.f32.mrb[0].mxu0
  %395 = vmatprep.mubr.f32.mxu0 0.0
  %396 = vmatmul.mubr.f32.gmra.mrb[0].mxu0 %v127
  %v397 = vpop.f32.mrb[0].mxu0
  %v398 = vadd.f32 %v253, %v397
  %v399 = vpop.f32.mrb[0].mxu0
  %400 = vmatprep.mubr.f32.mxu0 0.0
  %401 = vmatmul.mubr.f32.gmra.mrb[0].mxu0 %v130
  %v402 = vpop.f32.mrb[0].mxu0
  %v403 = vadd.f32 %v258, %v402
  %v404 = vpop.f32.mrb[0].mxu0
  %405 = vmatprep.mubr.f32.mxu0 0.0
  %406 = vmatmul.mubr.f32.gmra.mrb[0].mxu0 %v133
  %v407 = vpop.f32.mrb[0].mxu0
  %v408 = vadd.f32 %v263, %v407
  %v409 = vpop.f32.mrb[0].mxu0
  %410 = vmatprep.mubr.f32.mxu0 0.0
  %411 = vmatmul.mubr.f32.gmra.mrb[0].mxu0 %v136
  %v412 = vpop.f32.mrb[0].mxu0
  %v413 = vadd.f32 %v268, %v412
  %v414 = vpop.f32.mrb[0].mxu0
  %415 = vmatprep.mubr.f32.mxu0 0.0
  %416 = vmatmul.mubr.f32.gmra.mrb[0].mxu0 %v139
  %v417 = vpop.f32.mrb[0].mxu0
  %v418 = vadd.f32 %v273, %v417
  %v419 = vpop.f32.mrb[0].mxu0
  %420 = vmatprep.mubr.f32.mxu0 0.0
  %421 = vmatmul.mubr.f32.gmra.mrb[0].mxu0 %v142
  %v422 = vpop.f32.mrb[0].mxu0
  %v423 = vadd.f32 %v278, %v422
  %v424 = vpop.f32.mrb[0].mxu0
  %425 = vmatprep.mubr.f32.mxu0 0.0
  %426 = vmatmul.mubr.f32.gmra.mrb[0].mxu0 %v145
  %v427 = vpop.f32.mrb[0].mxu0
  %v428 = vadd.f32 %v283, %v427
  %v429 = vpop.f32.mrb[0].mxu0
  %430 = vmatprep.mubr.f32.mxu0 0.0
  %431 = vmatmul.mubr.f32.gmra.mrb[0].mxu0 %v148
  %v432 = vpop.f32.mrb[0].mxu0
  %v433 = vadd.f32 %v288, %v432
  %v434 = vpop.f32.mrb[0].mxu0
  %435 = vmatprep.mubr.f32.mxu0 0.0
  %436 = vmatmul.mubr.f32.gmra.mrb[0].mxu0 %v151
  %v437 = vpop.f32.mrb[0].mxu0
  %v438 = vadd.f32 %v293, %v437
  %v439 = vpop.f32.mrb[0].mxu0
  %440 = vmatprep.mubr.f32.mxu0 0.0
  %441 = vmatmul.mubr.f32.gmra.mrb[0].mxu0 %v154
  %v442 = vpop.f32.mrb[0].mxu0
  %v443 = vadd.f32 %v298, %v442
  %v444 = vpop.f32.mrb[0].mxu0
  %445 = vdwg.mxu0
  %vm446 = vcmask 523264
  %v447 = vsel %vm446, %v368, 0.0
  %v448 = vsel %vm446, %v373, 0.0
  %v449 = vadd.f32 %v447, %v448
  %v450 = vsel %vm446, %v378, 0.0
  %v451 = vadd.f32 %v449, %v450
  %v452 = vsel %vm446, %v383, 0.0
  %v453 = vadd.f32 %v451, %v452
  %v454 = vsel %vm446, %v388, 0.0
  %v455 = vadd.f32 %v453, %v454
  %v456 = vsel %vm446, %v393, 0.0
  %v457 = vadd.f32 %v455, %v456
  %v458 = vsel %vm446, %v398, 0.0
  %v459 = vadd.f32 %v457, %v458
  %v460 = vsel %vm446, %v403, 0.0
  %v461 = vadd.f32 %v459, %v460
  %v462 = vsel %vm446, %v408, 0.0
  %v463 = vadd.f32 %v461, %v462
  %v464 = vsel %vm446, %v413, 0.0
  %v465 = vadd.f32 %v463, %v464
  %v466 = vsel %vm446, %v418, 0.0
  %v467 = vadd.f32 %v465, %v466
  %v468 = vsel %vm446, %v423, 0.0
  %v469 = vadd.f32 %v467, %v468
  %v470 = vsel %vm446, %v428, 0.0
  %v471 = vadd.f32 %v469, %v470
  %v472 = vsel %vm446, %v433, 0.0
  %v473 = vadd.f32 %v471, %v472
  %v474 = vsel %vm446, %v438, 0.0
  %v475 = vadd.f32 %v473, %v474
  %v476 = vsel %vm446, %v443, 0.0
  %v477 = vadd.f32 %v475, %v476
  %v478 = vrot.slane %v477, 4
  %v479 = vadd.f32 %v477, %v478
  %v480 = vrot.slane %v479, 2
  %v481 = vadd.f32 %v479, %v480
  %v482 = vrot.slane %v481, 1
  %v483 = vadd.f32 %v481, %v482
  %v484 = vmul.f32 %v368, %v368
  %v485 = vmul.f32 %v373, %v373
  %v486 = vmul.f32 %v378, %v378
  %v487 = vmul.f32 %v383, %v383
  %v488 = vmul.f32 %v388, %v388
  %v489 = vmul.f32 %v393, %v393
  %v490 = vmul.f32 %v398, %v398
  %v491 = vmul.f32 %v403, %v403
  %v492 = vmul.f32 %v408, %v408
  %v493 = vmul.f32 %v413, %v413
  %v494 = vmul.f32 %v418, %v418
  %v495 = vmul.f32 %v423, %v423
  %v496 = vmul.f32 %v428, %v428
  %v497 = vmul.f32 %v433, %v433
  %v498 = vmul.f32 %v438, %v438
  %v499 = vmul.f32 %v443, %v443
  %v500 = vsel %vm446, %v484, 0.0
  %v501 = vsel %vm446, %v485, 0.0
  %v502 = vadd.f32 %v500, %v501
  %v503 = vsel %vm446, %v486, 0.0
  %v504 = vadd.f32 %v502, %v503
  %v505 = vsel %vm446, %v487, 0.0
  %v506 = vadd.f32 %v504, %v505
  %v507 = vsel %vm446, %v488, 0.0
  %v508 = vadd.f32 %v506, %v507
  %v509 = vsel %vm446, %v489, 0.0
  %v510 = vadd.f32 %v508, %v509
  %v511 = vsel %vm446, %v490, 0.0
  %v512 = vadd.f32 %v510, %v511
  %v513 = vsel %vm446, %v491, 0.0
  %v514 = vadd.f32 %v512, %v513
  %v515 = vsel %vm446, %v492, 0.0
  %v516 = vadd.f32 %v514, %v515
  %v517 = vsel %vm446, %v493, 0.0
  %v518 = vadd.f32 %v516, %v517
  %v519 = vsel %vm446, %v494, 0.0
  %v520 = vadd.f32 %v518, %v519
  %v521 = vsel %vm446, %v495, 0.0
  %v522 = vadd.f32 %v520, %v521
  %v523 = vsel %vm446, %v496, 0.0
  %v524 = vadd.f32 %v522, %v523
  %v525 = vsel %vm446, %v497, 0.0
  %v526 = vadd.f32 %v524, %v525
  %v527 = vsel %vm446, %v498, 0.0
  %v528 = vadd.f32 %v526, %v527
  %v529 = vsel %vm446, %v499, 0.0
  %v530 = vadd.f32 %v528, %v529
  %v531 = vrot.slane %v530, 4
  %v532 = vadd.f32 %v530, %v531
  %v533 = vrot.slane %v532, 2
  %v534 = vadd.f32 %v532, %v533
  %v535 = vrot.slane %v534, 1
  %v536 = vadd.f32 %v534, %v535
  %v537 = vld [vmem:[%s2] sm:$0xff]
  %v538 = vld [vmem:[%s2 + $0x8] sm:$0xff]
  %v539 = vld [vmem:[%s2 + $0x10] sm:$0xff]
  %v540 = vld [vmem:[%s2 + $0x18] sm:$0xff]
  %v541 = vld [vmem:[%s2 + $0x20] sm:$0xff]
  %v542 = vld [vmem:[%s2 + $0x28] sm:$0xff]
  %v543 = vld [vmem:[%s2 + $0x30] sm:$0xff]
  %v544 = vld [vmem:[%s2 + $0x38] sm:$0xff]
  %v546 = vsel %vm446, %v483, 0
  %548 = vmatprep.subr.mxu0 0.0
  %549 = vmatpush1.msra.mxu0 %v537
  %550 = vmatprep.subr.mxu0 0.0
  %551 = vmatpush1.msra.mxu0 %v538
  %552 = vmatprep.subr.mxu0 0.0
  %553 = vmatpush1.msra.mxu0 %v539
  %554 = vmatprep.subr.mxu0 0.0
  %555 = vmatpush1.msra.mxu0 %v540
  %556 = vmatprep.subr.mxu0 0.0
  %557 = vmatpush1.msra.mxu0 %v541
  %558 = vmatprep.subr.mxu0 0.0
  %559 = vmatpush1.msra.mxu0 %v542
  %560 = vmatprep.subr.mxu0 0.0
  %561 = vmatpush1.msra.mxu0 %v543
  %562 = vmatprep.subr.mxu0 0.0
  %563 = vmatpush1.msra.mxu0 %v544
  %564 = vmatprep.subr.mxu0 0.0
  %565 = vmatpush1.msra.mxu0 0.0
  %566 = vmatprep.subr.mxu0 0.0
  %567 = vmatpush1.msra.mxu0 0.0
  %568 = vmatprep.subr.mxu0 0.0
  %569 = vmatpush1.msra.mxu0 0.0
  %570 = vmatprep.subr.mxu0 0.0
  %571 = vmatpush1.msra.mxu0 0.0
  %572 = vmatprep.subr.mxu0 0.0
  %573 = vmatpush1.msra.mxu0 0.0
  %574 = vmatprep.subr.mxu0 0.0
  %575 = vmatpush1.msra.mxu0 0.0
  %576 = vmatprep.subr.mxu0 0.0
  %577 = vmatpush1.msra.mxu0 0.0
  %578 = vmatprep.subr.mxu0 0.0
  %579 = vmatpush1.msra.mxu0 0.0
  %580 = vmatprep.subr.mxu0 0.0
  %581 = vmatpush1.msra.mxu0 0.0
  %582 = vmatprep.subr.mxu0 0.0
  %583 = vmatpush1.msra.mxu0 0.0
  %584 = vmatprep.subr.mxu0 0.0
  %585 = vmatpush1.msra.mxu0 0.0
  %586 = vmatprep.subr.mxu0 0.0
  %587 = vmatpush1.msra.mxu0 0.0
  %588 = vmatprep.subr.mxu0 0.0
  %589 = vmatpush1.msra.mxu0 0.0
  %590 = vmatprep.subr.mxu0 0.0
  %591 = vmatpush1.msra.mxu0 0.0
  %592 = vmatprep.subr.mxu0 0.0
  %593 = vmatpush1.msra.mxu0 0.0
  %594 = vmatprep.subr.mxu0 0.0
  %595 = vmatpush1.msra.mxu0 0.0
  %596 = vmatprep.subr.mxu0 0.0
  %597 = vmatpush1.msra.mxu0 0.0
  %598 = vmatprep.subr.mxu0 0.0
  %599 = vmatpush1.msra.mxu0 0.0
  %600 = vmatprep.subr.mxu0 0.0
  %601 = vmatpush1.msra.mxu0 0.0
  %602 = vmatprep.subr.mxu0 0.0
  %603 = vmatpush1.msra.mxu0 0.0
  %604 = vmatprep.subr.mxu0 0.0
  %605 = vmatpush1.msra.mxu0 0.0
  %606 = vmatprep.subr.mxu0 0.0
  %607 = vmatpush1.msra.mxu0 0.0
  %608 = vmatprep.subr.mxu0 0.0
  %609 = vmatpush1.msra.mxu0 0.0
  %610 = vmatprep.subr.mxu0 0.0
  %611 = vmatpush1.msra.mxu0 0.0
  %612 = vmatprep.mubr.f32.mxu0 0.0
  %613 = vmatmul.mubr.f32.gmra.mrb[0].mxu0 %v546
  %v614 = vpop.f32.mrb[0].mxu0
  %v615 = vadd.f32 0.0, %v614
  %v616 = vpop.f32.mrb[0].mxu0
  %617 = vdwg.mxu0
  %v619 = vsel %vm446, %v536, 0
  %621 = vmatprep.subr.mxu0 0.0
  %622 = vmatpush1.msra.mxu0 %v537
  %623 = vmatprep.subr.mxu0 0.0
  %624 = vmatpush1.msra.mxu0 %v538
  %625 = vmatprep.subr.mxu0 0.0
  %626 = vmatpush1.msra.mxu0 %v539
  %627 = vmatprep.subr.mxu0 0.0
  %628 = vmatpush1.msra.mxu0 %v540
  %629 = vmatprep.subr.mxu0 0.0
  %630 = vmatpush1.msra.mxu0 %v541
  %631 = vmatprep.subr.mxu0 0.0
  %632 = vmatpush1.msra.mxu0 %v542
  %633 = vmatprep.subr.mxu0 0.0
  %634 = vmatpush1.msra.mxu0 %v543
  %635 = vmatprep.subr.mxu0 0.0
  %636 = vmatpush1.msra.mxu0 %v544
  %637 = vmatprep.subr.mxu0 0.0
  %638 = vmatpush1.msra.mxu0 0.0
  %639 = vmatprep.subr.mxu0 0.0
  %640 = vmatpush1.msra.mxu0 0.0
  %641 = vmatprep.subr.mxu0 0.0
  %642 = vmatpush1.msra.mxu0 0.0
  %643 = vmatprep.subr.mxu0 0.0
  %644 = vmatpush1.msra.mxu0 0.0
  %645 = vmatprep.subr.mxu0 0.0
  %646 = vmatpush1.msra.mxu0 0.0
  %647 = vmatprep.subr.mxu0 0.0
  %648 = vmatpush1.msra.mxu0 0.0
  %649 = vmatprep.subr.mxu0 0.0
  %650 = vmatpush1.msra.mxu0 0.0
  %651 = vmatprep.subr.mxu0 0.0
  %652 = vmatpush1.msra.mxu0 0.0
  %653 = vmatprep.subr.mxu0 0.0
  %654 = vmatpush1.msra.mxu0 0.0
  %655 = vmatprep.subr.mxu0 0.0
  %656 = vmatpush1.msra.mxu0 0.0
  %657 = vmatprep.subr.mxu0 0.0
  %658 = vmatpush1.msra.mxu0 0.0
  %659 = vmatprep.subr.mxu0 0.0
  %660 = vmatpush1.msra.mxu0 0.0
  %661 = vmatprep.subr.mxu0 0.0
  %662 = vmatpush1.msra.mxu0 0.0
  %663 = vmatprep.subr.mxu0 0.0
  %664 = vmatpush1.msra.mxu0 0.0
  %665 = vmatprep.subr.mxu0 0.0
  %666 = vmatpush1.msra.mxu0 0.0
  %667 = vmatprep.subr.mxu0 0.0
  %668 = vmatpush1.msra.mxu0 0.0
  %669 = vmatprep.subr.mxu0 0.0
  %670 = vmatpush1.msra.mxu0 0.0
  %671 = vmatprep.subr.mxu0 0.0
  %672 = vmatpush1.msra.mxu0 0.0
  %673 = vmatprep.subr.mxu0 0.0
  %674 = vmatpush1.msra.mxu0 0.0
  %675 = vmatprep.subr.mxu0 0.0
  %676 = vmatpush1.msra.mxu0 0.0
  %677 = vmatprep.subr.mxu0 0.0
  %678 = vmatpush1.msra.mxu0 0.0
  %679 = vmatprep.subr.mxu0 0.0
  %680 = vmatpush1.msra.mxu0 0.0
  %681 = vmatprep.subr.mxu0 0.0
  %682 = vmatpush1.msra.mxu0 0.0
  %683 = vmatprep.subr.mxu0 0.0
  %684 = vmatpush1.msra.mxu0 0.0
  %685 = vmatprep.mubr.f32.mxu0 0.0
  %686 = vmatmul.mubr.f32.gmra.mrb[0].mxu0 %v619
  %v687 = vpop.f32.mrb[0].mxu0
  %v688 = vadd.f32 0.0, %v687
  %v689 = vpop.f32.mrb[0].mxu0
  %690 = vdwg.mxu0
  %v691 = vmul.f32 %v615, 0.001953125
  %v692 = vmul.f32 %v688, 0.001953125
  %v693 = vmul.f32 %v691, %v691
  %v694 = vsub.f32 %v692, %v693
  %v695 = vadd.f32 %v694, 1e-05
  %v696 = vrsqrt.pop %v695
  %v697 = vld [vmem:[%s4] sm:$0x1]
  %v698 = vmul.f32 %v697, %v696
  %v699 = vld [vmem:[%s5] sm:$0x1]
  %v700 = vmul.f32 %v691, %v698
  %v701 = vsub.f32 %v699, %v700
  %v702 = vld [vmem:[%s3] sm:$0xff]
  %v703 = vld [vmem:[%s3 + $0x8] sm:$0xff]
  %vm704 = vcmask 130048
  %v706 = vsel %vm704, %v698, 0
  %708 = vmatprep.subr.mxu0 0.0
  %709 = vmatpush1.msra.mxu0 %v702
  %710 = vmatprep.subr.mxu0 0.0
  %711 = vmatpush1.msra.mxu0 %v703
  %712 = vmatprep.subr.mxu0 0.0
  %713 = vmatpush1.msra.mxu0 0.0
  %714 = vmatprep.subr.mxu0 0.0
  %715 = vmatpush1.msra.mxu0 0.0
  %716 = vmatprep.subr.mxu0 0.0
  %717 = vmatpush1.msra.mxu0 0.0
  %718 = vmatprep.subr.mxu0 0.0
  %719 = vmatpush1.msra.mxu0 0.0
  %720 = vmatprep.subr.mxu0 0.0
  %721 = vmatpush1.msra.mxu0 0.0
  %722 = vmatprep.subr.mxu0 0.0
  %723 = vmatpush1.msra.mxu0 0.0
  %724 = vmatprep.subr.mxu0 0.0
  %725 = vmatpush1.msra.mxu0 0.0
  %726 = vmatprep.subr.mxu0 0.0
  %727 = vmatpush1.msra.mxu0 0.0
  %728 = vmatprep.subr.mxu0 0.0
  %729 = vmatpush1.msra.mxu0 0.0
  %730 = vmatprep.subr.mxu0 0.0
  %731 = vmatpush1.msra.mxu0 0.0
  %732 = vmatprep.subr.mxu0 0.0
  %733 = vmatpush1.msra.mxu0 0.0
  %734 = vmatprep.subr.mxu0 0.0
  %735 = vmatpush1.msra.mxu0 0.0
  %736 = vmatprep.subr.mxu0 0.0
  %737 = vmatpush1.msra.mxu0 0.0
  %738 = vmatprep.subr.mxu0 0.0
  %739 = vmatpush1.msra.mxu0 0.0
  %740 = vmatprep.subr.mxu0 0.0
  %741 = vmatpush1.msra.mxu0 0.0
  %742 = vmatprep.subr.mxu0 0.0
  %743 = vmatpush1.msra.mxu0 0.0
  %744 = vmatprep.subr.mxu0 0.0
  %745 = vmatpush1.msra.mxu0 0.0
  %746 = vmatprep.subr.mxu0 0.0
  %747 = vmatpush1.msra.mxu0 0.0
  %748 = vmatprep.subr.mxu0 0.0
  %749 = vmatpush1.msra.mxu0 0.0
  %750 = vmatprep.subr.mxu0 0.0
  %751 = vmatpush1.msra.mxu0 0.0
  %752 = vmatprep.subr.mxu0 0.0
  %753 = vmatpush1.msra.mxu0 0.0
  %754 = vmatprep.subr.mxu0 0.0
  %755 = vmatpush1.msra.mxu0 0.0
  %756 = vmatprep.subr.mxu0 0.0
  %757 = vmatpush1.msra.mxu0 0.0
  %758 = vmatprep.subr.mxu0 0.0
  %759 = vmatpush1.msra.mxu0 0.0
  %760 = vmatprep.subr.mxu0 0.0
  %761 = vmatpush1.msra.mxu0 0.0
  %762 = vmatprep.subr.mxu0 0.0
  %763 = vmatpush1.msra.mxu0 0.0
  %764 = vmatprep.subr.mxu0 0.0
  %765 = vmatpush1.msra.mxu0 0.0
  %766 = vmatprep.subr.mxu0 0.0
  %767 = vmatpush1.msra.mxu0 0.0
  %768 = vmatprep.subr.mxu0 0.0
  %769 = vmatpush1.msra.mxu0 0.0
  %770 = vmatprep.subr.mxu0 0.0
  %771 = vmatpush1.msra.mxu0 0.0
  %772 = vmatprep.mubr.f32.mxu0 0.0
  %773 = vmatmul.mubr.f32.gmra.mrb[0].mxu0 %v706
  %v774 = vpop.f32.mrb[0].mxu0
  %v775 = vadd.f32 0.0, %v774
  %v776 = vpop.f32.mrb[0].mxu0
  %777 = vdwg.mxu0
  %v779 = vsel %vm704, %v701, 0
  %781 = vmatprep.subr.mxu0 0.0
  %782 = vmatpush1.msra.mxu0 %v702
  %783 = vmatprep.subr.mxu0 0.0
  %784 = vmatpush1.msra.mxu0 %v703
  %785 = vmatprep.subr.mxu0 0.0
  %786 = vmatpush1.msra.mxu0 0.0
  %787 = vmatprep.subr.mxu0 0.0
  %788 = vmatpush1.msra.mxu0 0.0
  %789 = vmatprep.subr.mxu0 0.0
  %790 = vmatpush1.msra.mxu0 0.0
  %791 = vmatprep.subr.mxu0 0.0
  %792 = vmatpush1.msra.mxu0 0.0
  %793 = vmatprep.subr.mxu0 0.0
  %794 = vmatpush1.msra.mxu0 0.0
  %795 = vmatprep.subr.mxu0 0.0
  %796 = vmatpush1.msra.mxu0 0.0
  %797 = vmatprep.subr.mxu0 0.0
  %798 = vmatpush1.msra.mxu0 0.0
  %799 = vmatprep.subr.mxu0 0.0
  %800 = vmatpush1.msra.mxu0 0.0
  %801 = vmatprep.subr.mxu0 0.0
  %802 = vmatpush1.msra.mxu0 0.0
  %803 = vmatprep.subr.mxu0 0.0
  %804 = vmatpush1.msra.mxu0 0.0
  %805 = vmatprep.subr.mxu0 0.0
  %806 = vmatpush1.msra.mxu0 0.0
  %807 = vmatprep.subr.mxu0 0.0
  %808 = vmatpush1.msra.mxu0 0.0
  %809 = vmatprep.subr.mxu0 0.0
  %810 = vmatpush1.msra.mxu0 0.0
  %811 = vmatprep.subr.mxu0 0.0
  %812 = vmatpush1.msra.mxu0 0.0
  %813 = vmatprep.subr.mxu0 0.0
  %814 = vmatpush1.msra.mxu0 0.0
  %815 = vmatprep.subr.mxu0 0.0
  %816 = vmatpush1.msra.mxu0 0.0
  %817 = vmatprep.subr.mxu0 0.0
  %818 = vmatpush1.msra.mxu0 0.0
  %819 = vmatprep.subr.mxu0 0.0
  %820 = vmatpush1.msra.mxu0 0.0
  %821 = vmatprep.subr.mxu0 0.0
  %822 = vmatpush1.msra.mxu0 0.0
  %823 = vmatprep.subr.mxu0 0.0
  %824 = vmatpush1.msra.mxu0 0.0
  %825 = vmatprep.subr.mxu0 0.0
  %826 = vmatpush1.msra.mxu0 0.0
  %827 = vmatprep.subr.mxu0 0.0
  %828 = vmatpush1.msra.mxu0 0.0
  %829 = vmatprep.subr.mxu0 0.0
  %830 = vmatpush1.msra.mxu0 0.0
  %831 = vmatprep.subr.mxu0 0.0
  %832 = vmatpush1.msra.mxu0 0.0
  %833 = vmatprep.subr.mxu0 0.0
  %834 = vmatpush1.msra.mxu0 0.0
  %835 = vmatprep.subr.mxu0 0.0
  %836 = vmatpush1.msra.mxu0 0.0
  %837 = vmatprep.subr.mxu0 0.0
  %838 = vmatpush1.msra.mxu0 0.0
  %839 = vmatprep.subr.mxu0 0.0
  %840 = vmatpush1.msra.mxu0 0.0
  %841 = vmatprep.subr.mxu0 0.0
  %842 = vmatpush1.msra.mxu0 0.0
  %843 = vmatprep.subr.mxu0 0.0
  %844 = vmatpush1.msra.mxu0 0.0
  %845 = vmatprep.mubr.f32.mxu0 0.0
  %846 = vmatmul.mubr.f32.gmra.mrb[0].mxu0 %v779
  %v847 = vpop.f32.mrb[0].mxu0
  %v848 = vadd.f32 0.0, %v847
  %v849 = vpop.f32.mrb[0].mxu0
  %850 = vdwg.mxu0
  %v851 = vlaneseq
  %v852 = vshrl.u32 %v851, 7
  %v853 = vsub.s32 0, %v852
  %v854 = vrot.slane %v775, %v853
  %v855 = vmul.f32 %v368, %v854
  %v856 = vmul.f32 %v373, %v854
  %v857 = vmul.f32 %v378, %v854
  %v858 = vmul.f32 %v383, %v854
  %v859 = vmul.f32 %v388, %v854
  %v860 = vmul.f32 %v393, %v854
  %v861 = vmul.f32 %v398, %v854
  %v862 = vmul.f32 %v403, %v854
  %v863 = vmul.f32 %v408, %v854
  %v864 = vmul.f32 %v413, %v854
  %v865 = vmul.f32 %v418, %v854
  %v866 = vmul.f32 %v423, %v854
  %v867 = vmul.f32 %v428, %v854
  %v868 = vmul.f32 %v433, %v854
  %v869 = vmul.f32 %v438, %v854
  %v870 = vmul.f32 %v443, %v854
  %v871 = vlaneseq
  %v872 = vshrl.u32 %v871, 7
  %v873 = vsub.s32 0, %v872
  %v874 = vrot.slane %v848, %v873
  %v875 = vadd.f32 %v855, %v874
  %v876 = vadd.f32 %v856, %v874
  %v877 = vadd.f32 %v857, %v874
  %v878 = vadd.f32 %v858, %v874
  %v879 = vadd.f32 %v859, %v874
  %v880 = vadd.f32 %v860, %v874
  %v881 = vadd.f32 %v861, %v874
  %v882 = vadd.f32 %v862, %v874
  %v883 = vadd.f32 %v863, %v874
  %v884 = vadd.f32 %v864, %v874
  %v885 = vadd.f32 %v865, %v874
  %v886 = vadd.f32 %v866, %v874
  %v887 = vadd.f32 %v867, %v874
  %v888 = vadd.f32 %v868, %v874
  %v889 = vadd.f32 %v869, %v874
  %v890 = vadd.f32 %v870, %v874
  %v891 = vmax.f32 %v875, 0.0
  %v892 = vmax.f32 %v876, 0.0
  %v893 = vmax.f32 %v877, 0.0
  %v894 = vmax.f32 %v878, 0.0
  %v895 = vmax.f32 %v879, 0.0
  %v896 = vmax.f32 %v880, 0.0
  %v897 = vmax.f32 %v881, 0.0
  %v898 = vmax.f32 %v882, 0.0
  %v899 = vmax.f32 %v883, 0.0
  %v900 = vmax.f32 %v884, 0.0
  %v901 = vmax.f32 %v885, 0.0
  %v902 = vmax.f32 %v886, 0.0
  %v903 = vmax.f32 %v887, 0.0
  %v904 = vmax.f32 %v888, 0.0
  %v905 = vmax.f32 %v889, 0.0
  %v906 = vmax.f32 %v890, 0.0
  %907 = vst.msk [vmem:[%s6] sm:$0xff] %vm446, %v891
  %908 = vst.msk [vmem:[%s6 + $0x8] sm:$0xff] %vm446, %v892
  %909 = vst.msk [vmem:[%s6 + $0x10] sm:$0xff] %vm446, %v893
  %910 = vst.msk [vmem:[%s6 + $0x18] sm:$0xff] %vm446, %v894
  %911 = vst.msk [vmem:[%s6 + $0x20] sm:$0xff] %vm446, %v895
  %912 = vst.msk [vmem:[%s6 + $0x28] sm:$0xff] %vm446, %v896
  %913 = vst.msk [vmem:[%s6 + $0x30] sm:$0xff] %vm446, %v897
  %914 = vst.msk [vmem:[%s6 + $0x38] sm:$0xff] %vm446, %v898
  %915 = vst.msk [vmem:[%s6 + $0x40] sm:$0xff] %vm446, %v899
  %916 = vst.msk [vmem:[%s6 + $0x48] sm:$0xff] %vm446, %v900
  %917 = vst.msk [vmem:[%s6 + $0x50] sm:$0xff] %vm446, %v901
  %918 = vst.msk [vmem:[%s6 + $0x58] sm:$0xff] %vm446, %v902
  %919 = vst.msk [vmem:[%s6 + $0x60] sm:$0xff] %vm446, %v903
  %920 = vst.msk [vmem:[%s6 + $0x68] sm:$0xff] %vm446, %v904
  %921 = vst.msk [vmem:[%s6 + $0x70] sm:$0xff] %vm446, %v905
  %922 = vst.msk [vmem:[%s6 + $0x78] sm:$0xff] %vm446, %v906
  // Predicated region
  $region26: #{generator_forward.6} parent=0 // pred_check
    _
  $region27: #{generator_forward.6} parent=0 // pred_check_branch
    %924 = sbr.rel (0) target = $region29
  $region28: #{generator_forward.6} parent=0 // pred_region
    _
  $region29: #{generator_forward.6} parent=0 // pred_fallthru
    _
  // Predicated region
  $region30: #{generator_forward.6} parent=0 // pred_check
    _
  $region31: #{generator_forward.6} parent=0 // pred_check_branch
    %926 = sbr.rel (0) target = $region33
  $region32: #{generator_forward.6} parent=0 // pred_region
    _
  $region33: #{generator_forward.6} parent=0 // pred_fallthru
    _

// kernel: generator_forward.7
$region0: #{generator_forward.7}
  #allocation0 [shape = 'u32[]', space=smem, size = 0x4, offset = 0x4, fixed_abs, tag = 'smem constant byte address 0x4 - core index']
  #allocation1 [shape = 'u32[144,128]{1,0:T(1,128)}', space=vmem, size = 0x12000, scoped, tag = 'internal scratch']
  %s0 = inlined_call_operand.vmem [shape: f32[512,144], index: 0, kind: input, shape index: {}]
  %s1 = inlined_call_operand.vmem [shape: f32[144,12], index: 1, kind: input, shape index: {}]
  %s2 = inlined_call_operand.vmem [shape: f32[512,12], index: 2, kind: output, shape index: {}]
  %s3 = sld [smem:[#allocation0]]
  $region41: #{generator_forward.7} parent=0
    _
  %s5 = ssub.s32 1, %s3
  %s6 = scalar_select 0, %s5, %s3
  loop: start=0, step=1, limit=6
  $region2: #{generator_forward.7} parent=0 // loop_pre_header
    _
  $region3: #{generator_forward.7} parent=0 // loop_header
    %s8 = sphi 0, %s12
    %p9 = scmp.ge.s32.totalorder %s8, 6
    %s18 = sphi 0, %s20
    %s21 = sphi 0, %s18
    %s22 = sphi 0, %s21
    %s38 = sphi 0, %s22
    %s42 = sphi 0, %s42
    %s44 = sphi 0, %s42
    %s45 = sphi 0, %s44
    %s59 = sphi 0, %s45
    %s65 = sphi 0, %s67
    %s68 = sphi 0, %s65
    %s69 = sphi 0, %s68
    %s85 = sphi 0, %s69
  $region4: #{generator_forward.7} parent=0 // loop_header_branch
    %11 = sbr.rel (%p9) target = $region8
  $region5: #{generator_forward.7} parent=0 // loop_body
    %s13 = ssub.s32 %s8, 1
    %s14 = ssub.s32 %s8, 2
    %s15 = sadd.s32 %s8, 1
    %s16 = ssub.s32 %s8, %s15
    %p17 = scmp.eq.s32.totalorder %s16, 0
    %s19 = sadd.s32 %s18, 1
    %s20 = scalar_select %p17, %s18, %s19
    %p23 = pneg %p17
    %p24 = scmp.eq.s32.totalorder %s8, 3
    %p25 = por %p23, %p24
    %p26 = scmp.ne.s32.totalorder %s18, %s21
    %p27 = scmp.eq.s32.totalorder %s8, 0
    %p28 = por %p26, %p27
    %p29 = scmp.ne.s32.totalorder %s18, %s21
    %p30 = scmp.eq.s32.totalorder %s13, 3
    %p31 = por %p29, %p30
    %p32 = scmp.ne.s32.totalorder %s21, %s22
    %p33 = scmp.eq.s32.totalorder %s13, 0
    %p34 = por %p32, %p33
    %p35 = scmp.ne.s32.totalorder %s21, %s22
    %p36 = scmp.eq.s32.totalorder %s14, 3
    %p37 = por %p35, %p36
    %p39 = scmp.ne.s32.totalorder %s22, %s38
    %p40 = scmp.eq.s32.totalorder %s14, 0
    %p41 = por %p39, %p40
    %s43 = sadd.s32 %s42, 1
    %p46 = scmp.eq.s32.totalorder %s8, 3
    %p47 = scmp.ne.s32.totalorder %s42, %s44
    %p48 = scmp.eq.s32.totalorder %s8, 0
    %p49 = por %p47, %p48
    %p50 = scmp.ne.s32.totalorder %s42, %s44
    %p51 = scmp.eq.s32.totalorder %s13, 3
    %p52 = por %p50, %p51
    %p53 = scmp.ne.s32.totalorder %s44, %s45
    %p54 = scmp.eq.s32.totalorder %s13, 0
    %p55 = por %p53, %p54
    %p56 = scmp.ne.s32.totalorder %s44, %s45
    %p57 = scmp.eq.s32.totalorder %s14, 3
    %p58 = por %p56, %p57
    %p60 = scmp.ne.s32.totalorder %s45, %s59
    %p61 = scmp.eq.s32.totalorder %s14, 0
    %p62 = por %p60, %p61
    %s63 = ssub.s32 %s8, %s15
    %p64 = scmp.eq.s32.totalorder %s63, 0
    %s66 = sadd.s32 %s65, 1
    %s67 = scalar_select %p64, %s65, %s66
    %p70 = pneg %p64
    %p71 = scmp.eq.s32.totalorder %s8, 3
    %p72 = por %p70, %p71
    %p73 = scmp.ne.s32.totalorder %s65, %s68
    %p74 = scmp.eq.s32.totalorder %s8, 0
    %p75 = por %p73, %p74
    %p76 = scmp.ne.s32.totalorder %s65, %s68
    %p77 = scmp.eq.s32.totalorder %s13, 3
    %p78 = por %p76, %p77
    %p79 = scmp.ne.s32.totalorder %s68, %s69
    %p80 = scmp.eq.s32.totalorder %s13, 0
    %p81 = por %p79, %p80
    %p82 = scmp.ne.s32.totalorder %s68, %s69
    %p83 = scmp.eq.s32.totalorder %s14, 3
    %p84 = por %p82, %p83
    %p86 = scmp.ne.s32.totalorder %s69, %s85
    %p87 = scmp.eq.s32.totalorder %s14, 0
    %p88 = por %p86, %p87
    %p89 = scmp.le.s32.totalorder 1, %s8
    %p90 = scmp.lt.s32.totalorder %s8, 5
    %p91 = pnand %p89, %p90
    %p92 = pneg %p91
    // Predicated region
    $region9: #{generator_forward.7} parent=5 // pred_check
      _
    $region10: #{generator_forward.7} parent=5 // pred_check_branch
      %94 = sbr.rel (%p91) target = $region12
    $region11: #{generator_forward.7} parent=5 // pred_region
      %s95 = ssub.s32 %s8, 1
      // Predicated region
      $region13: #{generator_forward.7} parent=11 // pred_check
        %p96 = pneg %p55
      $region14: #{generator_forward.7} parent=11 // pred_check_branch
        %98 = sbr.rel (%p96) target = $region16
      $region15: #{generator_forward.7} parent=11 // pred_region
        _
      $region16: #{generator_forward.7} parent=11 // pred_fallthru
        _
    $region12: #{generator_forward.7} parent=5 // pred_fallthru
      _
    %p99 = scmp.lt.s32.totalorder %s8, 4
    // Predicated region
    $region17: #{generator_forward.7} parent=5 // pred_check
      %p100 = pneg %p99
    $region18: #{generator_forward.7} parent=5 // pred_check_branch
      %102 = sbr.rel (%p100) target = $region20
    $region19: #{generator_forward.7} parent=5 // pred_region
      // Predicated region
      $region21: #{generator_forward.7} parent=19 // pred_check
        %p103 = pneg %p28
      $region22: #{generator_forward.7} parent=19 // pred_check_branch
        %105 = sbr.rel (%p103) target = $region24
      $region23: #{generator_forward.7} parent=19 // pred_region
        %s106 = smul.u32 16, %s8
        %p107 = scmp.lt.s32.totalorder %s106, 63
        %s108 = scalar_select %p107, %s106, 63
        %s109 = smul.addr %s108, 2
        %s110 = smul.addr %s109, 8
        %s111 = scalar_lea.vmem %s0, %s110
        %s112 = smul.u32 16, %s8
      $region24: #{generator_forward.7} parent=19 // pred_fallthru
        _
    $region20: #{generator_forward.7} parent=5 // pred_fallthru
      _
    %p113 = scmp.le.s32.totalorder 1, %s8
    %p114 = scmp.lt.s32.totalorder %s8, 5
    %p115 = pnand %p113, %p114
    %p116 = pneg %p115
    // Predicated region
    $region25: #{generator_forward.7} parent=5 // pred_check
      _
    $region26: #{generator_forward.7} parent=5 // pred_check_branch
      %118 = sbr.rel (%p115) target = $region28
    $region27: #{generator_forward.7} parent=5 // pred_region
      %s119 = ssub.s32 %s8, 1
      %s120 = smul.u32 16, %s13
      %p121 = scmp.lt.s32.totalorder %s120, 63
      %s122 = scalar_select %p121, %s120, 63
      %s123 = smul.addr %s122, 2
      %s124 = smul.addr %s123, 8
      %s125 = scalar_lea.vmem %s0, %s124
      %p126 = pneg %p34
      %p127 = pneg %p31
      %p128 = pneg %p55
      %p129 = pneg %p52
      %p130 = pneg %p81
      %p131 = pneg %p78
      %s132 = smul.u32 16, %s13
      %p133 = scmp.lt.s32.totalorder %s132, 63
      %s134 = scalar_select %p133, %s132, 63
      %s135 = smul.addr %s134, 8
      %s136 = scalar_lea.vmem %s2, %s135
      %s137 = smul.u32 16, %s13
      %p138 = scmp.lt.s32.totalorder %s137, 63
      %s139 = scalar_select %p138, %s137, 63
      %s140 = smul.addr %s139, 2
      %s141 = smul.addr %s140, 8
      %s142 = scalar_lea.vmem %s0, %s141
      %s143 = smul.u32 16, %s13
      %s144 = smul.u32 16, %s13
      %p145 = scmp.lt.s32.totalorder %s144, 63
      %s146 = scalar_select %p145, %s144, 63
      %s147 = smul.addr %s146, 8
      %s148 = scalar_lea.vmem %s2, %s147
      %s149 = smul.u32 16, %s13
      %v150 = vld [vmem:[%s142] sm:$0xff]
      %v151 = vld [vmem:[%s142 + $0x8] sm:$0xff]
      %v152 = vld [vmem:[%s142 + $0x10] sm:$0xff]
      %v153 = vld [vmem:[%s142 + $0x18] sm:$0xff]
      %v154 = vld [vmem:[%s142 + $0x20] sm:$0xff]
      %v155 = vld [vmem:[%s142 + $0x28] sm:$0xff]
      %v156 = vld [vmem:[%s142 + $0x30] sm:$0xff]
      %v157 = vld [vmem:[%s142 + $0x38] sm:$0xff]
      %v158 = vld [vmem:[%s142 + $0x40] sm:$0xff]
      %v159 = vld [vmem:[%s142 + $0x48] sm:$0xff]
      %v160 = vld [vmem:[%s142 + $0x50] sm:$0xff]
      %v161 = vld [vmem:[%s142 + $0x58] sm:$0xff]
      %v162 = vld [vmem:[%s142 + $0x60] sm:$0xff]
      %v163 = vld [vmem:[%s142 + $0x68] sm:$0xff]
      %v164 = vld [vmem:[%s142 + $0x70] sm:$0xff]
      %v165 = vld [vmem:[%s142 + $0x78] sm:$0xff]
      %v166 = vld [vmem:[%s142 + $0x80] sm:$0xff]
      %v167 = vld [vmem:[%s142 + $0x88] sm:$0xff]
      %v168 = vld [vmem:[%s142 + $0x90] sm:$0xff]
      %v169 = vld [vmem:[%s142 + $0x98] sm:$0xff]
      %v170 = vld [vmem:[%s142 + $0xa0] sm:$0xff]
      %v171 = vld [vmem:[%s142 + $0xa8] sm:$0xff]
      %v172 = vld [vmem:[%s142 + $0xb0] sm:$0xff]
      %v173 = vld [vmem:[%s142 + $0xb8] sm:$0xff]
      %v174 = vld [vmem:[%s142 + $0xc0] sm:$0xff]
      %v175 = vld [vmem:[%s142 + $0xc8] sm:$0xff]
      %v176 = vld [vmem:[%s142 + $0xd0] sm:$0xff]
      %v177 = vld [vmem:[%s142 + $0xd8] sm:$0xff]
      %v178 = vld [vmem:[%s142 + $0xe0] sm:$0xff]
      %v179 = vld [vmem:[%s142 + $0xe8] sm:$0xff]
      %v180 = vld [vmem:[%s142 + $0xf0] sm:$0xff]
      %v181 = vld [vmem:[%s142 + $0xf8] sm:$0xff]
      %v182 = vld [vmem:[%s1] sm:$0xff]
      %v183 = vld [vmem:[%s1 + $0x8] sm:$0xff]
      %v184 = vld [vmem:[%s1 + $0x10] sm:$0xff]
      %v185 = vld [vmem:[%s1 + $0x18] sm:$0xff]
      %v186 = vld [vmem:[%s1 + $0x20] sm:$0xff]
      %v187 = vld [vmem:[%s1 + $0x28] sm:$0xff]
      %v188 = vld [vmem:[%s1 + $0x30] sm:$0xff]
      %v189 = vld [vmem:[%s1 + $0x38] sm:$0xff]
      %v190 = vld [vmem:[%s1 + $0x40] sm:$0xff]
      %v191 = vld [vmem:[%s1 + $0x48] sm:$0xff]
      %v192 = vld [vmem:[%s1 + $0x50] sm:$0xff]
      %v193 = vld [vmem:[%s1 + $0x58] sm:$0xff]
      %v194 = vld [vmem:[%s1 + $0x60] sm:$0xff]
      %v195 = vld [vmem:[%s1 + $0x68] sm:$0xff]
      %v196 = vld [vmem:[%s1 + $0x70] sm:$0xff]
      %v197 = vld [vmem:[%s1 + $0x78] sm:$0xff]
      %v198 = vld [vmem:[%s1 + $0x80] sm:$0xff]
      %v199 = vld [vmem:[%s1 + $0x88] sm:$0xff]
      %vm200 = vcmask 130048
      %v202 = vsel %vm200, %v151, 0
      %v205 = vsel %vm200, %v153, 0
      %v208 = vsel %vm200, %v155, 0
      %v211 = vsel %vm200, %v157, 0
      %v214 = vsel %vm200, %v159, 0
      %v217 = vsel %vm200, %v161, 0
      %v220 = vsel %vm200, %v163, 0
      %v223 = vsel %vm200, %v165, 0
      %v226 = vsel %vm200, %v167, 0
      %v229 = vsel %vm200, %v169, 0
      %v232 = vsel %vm200, %v171, 0
      %v235 = vsel %vm200, %v173, 0
      %v238 = vsel %vm200, %v175, 0
      %v241 = vsel %vm200, %v177, 0
      %v244 = vsel %vm200, %v179, 0
      %v247 = vsel %vm200, %v181, 0
      %249 = vmatprep.subr.mxu0 0.0
      %250 = vmatpush1.msra.mxu0 %v182
      %251 = vmatprep.subr.mxu0 0.0
      %252 = vmatpush1.msra.mxu0 %v183
      %253 = vmatprep.subr.mxu0 0.0
      %254 = vmatpush1.msra.mxu0 %v184
      %255 = vmatprep.subr.mxu0 0.0
      %256 = vmatpush1.msra.mxu0 %v185
      %257 = vmatprep.subr.mxu0 0.0
      %258 = vmatpush1.msra.mxu0 %v186
      %259 = vmatprep.subr.mxu0 0.0
      %260 = vmatpush1.msra.mxu0 %v187
      %261 = vmatprep.subr.mxu0 0.0
      %262 = vmatpush1.msra.mxu0 %v188
      %263 = vmatprep.subr.mxu0 0.0
      %264 = vmatpush1.msra.mxu0 %v189
      %265 = vmatprep.subr.mxu0 0.0
      %266 = vmatpush1.msra.mxu0 %v190
      %267 = vmatprep.subr.mxu0 0.0
      %268 = vmatpush1.msra.mxu0 %v191
      %269 = vmatprep.subr.mxu0 0.0
      %270 = vmatpush1.msra.mxu0 %v192
      %271 = vmatprep.subr.mxu0 0.0
      %272 = vmatpush1.msra.mxu0 %v193
      %273 = vmatprep.subr.mxu0 0.0
      %274 = vmatpush1.msra.mxu0 %v194
      %275 = vmatprep.subr.mxu0 0.0
      %276 = vmatpush1.msra.mxu0 %v195
      %277 = vmatprep.subr.mxu0 0.0
      %278 = vmatpush1.msra.mxu0 %v196
      %279 = vmatprep.subr.mxu0 0.0
      %280 = vmatpush1.msra.mxu0 %v197
      %281 = vmatprep.subr.mxu0 0.0
      %282 = vmatpush1.msra.mxu0 %v198
      %283 = vmatprep.subr.mxu0 0.0
      %284 = vmatpush1.msra.mxu0 %v199
      %285 = vmatprep.subr.mxu0 0.0
      %286 = vmatpush1.msra.mxu0 0.0
      %287 = vmatprep.subr.mxu0 0.0
      %288 = vmatpush1.msra.mxu0 0.0
      %289 = vmatprep.subr.mxu0 0.0
      %290 = vmatpush1.msra.mxu0 0.0
      %291 = vmatprep.subr.mxu0 0.0
      %292 = vmatpush1.msra.mxu0 0.0
      %293 = vmatprep.subr.mxu0 0.0
      %294 = vmatpush1.msra.mxu0 0.0
      %295 = vmatprep.subr.mxu0 0.0
      %296 = vmatpush1.msra.mxu0 0.0
      %297 = vmatprep.subr.mxu0 0.0
      %298 = vmatpush1.msra.mxu0 0.0
      %299 = vmatprep.subr.mxu0 0.0
      %300 = vmatpush1.msra.mxu0 0.0
      %301 = vmatprep.subr.mxu0 0.0
      %302 = vmatpush1.msra.mxu0 0.0
      %303 = vmatprep.subr.mxu0 0.0
      %304 = vmatpush1.msra.mxu0 0.0
      %305 = vmatprep.subr.mxu0 0.0
      %306 = vmatpush1.msra.mxu0 0.0
      %307 = vmatprep.subr.mxu0 0.0
      %308 = vmatpush1.msra.mxu0 0.0
      %309 = vmatprep.subr.mxu0 0.0
      %310 = vmatpush1.msra.mxu0 0.0
      %311 = vmatprep.subr.mxu0 0.0
      %312 = vmatpush1.msra.mxu0 0.0
      %313 = vmatprep.mubr.f32.mxu0 %v202
      %314 = vmatmul.mubr.f32.gmra.mrb[0].mxu0 %v150
      %v315 = vpop.f32.mrb[0].mxu0
      %v316 = vadd.f32 0.0, %v315
      %v317 = vpop.f32.mrb[0].mxu0
      %318 = vmatprep.mubr.f32.mxu0 %v205
      %319 = vmatmul.mubr.f32.gmra.mrb[0].mxu0 %v152
      %v320 = vpop.f32.mrb[0].mxu0
      %v321 = vadd.f32 0.0, %v320
      %v322 = vpop.f32.mrb[0].mxu0
      %323 = vmatprep.mubr.f32.mxu0 %v208
      %324 = vmatmul.mubr.f32.gmra.mrb[0].mxu0 %v154
      %v325 = vpop.f32.mrb[0].mxu0
      %v326 = vadd.f32 0.0, %v325
      %v327 = vpop.f32.mrb[0].mxu0
      %328 = vmatprep.mubr.f32.mxu0 %v211
      %329 = vmatmul.mubr.f32.gmra.mrb[0].mxu0 %v156
      %v330 = vpop.f32.mrb[0].mxu0
      %v331 = vadd.f32 0.0, %v330
      %v332 = vpop.f32.mrb[0].mxu0
      %333 = vmatprep.mubr.f32.mxu0 %v214
      %334 = vmatmul.mubr.f32.gmra.mrb[0].mxu0 %v158
      %v335 = vpop.f32.mrb[0].mxu0
      %v336 = vadd.f32 0.0, %v335
      %v337 = vpop.f32.mrb[0].mxu0
      %338 = vmatprep.mubr.f32.mxu0 %v217
      %339 = vmatmul.mubr.f32.gmra.mrb[0].mxu0 %v160
      %v340 = vpop.f32.mrb[0].mxu0
      %v341 = vadd.f32 0.0, %v340
      %v342 = vpop.f32.mrb[0].mxu0
      %343 = vmatprep.mubr.f32.mxu0 %v220
      %344 = vmatmul.mubr.f32.gmra.mrb[0].mxu0 %v162
      %v345 = vpop.f32.mrb[0].mxu0
      %v346 = vadd.f32 0.0, %v345
      %v347 = vpop.f32.mrb[0].mxu0
      %348 = vmatprep.mubr.f32.mxu0 %v223
      %349 = vmatmul.mubr.f32.gmra.mrb[0].mxu0 %v164
      %v350 = vpop.f32.mrb[0].mxu0
      %v351 = vadd.f32 0.0, %v350
      %v352 = vpop.f32.mrb[0].mxu0
      %353 = vmatprep.mubr.f32.mxu0 %v226
      %354 = vmatmul.mubr.f32.gmra.mrb[0].mxu0 %v166
      %v355 = vpop.f32.mrb[0].mxu0
      %v356 = vadd.f32 0.0, %v355
      %v357 = vpop.f32.mrb[0].mxu0
      %358 = vmatprep.mubr.f32.mxu0 %v229
      %359 = vmatmul.mubr.f32.gmra.mrb[0].mxu0 %v168
      %v360 = vpop.f32.mrb[0].mxu0
      %v361 = vadd.f32 0.0, %v360
      %v362 = vpop.f32.mrb[0].mxu0
      %363 = vmatprep.mubr.f32.mxu0 %v232
      %364 = vmatmul.mubr.f32.gmra.mrb[0].mxu0 %v170
      %v365 = vpop.f32.mrb[0].mxu0
      %v366 = vadd.f32 0.0, %v365
      %v367 = vpop.f32.mrb[0].mxu0
      %368 = vmatprep.mubr.f32.mxu0 %v235
      %369 = vmatmul.mubr.f32.gmra.mrb[0].mxu0 %v172
      %v370 = vpop.f32.mrb[0].mxu0
      %v371 = vadd.f32 0.0, %v370
      %v372 = vpop.f32.mrb[0].mxu0
      %373 = vmatprep.mubr.f32.mxu0 %v238
      %374 = vmatmul.mubr.f32.gmra.mrb[0].mxu0 %v174
      %v375 = vpop.f32.mrb[0].mxu0
      %v376 = vadd.f32 0.0, %v375
      %v377 = vpop.f32.mrb[0].mxu0
      %378 = vmatprep.mubr.f32.mxu0 %v241
      %379 = vmatmul.mubr.f32.gmra.mrb[0].mxu0 %v176
      %v380 = vpop.f32.mrb[0].mxu0
      %v381 = vadd.f32 0.0, %v380
      %v382 = vpop.f32.mrb[0].mxu0
      %383 = vmatprep.mubr.f32.mxu0 %v244
      %384 = vmatmul.mubr.f32.gmra.mrb[0].mxu0 %v178
      %v385 = vpop.f32.mrb[0].mxu0
      %v386 = vadd.f32 0.0, %v385
      %v387 = vpop.f32.mrb[0].mxu0
      %388 = vmatprep.mubr.f32.mxu0 %v247
      %389 = vmatmul.mubr.f32.gmra.mrb[0].mxu0 %v180
      %v390 = vpop.f32.mrb[0].mxu0
      %v391 = vadd.f32 0.0, %v390
      %v392 = vpop.f32.mrb[0].mxu0
      %393 = vdwg.mxu0
      %v394 = vtanh.pop %v316
      %v395 = vtanh.pop %v321
      %v396 = vtanh.pop %v326
      %v397 = vtanh.pop %v331
      %v398 = vtanh.pop %v336
      %v399 = vtanh.pop %v341
      %v400 = vtanh.pop %v346
      %v401 = vtanh.pop %v351
      %v402 = vtanh.pop %v356
      %v403 = vtanh.pop %v361
      %v404 = vtanh.pop %v366
      %v405 = vtanh.pop %v371
      %v406 = vtanh.pop %v376
      %v407 = vtanh.pop %v381
      %v408 = vtanh.pop %v386
      %v409 = vtanh.pop %v391
      %vm410 = vcmask 97280
      %411 = vst.msk [vmem:[%s148] sm:$0xff] %vm410, %v394
      %412 = vst.msk [vmem:[%s148 + $0x8] sm:$0xff] %vm410, %v395
      %413 = vst.msk [vmem:[%s148 + $0x10] sm:$0xff] %vm410, %v396
      %414 = vst.msk [vmem:[%s148 + $0x18] sm:$0xff] %vm410, %v397
      %415 = vst.msk [vmem:[%s148 + $0x20] sm:$0xff] %vm410, %v398
      %416 = vst.msk [vmem:[%s148 + $0x28] sm:$0xff] %vm410, %v399
      %417 = vst.msk [vmem:[%s148 + $0x30] sm:$0xff] %vm410, %v400
      %418 = vst.msk [vmem:[%s148 + $0x38] sm:$0xff] %vm410, %v401
      %419 = vst.msk [vmem:[%s148 + $0x40] sm:$0xff] %vm410, %v402
      %420 = vst.msk [vmem:[%s148 + $0x48] sm:$0xff] %vm410, %v403
      %421 = vst.msk [vmem:[%s148 + $0x50] sm:$0xff] %vm410, %v404
      %422 = vst.msk [vmem:[%s148 + $0x58] sm:$0xff] %vm410, %v405
      %423 = vst.msk [vmem:[%s148 + $0x60] sm:$0xff] %vm410, %v406
      %424 = vst.msk [vmem:[%s148 + $0x68] sm:$0xff] %vm410, %v407
      %425 = vst.msk [vmem:[%s148 + $0x70] sm:$0xff] %vm410, %v408
      %426 = vst.msk [vmem:[%s148 + $0x78] sm:$0xff] %vm410, %v409
      %s427 = smul.u32 16, %s13
      %p428 = scmp.lt.s32.totalorder %s427, 63
      %s429 = scalar_select %p428, %s427, 63
      %s430 = smul.addr %s429, 8
      %s431 = scalar_lea.vmem %s2, %s430
      // Predicated region
      $region29: #{generator_forward.7} parent=27 // pred_check
        %p432 = pneg %p78
      $region30: #{generator_forward.7} parent=27 // pred_check_branch
        %434 = sbr.rel (%p432) target = $region32
      $region31: #{generator_forward.7} parent=27 // pred_region
        %s435 = smul.u32 16, %s13
      $region32: #{generator_forward.7} parent=27 // pred_fallthru
        _
    $region28: #{generator_forward.7} parent=5 // pred_fallthru
      _
    %p436 = scmp.le.s32.totalorder 2, %s8
    // Predicated region
    $region33: #{generator_forward.7} parent=5 // pred_check
      %p437 = pneg %p436
    $region34: #{generator_forward.7} parent=5 // pred_check_branch
      %439 = sbr.rel (%p437) target = $region36
    $region35: #{generator_forward.7} parent=5 // pred_region
      %s440 = ssub.s32 %s8, 2
      // Predicated region
      $region37: #{generator_forward.7} parent=35 // pred_check
        %p441 = pneg %p84
      $region38: #{generator_forward.7} parent=35 // pred_check_branch
        %443 = sbr.rel (%p441) target = $region40
      $region39: #{generator_forward.7} parent=35 // pred_region
        %s444 = smul.u32 16, %s14
        %p445 = scmp.lt.s32.totalorder %s444, 63
        %s446 = scalar_select %p445, %s444, 63
        %s447 = smul.addr %s446, 8
        %s448 = scalar_lea.vmem %s2, %s447
      $region40: #{generator_forward.7} parent=35 // pred_fallthru
        _
    $region36: #{generator_forward.7} parent=5 // pred_fallthru
      _
  $region6: #{generator_forward.7} parent=0 // loop_footer
    %s12 = sadd.s32 1, %s8
  $region7: #{generator_forward.7} parent=0 // loop_footer_branch
    %7 = sbr.rel target = $region3
  $region8: #{generator_forward.7} parent=0 // loop_exit
    _

</llo_original>
